<compile_context>
chip_gen: v7x
topology: tpu7x:2x2x1
jax: 0.10.0
libtpu: 0.0.40
codegen_flags: <defaults>
</compile_context>

<pallas_src>
import math
import jax
import jax.numpy as jnp
from jax.experimental import pallas as pl
from jax.experimental.pallas import tpu as pltpu

B = 2        # batch
S = 16       # encoder sequence length (image tokens)
E = 64       # encoder feature dim (fixed by nn.Linear(64, hidden))
T = 6        # decoding steps == dataset.max_label_len
D = 50       # hidden_state_dim
C = 12       # nb_classes

_SCALE = 1.0 / math.sqrt(D)   # single-head attention scaling (1/sqrt(head_dim))

# rows of the packed (15 + T, D) vector slab (pos rows are _POS0 .. _POS0+T-1)
(_BENC, _GENC, _BEENC, _BS, _BVOS, _GQ, _BEQ, _BI, _BVOI,
 _BRNN, _GH, _BEH, _B1, _B2, _INITH, _POS0) = range(16)
# rows of the packed (7, D, D) weight slab
(_MS, _WVOS, _MI, _WVOI, _WRNN, _W1, _W2) = range(7)


def _layernorm(x, g, b, eps=1e-5):
    mu = jnp.mean(x, axis=-1, keepdims=True)
    var = jnp.mean((x - mu) ** 2, axis=-1, keepdims=True)
    return (x - mu) * jax.lax.rsqrt(var + eps) * g + b


def _elu(x):
    return jnp.where(x > 0, x, jnp.exp(jnp.minimum(x, 0.0)) - 1.0)


def decoder_kernel(ids_ref, enc_ref, wenc_ref, tok_ref, wdd_ref, vec_ref, logits_ref):
    f32 = jnp.float32
    vec = vec_ref[...]                                    # (15+T, D), loaded once

    def vrow(i):                                          # (1, D) row of the slab
        return vec[i:i + 1, :]

    def vrow_b(i):                                        # hoisted (B, D) broadcast
        return jnp.broadcast_to(vec[i:i + 1, :], (B, D))

    # ---- prologue: encoder proj + LN, fused over all B*S rows -----------------
    e = jnp.dot(enc_ref[...], wenc_ref[...], preferred_element_type=f32) + vrow(_BENC)
    e = _layernorm(e, vrow(_GENC), vrow(_BEENC))                       # (B*S, D)
    # image-attention value/output projection precomputed once (sum(p)=1 keeps the
    # folded bias exact):  encV = e @ (Wv@Wo) + (bv@Wo + bo)
    encV = jnp.dot(e, wdd_ref[_WVOI], preferred_element_type=f32) + vrow(_BVOI)
    enc_n = e.reshape(B, S, D)          # 32 -> 2x16 sublane split (8-aligned, no relayout)
    encV_n = encV.reshape(B, S, D)

    # ---- loop-invariant weights, bound once ------------------------------------
    Ms = wdd_ref[_MS]
    Wvos = wdd_ref[_WVOS]
    Mi = wdd_ref[_MI]
    Wrnn = wdd_ref[_WRNN]

    # ---- loop-invariant bias / LN / positional rows, pre-broadcast once --------
    bsB, bvosB = vrow_b(_BS), vrow_b(_BVOS)
    gqB, beqB = vrow_b(_GQ), vrow_b(_BEQ)
    biB = vrow_b(_BI)
    brnnB = vrow_b(_BRNN)
    ghB, behB = vrow_b(_GH), vrow_b(_BEH)
    posB = [vrow_b(_POS0 + r) for r in range(T)]

    # ---- teacher-forced token embeddings: in-kernel gather (SMEM ids -> VMEM rows)
    ids_emb = [
        jnp.concatenate([tok_ref[ids_ref[b, t]] for b in range(B)], axis=0)   # (B, D)
        for t in range(T - 1)
    ]

    # ---- T=6 recurrence, fully unrolled; state held as values (vregs) ----------
    history = [jnp.broadcast_to(vrow(_INITH), (B, D))]
    hs = []
    for t in range(T):
        L = t + 1
        hidden = history[t]                                            # (B, D)
        prev_pos = [history[j] + posB[T - L + j] for j in range(L)]    # L x (B, D)

        # self_attn over the past (1 head), folded weights:
        #   qk = hidden @ (s*Wq@Wk^T) + s*bq@Wk^T ; the q.b_k term cancels in softmax.
        qk = jnp.dot(hidden, Ms, preferred_element_type=f32) + bsB     # (B, D)
        scores = [jnp.sum(qk * pp, axis=-1, keepdims=True) for pp in prev_pos]  # L x (B,1)
        m = scores[0]
        for s_ in scores[1:]:
            m = jnp.maximum(m, s_)
        ex = [jnp.exp(s_ - m) for s_ in scores]
        den = ex[0]
        acc = ex[0] * prev_pos[0]
        for j in range(1, L):
            den = den + ex[j]
            acc = acc + ex[j] * prev_pos[j]
        wsum = acc / den                                               # (B, D)
        attn = jnp.dot(wsum, Wvos, preferred_element_type=f32) + bvosB
        query = _layernorm(attn, gqB, beqB)                            # (B, D)

        # image_attn (cross attention over encoder output, 1 head): V/O already
        # applied to the encoder rows (encV_n), so only the q/k fold remains.
        qki = jnp.dot(query, Mi, preferred_element_type=f32) + biB     # (B, D)
        sc = jnp.sum(qki[:, None, :] * enc_n, axis=-1)                 # (B, S)
        mi = jnp.max(sc, axis=-1, keepdims=True)
        ei = jnp.exp(sc - mi)
        pi = ei / jnp.sum(ei, axis=-1, keepdims=True)
        x = jnp.sum(pi[:, :, None] * encV_n, axis=1)                   # (B, D)

        # ---- ELU -> fc_rnn -> skip -> layernorm_hidden_state --------------------
        x = _elu(x)
        x = jnp.dot(x, Wrnn, preferred_element_type=f32) + brnnB
        x = x + hidden                                                 # skip_connections = True
        nh = _layernorm(x, ghB, behB)                                  # (B, D)
        hs.append(nh)
        if t + 1 < T:                                                  # use_past_true_outputs = True
            history.append(nh + ids_emb[t])

    # ---- epilogue: batch-major (B*T, D) slab, fc1 -> ELU -> fc2 (lane-dense) ---
    hs_bm = jnp.concatenate(
        [hs[t][b:b + 1, :] for b in range(B) for t in range(T)], axis=0)       # (B*T, D)
    h1 = _elu(jnp.dot(hs_bm, wdd_ref[_W1], preferred_element_type=f32) + vrow(_B1))
    lg = jnp.dot(h1, wdd_ref[_W2], preferred_element_type=f32) + vrow(_B2)     # (B*T, D); cols >= C zero
    logits_ref[...] = lg


def prepare_decoder_params(params):
    """One-time weight folding / slab packing (keep off the per-call path)."""
    f32 = jnp.float32
    Ms = _SCALE * (params["Wqs"] @ params["Wks"].T)
    bs = _SCALE * (params["bqs"] @ params["Wks"].T)
    Wvo_s = params["Wvs"] @ params["Wos"]
    bvo_s = params["bvs"] @ params["Wos"] + params["bos"]
    Mi = _SCALE * (params["Wqi"] @ params["Wki"].T)
    bi = _SCALE * (params["bqi"] @ params["Wki"].T)
    Wvo_i = params["Wvi"] @ params["Woi"]
    bvo_i = params["bvi"] @ params["Woi"] + params["boi"]

    W2pad = jnp.zeros((D, D), f32).at[:, :C].set(params["W2"])   # pad fc2 into the (D,D) slab
    b2pad = jnp.zeros((1, D), f32).at[:, :C].set(params["b2"])

    wdd = jnp.stack([Ms, Wvo_s, Mi, Wvo_i,
                     params["Wrnn"], params["W1"], W2pad]).astype(f32)         # (7, D, D)
    vecs = jnp.concatenate([
        params["benc"], params["genc"], params["beenc"],
        bs, bvo_s, params["gq"], params["beq"],
        bi, bvo_i, params["brnn"], params["gh"], params["beh"],
        params["b1"], b2pad, params["init_h"], params["pos"],
    ], axis=0).astype(f32)                                                     # (15 + T, D)
    return {
        "wenc": params["Wenc"].astype(f32),                                    # (E, D)
        "tok3": params["tok_emb"].astype(f32).reshape(C, 1, D),                # leading-dim gather table
        "wdd": wdd,
        "vecs": vecs,
    }


@jax.jit
def custom_decoder_forward(prep, inputs_embeds, input_ids):
    f32 = jnp.float32
    enc_flat = inputs_embeds.astype(f32).reshape(B * S, E)          # flat rows for one fused matmul
    flat = pl.pallas_call(
        decoder_kernel,
        out_shape=jax.ShapeDtypeStruct((B * T, D), f32),
        in_specs=[
            pl.BlockSpec(memory_space=pltpu.MemorySpace.SMEM),      # input_ids (B, T) int32
            pl.BlockSpec(memory_space=pltpu.MemorySpace.VMEM),      # enc_flat  (B*S, E)
            pl.BlockSpec(memory_space=pltpu.MemorySpace.VMEM),      # Wenc      (E, D)
            pl.BlockSpec(memory_space=pltpu.MemorySpace.VMEM),      # tok_emb   (C, 1, D)
            pl.BlockSpec(memory_space=pltpu.MemorySpace.VMEM),      # wdd slab  (7, D, D)
            pl.BlockSpec(memory_space=pltpu.MemorySpace.VMEM),      # vec slab  (15+T, D)
        ],
        out_specs=pl.BlockSpec(memory_space=pltpu.MemorySpace.VMEM),
    )(input_ids.astype(jnp.int32), enc_flat,
      prep["wenc"], prep["tok3"], prep["wdd"], prep["vecs"])
    # batch-major rows in-kernel -> only a free reshape + one lane slice here.
    return flat.reshape(B, T, D)[:, :, :C]


# ------------------------- pure-JAX reference -------------------------
def _mha_ref(query, key, value, Wq, bq, Wk, bk, Wv, bv, Wo, bo):
    q = (query @ Wq + bq) * _SCALE
    k = key @ Wk + bk
    v = value @ Wv + bv
    s = jnp.einsum("bqd,bkd->bqk", q, k)
    p = jax.nn.softmax(s, axis=-1)
    return jnp.einsum("bqk,bkd->bqd", p, v) @ Wo + bo


def reference_forward(prm, inputs_embeds, input_ids):
    enc = inputs_embeds @ prm["Wenc"] + prm["benc"]
    enc = _layernorm(enc, prm["genc"], prm["beenc"])
    ids_emb = prm["tok_emb"][input_ids]
    prev = jnp.broadcast_to(prm["init_h"][None], (B, 1, D))
    hs = []
    for t in range(T):
        hidden = prev[:, -1:, :]
        L = prev.shape[1]
        prev_pos = prev + prm["pos"][None, T - L:, :]
        query = _mha_ref(hidden, prev_pos, prev_pos,
                         prm["Wqs"], prm["bqs"], prm["Wks"], prm["bks"],
                         prm["Wvs"], prm["bvs"], prm["Wos"], prm["bos"])
        query = _layernorm(query, prm["gq"], prm["beq"])
        x = _mha_ref(query, enc, enc,
                     prm["Wqi"], prm["bqi"], prm["Wki"], prm["bki"],
                     prm["Wvi"], prm["bvi"], prm["Woi"], prm["boi"])[:, 0]
        x = _elu(x)
        x = x @ prm["Wrnn"] + prm["brnn"]
        x = x + hidden[:, 0]
        nh = _layernorm(x, prm["gh"], prm["beh"])
        hs.append(nh)
        prev = jnp.concatenate([prev, (nh + ids_emb[:, t])[:, None, :]], axis=1)
    hs = jnp.stack(hs, axis=1)
    h1 = _elu(hs @ prm["W1"] + prm["b1"])
    return h1 @ prm["W2"] + prm["b2"]


if __name__ == "__main__":
    key = jax.random.PRNGKey(0)
    keys = jax.random.split(key, 40)

    def nrm(k, shape, scale=0.1):
        return (scale * jax.random.normal(k, shape)).astype(jnp.float32)

    kaiming = math.sqrt(2.0 / D)
    params = {
        "Wenc": nrm(keys[0], (E, D)), "benc": nrm(keys[1], (1, D)),
        "genc": jnp.ones((1, D), jnp.float32), "beenc": jnp.zeros((1, D), jnp.float32),
        "tok_emb": nrm(keys[2], (C, D), kaiming),
        "pos": nrm(keys[3], (T, D), kaiming),
        "Wqs": nrm(keys[4], (D, D)), "bqs": nrm(keys[5], (1, D)),
        "Wks": nrm(keys[6], (D, D)), "bks": nrm(keys[7], (1, D)),
        "Wvs": nrm(keys[8], (D, D)), "bvs": nrm(keys[9], (1, D)),
        "Wos": nrm(keys[10], (D, D)), "bos": nrm(keys[11], (1, D)),
        "gq": jnp.ones((1, D), jnp.float32), "beq": jnp.zeros((1, D), jnp.float32),
        "Wqi": nrm(keys[12], (D, D)), "bqi": nrm(keys[13], (1, D)),
        "Wki": nrm(keys[14], (D, D)), "bki": nrm(keys[15], (1, D)),
        "Wvi": nrm(keys[16], (D, D)), "bvi": nrm(keys[17], (1, D)),
        "Woi": nrm(keys[18], (D, D)), "boi": nrm(keys[19], (1, D)),
        "init_h": jnp.zeros((1, D), jnp.float32),           # torch: zeros Parameter
        "Wrnn": nrm(keys[20], (D, D)), "brnn": nrm(keys[21], (1, D)),
        "gh": jnp.ones((1, D), jnp.float32), "beh": jnp.zeros((1, D), jnp.float32),
        "W1": nrm(keys[22], (D, D)), "b1": nrm(keys[23], (1, D)),
        "W2": nrm(keys[24], (D, C)), "b2": nrm(keys[25], (1, C)),
    }

    inputs_embeds = jax.random.normal(keys[30], (B, S, E), jnp.float32)   # (B, S, 64)
    input_ids = jax.random.randint(keys[31], (B, T), 0, C)                # (B, T)

    prep = prepare_decoder_params(params)   # folded once per parameter set
    logits = jax.block_until_ready(custom_decoder_forward(prep, inputs_embeds, input_ids))
    ref = reference_forward(params, inputs_embeds, input_ids)

    assert logits.shape == (B, T, C)
    max_err = float(jnp.max(jnp.abs(logits - ref)))
    assert max_err < 2e-3, f"mismatch vs reference: {max_err}"
    print("KERNEL_OK")
</pallas_src>

<mosaic_0001>
module attributes {stable_mosaic.version = 11 : i64} {
  func.func @decoder_kernel(%arg0: memref<2x6xi32, #tpu.memory_space<smem>>, %arg1: memref<32x64xf32, #tpu.memory_space<vmem>>, %arg2: memref<64x50xf32, #tpu.memory_space<vmem>>, %arg3: memref<12x1x50xf32, #tpu.memory_space<vmem>>, %arg4: memref<7x50x50xf32, #tpu.memory_space<vmem>>, %arg5: memref<21x50xf32, #tpu.memory_space<vmem>>, %arg6: memref<12x50xf32, #tpu.memory_space<vmem>>) attributes {dimension_semantics = [], scalar_prefetch = 0 : i64, scratch_operands = 0 : i64, tpu.core_type = #tpu.core_type<tc>} {
    %c0 = arith.constant 0 : index
    %c0_0 = arith.constant 0 : index
    %0 = vector.load %arg5[%c0, %c0_0] : memref<21x50xf32, #tpu.memory_space<vmem>>, vector<21x50xf32>
    %c0_1 = arith.constant 0 : index
    %c0_2 = arith.constant 0 : index
    %1 = vector.load %arg1[%c0_1, %c0_2] : memref<32x64xf32, #tpu.memory_space<vmem>>, vector<32x64xf32>
    %c0_3 = arith.constant 0 : index
    %c0_4 = arith.constant 0 : index
    %2 = vector.load %arg2[%c0_3, %c0_4] : memref<64x50xf32, #tpu.memory_space<vmem>>, vector<64x50xf32>
    %cst = arith.constant dense<0.000000e+00> : vector<32x50xf32>
    %3 = tpu.matmul %1, %2, %cst {dimension_numbers = #tpu.dot_dimension_numbers<[1], [0], [0], [1], [0, 0, 1, 1], [], []>} : vector<32x64xf32>, vector<64x50xf32>, vector<32x50xf32> -> vector<32x50xf32>
    %4 = vector.extract_strided_slice %0 {offsets = [0, 0], sizes = [1, 50], strides = [1, 1]} : vector<21x50xf32> to vector<1x50xf32>
    %5 = vector.broadcast %4 : vector<1x50xf32> to vector<32x50xf32>
    %6 = arith.addf %3, %5 : vector<32x50xf32>
    %7 = vector.extract_strided_slice %0 {offsets = [1, 0], sizes = [1, 50], strides = [1, 1]} : vector<21x50xf32> to vector<1x50xf32>
    %8 = vector.extract_strided_slice %0 {offsets = [2, 0], sizes = [1, 50], strides = [1, 1]} : vector<21x50xf32> to vector<1x50xf32>
    %cst_5 = arith.constant dense<0.000000e+00> : vector<32xf32>
    %9 = vector.multi_reduction <add>, %6, %cst_5 [1] : vector<32x50xf32> to vector<32xf32>
    %10 = vector.shape_cast %9 : vector<32xf32> to vector<32x1xf32>
    %cst_6 = arith.constant 5.000000e+01 : f32
    %11 = vector.broadcast %cst_6 : f32 to vector<32x1xf32>
    %12 = arith.divf %10, %11 : vector<32x1xf32>
    %13 = vector.broadcast %12 : vector<32x1xf32> to vector<32x50xf32>
    %14 = arith.subf %6, %13 : vector<32x50xf32>
    %15 = arith.mulf %14, %14 : vector<32x50xf32>
    %cst_7 = arith.constant dense<0.000000e+00> : vector<32xf32>
    %16 = vector.multi_reduction <add>, %15, %cst_7 [1] : vector<32x50xf32> to vector<32xf32>
    %17 = vector.shape_cast %16 : vector<32xf32> to vector<32x1xf32>
    %cst_8 = arith.constant 5.000000e+01 : f32
    %18 = vector.broadcast %cst_8 : f32 to vector<32x1xf32>
    %19 = arith.divf %17, %18 : vector<32x1xf32>
    %20 = vector.broadcast %12 : vector<32x1xf32> to vector<32x50xf32>
    %21 = arith.subf %6, %20 : vector<32x50xf32>
    %cst_9 = arith.constant 9.99999974E-6 : f32
    %22 = vector.broadcast %cst_9 : f32 to vector<32x1xf32>
    %23 = arith.addf %19, %22 : vector<32x1xf32>
    %24 = math.rsqrt %23 : vector<32x1xf32>
    %25 = vector.broadcast %24 : vector<32x1xf32> to vector<32x50xf32>
    %26 = arith.mulf %21, %25 : vector<32x50xf32>
    %27 = vector.broadcast %7 : vector<1x50xf32> to vector<32x50xf32>
    %28 = arith.mulf %26, %27 : vector<32x50xf32>
    %29 = vector.broadcast %8 : vector<1x50xf32> to vector<32x50xf32>
    %30 = arith.addf %28, %29 : vector<32x50xf32>
    %c3 = arith.constant 3 : index
    %c0_10 = arith.constant 0 : index
    %c0_11 = arith.constant 0 : index
    %31 = vector.load %arg4[%c3, %c0_10, %c0_11] : memref<7x50x50xf32, #tpu.memory_space<vmem>>, vector<1x50x50xf32>
    %32 = vector.shape_cast %31 : vector<1x50x50xf32> to vector<50x50xf32>
    %cst_12 = arith.constant dense<0.000000e+00> : vector<32x50xf32>
    %33 = tpu.matmul %30, %32, %cst_12 {dimension_numbers = #tpu.dot_dimension_numbers<[1], [0], [0], [1], [0, 0, 1, 1], [], []>} : vector<32x50xf32>, vector<50x50xf32>, vector<32x50xf32> -> vector<32x50xf32>
    %34 = vector.extract_strided_slice %0 {offsets = [8, 0], sizes = [1, 50], strides = [1, 1]} : vector<21x50xf32> to vector<1x50xf32>
    %35 = vector.broadcast %34 : vector<1x50xf32> to vector<32x50xf32>
    %36 = arith.addf %33, %35 : vector<32x50xf32>
    %37 = vector.shape_cast %30 : vector<32x50xf32> to vector<2x16x50xf32>
    %38 = vector.shape_cast %36 : vector<32x50xf32> to vector<2x16x50xf32>
    %c0_13 = arith.constant 0 : index
    %c0_14 = arith.constant 0 : index
    %c0_15 = arith.constant 0 : index
    %39 = vector.load %arg4[%c0_13, %c0_14, %c0_15] : memref<7x50x50xf32, #tpu.memory_space<vmem>>, vector<1x50x50xf32>
    %40 = vector.shape_cast %39 : vector<1x50x50xf32> to vector<50x50xf32>
    %c1 = arith.constant 1 : index
    %c0_16 = arith.constant 0 : index
    %c0_17 = arith.constant 0 : index
    %41 = vector.load %arg4[%c1, %c0_16, %c0_17] : memref<7x50x50xf32, #tpu.memory_space<vmem>>, vector<1x50x50xf32>
    %42 = vector.shape_cast %41 : vector<1x50x50xf32> to vector<50x50xf32>
    %c2 = arith.constant 2 : index
    %c0_18 = arith.constant 0 : index
    %c0_19 = arith.constant 0 : index
    %43 = vector.load %arg4[%c2, %c0_18, %c0_19] : memref<7x50x50xf32, #tpu.memory_space<vmem>>, vector<1x50x50xf32>
    %44 = vector.shape_cast %43 : vector<1x50x50xf32> to vector<50x50xf32>
    %c4 = arith.constant 4 : index
    %c0_20 = arith.constant 0 : index
    %c0_21 = arith.constant 0 : index
    %45 = vector.load %arg4[%c4, %c0_20, %c0_21] : memref<7x50x50xf32, #tpu.memory_space<vmem>>, vector<1x50x50xf32>
    %46 = vector.shape_cast %45 : vector<1x50x50xf32> to vector<50x50xf32>
    %47 = vector.extract_strided_slice %0 {offsets = [3, 0], sizes = [1, 50], strides = [1, 1]} : vector<21x50xf32> to vector<1x50xf32>
    %48 = vector.shape_cast %47 : vector<1x50xf32> to vector<1x50xf32>
    %49 = vector.broadcast %48 : vector<1x50xf32> to vector<2x50xf32>
    %50 = vector.extract_strided_slice %0 {offsets = [4, 0], sizes = [1, 50], strides = [1, 1]} : vector<21x50xf32> to vector<1x50xf32>
    %51 = vector.shape_cast %50 : vector<1x50xf32> to vector<1x50xf32>
    %52 = vector.broadcast %51 : vector<1x50xf32> to vector<2x50xf32>
    %53 = vector.extract_strided_slice %0 {offsets = [5, 0], sizes = [1, 50], strides = [1, 1]} : vector<21x50xf32> to vector<1x50xf32>
    %54 = vector.shape_cast %53 : vector<1x50xf32> to vector<1x50xf32>
    %55 = vector.broadcast %54 : vector<1x50xf32> to vector<2x50xf32>
    %56 = vector.extract_strided_slice %0 {offsets = [6, 0], sizes = [1, 50], strides = [1, 1]} : vector<21x50xf32> to vector<1x50xf32>
    %57 = vector.shape_cast %56 : vector<1x50xf32> to vector<1x50xf32>
    %58 = vector.broadcast %57 : vector<1x50xf32> to vector<2x50xf32>
    %59 = vector.extract_strided_slice %0 {offsets = [7, 0], sizes = [1, 50], strides = [1, 1]} : vector<21x50xf32> to vector<1x50xf32>
    %60 = vector.shape_cast %59 : vector<1x50xf32> to vector<1x50xf32>
    %61 = vector.broadcast %60 : vector<1x50xf32> to vector<2x50xf32>
    %62 = vector.extract_strided_slice %0 {offsets = [9, 0], sizes = [1, 50], strides = [1, 1]} : vector<21x50xf32> to vector<1x50xf32>
    %63 = vector.shape_cast %62 : vector<1x50xf32> to vector<1x50xf32>
    %64 = vector.broadcast %63 : vector<1x50xf32> to vector<2x50xf32>
    %65 = vector.extract_strided_slice %0 {offsets = [10, 0], sizes = [1, 50], strides = [1, 1]} : vector<21x50xf32> to vector<1x50xf32>
    %66 = vector.shape_cast %65 : vector<1x50xf32> to vector<1x50xf32>
    %67 = vector.broadcast %66 : vector<1x50xf32> to vector<2x50xf32>
    %68 = vector.extract_strided_slice %0 {offsets = [11, 0], sizes = [1, 50], strides = [1, 1]} : vector<21x50xf32> to vector<1x50xf32>
    %69 = vector.shape_cast %68 : vector<1x50xf32> to vector<1x50xf32>
    %70 = vector.broadcast %69 : vector<1x50xf32> to vector<2x50xf32>
    %71 = vector.extract_strided_slice %0 {offsets = [15, 0], sizes = [1, 50], strides = [1, 1]} : vector<21x50xf32> to vector<1x50xf32>
    %72 = vector.shape_cast %71 : vector<1x50xf32> to vector<1x50xf32>
    %73 = vector.broadcast %72 : vector<1x50xf32> to vector<2x50xf32>
    %74 = vector.extract_strided_slice %0 {offsets = [16, 0], sizes = [1, 50], strides = [1, 1]} : vector<21x50xf32> to vector<1x50xf32>
    %75 = vector.shape_cast %74 : vector<1x50xf32> to vector<1x50xf32>
    %76 = vector.broadcast %75 : vector<1x50xf32> to vector<2x50xf32>
    %77 = vector.extract_strided_slice %0 {offsets = [17, 0], sizes = [1, 50], strides = [1, 1]} : vector<21x50xf32> to vector<1x50xf32>
    %78 = vector.shape_cast %77 : vector<1x50xf32> to vector<1x50xf32>
    %79 = vector.broadcast %78 : vector<1x50xf32> to vector<2x50xf32>
    %80 = vector.extract_strided_slice %0 {offsets = [18, 0], sizes = [1, 50], strides = [1, 1]} : vector<21x50xf32> to vector<1x50xf32>
    %81 = vector.shape_cast %80 : vector<1x50xf32> to vector<1x50xf32>
    %82 = vector.broadcast %81 : vector<1x50xf32> to vector<2x50xf32>
    %83 = vector.extract_strided_slice %0 {offsets = [19, 0], sizes = [1, 50], strides = [1, 1]} : vector<21x50xf32> to vector<1x50xf32>
    %84 = vector.shape_cast %83 : vector<1x50xf32> to vector<1x50xf32>
    %85 = vector.broadcast %84 : vector<1x50xf32> to vector<2x50xf32>
    %86 = vector.extract_strided_slice %0 {offsets = [20, 0], sizes = [1, 50], strides = [1, 1]} : vector<21x50xf32> to vector<1x50xf32>
    %87 = vector.shape_cast %86 : vector<1x50xf32> to vector<1x50xf32>
    %88 = vector.broadcast %87 : vector<1x50xf32> to vector<2x50xf32>
    %c0_22 = arith.constant 0 : index
    %c0_23 = arith.constant 0 : index
    %89 = memref.load %arg0[%c0_22, %c0_23] : memref<2x6xi32, #tpu.memory_space<smem>>
    %90 = arith.index_cast %89 : i32 to index
    %c0_24 = arith.constant 0 : index
    %c0_25 = arith.constant 0 : index
    %91 = vector.load %arg3[%90, %c0_24, %c0_25] : memref<12x1x50xf32, #tpu.memory_space<vmem>>, vector<1x1x50xf32>
    %92 = vector.shape_cast %91 : vector<1x1x50xf32> to vector<1x50xf32>
    %c1_26 = arith.constant 1 : index
    %c0_27 = arith.constant 0 : index
    %93 = memref.load %arg0[%c1_26, %c0_27] : memref<2x6xi32, #tpu.memory_space<smem>>
    %94 = arith.index_cast %93 : i32 to index
    %c0_28 = arith.constant 0 : index
    %c0_29 = arith.constant 0 : index
    %95 = vector.load %arg3[%94, %c0_28, %c0_29] : memref<12x1x50xf32, #tpu.memory_space<vmem>>, vector<1x1x50xf32>
    %96 = vector.shape_cast %95 : vector<1x1x50xf32> to vector<1x50xf32>
    %97 = tpu.concatenate %92, %96 in 0 : vector<1x50xf32>, vector<1x50xf32> -> vector<2x50xf32>
    %c0_30 = arith.constant 0 : index
    %c1_31 = arith.constant 1 : index
    %98 = memref.load %arg0[%c0_30, %c1_31] : memref<2x6xi32, #tpu.memory_space<smem>>
    %99 = arith.index_cast %98 : i32 to index
    %c0_32 = arith.constant 0 : index
    %c0_33 = arith.constant 0 : index
    %100 = vector.load %arg3[%99, %c0_32, %c0_33] : memref<12x1x50xf32, #tpu.memory_space<vmem>>, vector<1x1x50xf32>
    %101 = vector.shape_cast %100 : vector<1x1x50xf32> to vector<1x50xf32>
    %c1_34 = arith.constant 1 : index
    %c1_35 = arith.constant 1 : index
    %102 = memref.load %arg0[%c1_34, %c1_35] : memref<2x6xi32, #tpu.memory_space<smem>>
    %103 = arith.index_cast %102 : i32 to index
    %c0_36 = arith.constant 0 : index
    %c0_37 = arith.constant 0 : index
    %104 = vector.load %arg3[%103, %c0_36, %c0_37] : memref<12x1x50xf32, #tpu.memory_space<vmem>>, vector<1x1x50xf32>
    %105 = vector.shape_cast %104 : vector<1x1x50xf32> to vector<1x50xf32>
    %106 = tpu.concatenate %101, %105 in 0 : vector<1x50xf32>, vector<1x50xf32> -> vector<2x50xf32>
    %c0_38 = arith.constant 0 : index
    %c2_39 = arith.constant 2 : index
    %107 = memref.load %arg0[%c0_38, %c2_39] : memref<2x6xi32, #tpu.memory_space<smem>>
    %108 = arith.index_cast %107 : i32 to index
    %c0_40 = arith.constant 0 : index
    %c0_41 = arith.constant 0 : index
    %109 = vector.load %arg3[%108, %c0_40, %c0_41] : memref<12x1x50xf32, #tpu.memory_space<vmem>>, vector<1x1x50xf32>
    %110 = vector.shape_cast %109 : vector<1x1x50xf32> to vector<1x50xf32>
    %c1_42 = arith.constant 1 : index
    %c2_43 = arith.constant 2 : index
    %111 = memref.load %arg0[%c1_42, %c2_43] : memref<2x6xi32, #tpu.memory_space<smem>>
    %112 = arith.index_cast %111 : i32 to index
    %c0_44 = arith.constant 0 : index
    %c0_45 = arith.constant 0 : index
    %113 = vector.load %arg3[%112, %c0_44, %c0_45] : memref<12x1x50xf32, #tpu.memory_space<vmem>>, vector<1x1x50xf32>
    %114 = vector.shape_cast %113 : vector<1x1x50xf32> to vector<1x50xf32>
    %115 = tpu.concatenate %110, %114 in 0 : vector<1x50xf32>, vector<1x50xf32> -> vector<2x50xf32>
    %c0_46 = arith.constant 0 : index
    %c3_47 = arith.constant 3 : index
    %116 = memref.load %arg0[%c0_46, %c3_47] : memref<2x6xi32, #tpu.memory_space<smem>>
    %117 = arith.index_cast %116 : i32 to index
    %c0_48 = arith.constant 0 : index
    %c0_49 = arith.constant 0 : index
    %118 = vector.load %arg3[%117, %c0_48, %c0_49] : memref<12x1x50xf32, #tpu.memory_space<vmem>>, vector<1x1x50xf32>
    %119 = vector.shape_cast %118 : vector<1x1x50xf32> to vector<1x50xf32>
    %c1_50 = arith.constant 1 : index
    %c3_51 = arith.constant 3 : index
    %120 = memref.load %arg0[%c1_50, %c3_51] : memref<2x6xi32, #tpu.memory_space<smem>>
    %121 = arith.index_cast %120 : i32 to index
    %c0_52 = arith.constant 0 : index
    %c0_53 = arith.constant 0 : index
    %122 = vector.load %arg3[%121, %c0_52, %c0_53] : memref<12x1x50xf32, #tpu.memory_space<vmem>>, vector<1x1x50xf32>
    %123 = vector.shape_cast %122 : vector<1x1x50xf32> to vector<1x50xf32>
    %124 = tpu.concatenate %119, %123 in 0 : vector<1x50xf32>, vector<1x50xf32> -> vector<2x50xf32>
    %c0_54 = arith.constant 0 : index
    %c4_55 = arith.constant 4 : index
    %125 = memref.load %arg0[%c0_54, %c4_55] : memref<2x6xi32, #tpu.memory_space<smem>>
    %126 = arith.index_cast %125 : i32 to index
    %c0_56 = arith.constant 0 : index
    %c0_57 = arith.constant 0 : index
    %127 = vector.load %arg3[%126, %c0_56, %c0_57] : memref<12x1x50xf32, #tpu.memory_space<vmem>>, vector<1x1x50xf32>
    %128 = vector.shape_cast %127 : vector<1x1x50xf32> to vector<1x50xf32>
    %c1_58 = arith.constant 1 : index
    %c4_59 = arith.constant 4 : index
    %129 = memref.load %arg0[%c1_58, %c4_59] : memref<2x6xi32, #tpu.memory_space<smem>>
    %130 = arith.index_cast %129 : i32 to index
    %c0_60 = arith.constant 0 : index
    %c0_61 = arith.constant 0 : index
    %131 = vector.load %arg3[%130, %c0_60, %c0_61] : memref<12x1x50xf32, #tpu.memory_space<vmem>>, vector<1x1x50xf32>
    %132 = vector.shape_cast %131 : vector<1x1x50xf32> to vector<1x50xf32>
    %133 = tpu.concatenate %128, %132 in 0 : vector<1x50xf32>, vector<1x50xf32> -> vector<2x50xf32>
    %134 = vector.extract_strided_slice %0 {offsets = [14, 0], sizes = [1, 50], strides = [1, 1]} : vector<21x50xf32> to vector<1x50xf32>
    %135 = vector.shape_cast %134 : vector<1x50xf32> to vector<1x50xf32>
    %136 = vector.broadcast %135 : vector<1x50xf32> to vector<2x50xf32>
    %137 = arith.addf %136, %88 : vector<2x50xf32>
    %cst_62 = arith.constant dense<0.000000e+00> : vector<2x50xf32>
    %138 = tpu.matmul %136, %40, %cst_62 {dimension_numbers = #tpu.dot_dimension_numbers<[1], [0], [0], [1], [0, 0, 1, 1], [], []>} : vector<2x50xf32>, vector<50x50xf32>, vector<2x50xf32> -> vector<2x50xf32>
    %139 = arith.addf %138, %49 : vector<2x50xf32>
    %140 = arith.mulf %139, %137 : vector<2x50xf32>
    %cst_63 = arith.constant dense<0.000000e+00> : vector<2xf32>
    %141 = vector.multi_reduction <add>, %140, %cst_63 [1] : vector<2x50xf32> to vector<2xf32>
    %142 = vector.shape_cast %141 : vector<2xf32> to vector<2x1xf32>
    %143 = arith.subf %142, %142 : vector<2x1xf32>
    %144 = math.exp %143 : vector<2x1xf32>
    %145 = vector.broadcast %144 : vector<2x1xf32> to vector<2x50xf32>
    %146 = arith.mulf %145, %137 : vector<2x50xf32>
    %147 = vector.broadcast %144 : vector<2x1xf32> to vector<2x50xf32>
    %148 = arith.divf %146, %147 : vector<2x50xf32>
    %cst_64 = arith.constant dense<0.000000e+00> : vector<2x50xf32>
    %149 = tpu.matmul %148, %42, %cst_64 {dimension_numbers = #tpu.dot_dimension_numbers<[1], [0], [0], [1], [0, 0, 1, 1], [], []>} : vector<2x50xf32>, vector<50x50xf32>, vector<2x50xf32> -> vector<2x50xf32>
    %150 = arith.addf %149, %52 : vector<2x50xf32>
    %cst_65 = arith.constant dense<0.000000e+00> : vector<2xf32>
    %151 = vector.multi_reduction <add>, %150, %cst_65 [1] : vector<2x50xf32> to vector<2xf32>
    %152 = vector.shape_cast %151 : vector<2xf32> to vector<2x1xf32>
    %cst_66 = arith.constant 5.000000e+01 : f32
    %153 = vector.broadcast %cst_66 : f32 to vector<2x1xf32>
    %154 = arith.divf %152, %153 : vector<2x1xf32>
    %155 = vector.broadcast %154 : vector<2x1xf32> to vector<2x50xf32>
    %156 = arith.subf %150, %155 : vector<2x50xf32>
    %157 = arith.mulf %156, %156 : vector<2x50xf32>
    %cst_67 = arith.constant dense<0.000000e+00> : vector<2xf32>
    %158 = vector.multi_reduction <add>, %157, %cst_67 [1] : vector<2x50xf32> to vector<2xf32>
    %159 = vector.shape_cast %158 : vector<2xf32> to vector<2x1xf32>
    %cst_68 = arith.constant 5.000000e+01 : f32
    %160 = vector.broadcast %cst_68 : f32 to vector<2x1xf32>
    %161 = arith.divf %159, %160 : vector<2x1xf32>
    %162 = vector.broadcast %154 : vector<2x1xf32> to vector<2x50xf32>
    %163 = arith.subf %150, %162 : vector<2x50xf32>
    %cst_69 = arith.constant 9.99999974E-6 : f32
    %164 = vector.broadcast %cst_69 : f32 to vector<2x1xf32>
    %165 = arith.addf %161, %164 : vector<2x1xf32>
    %166 = math.rsqrt %165 : vector<2x1xf32>
    %167 = vector.broadcast %166 : vector<2x1xf32> to vector<2x50xf32>
    %168 = arith.mulf %163, %167 : vector<2x50xf32>
    %169 = arith.mulf %168, %55 : vector<2x50xf32>
    %170 = arith.addf %169, %58 : vector<2x50xf32>
    %cst_70 = arith.constant dense<0.000000e+00> : vector<2x50xf32>
    %171 = tpu.matmul %170, %44, %cst_70 {dimension_numbers = #tpu.dot_dimension_numbers<[1], [0], [0], [1], [0, 0, 1, 1], [], []>} : vector<2x50xf32>, vector<50x50xf32>, vector<2x50xf32> -> vector<2x50xf32>
    %172 = arith.addf %171, %61 : vector<2x50xf32>
    %173 = vector.shape_cast %172 : vector<2x50xf32> to vector<2x1x50xf32>
    %174 = vector.broadcast %173 : vector<2x1x50xf32> to vector<2x16x50xf32>
    %175 = arith.mulf %174, %37 : vector<2x16x50xf32>
    %cst_71 = arith.constant dense<0.000000e+00> : vector<2x16xf32>
    %176 = vector.multi_reduction <add>, %175, %cst_71 [2] : vector<2x16x50xf32> to vector<2x16xf32>
    %cst_72 = arith.constant dense<0xFF800000> : vector<2xf32>
    %177 = vector.multi_reduction <maximumf>, %176, %cst_72 [1] : vector<2x16xf32> to vector<2xf32>
    %178 = vector.shape_cast %177 : vector<2xf32> to vector<2x1xf32>
    %179 = vector.broadcast %178 : vector<2x1xf32> to vector<2x16xf32>
    %180 = arith.subf %176, %179 : vector<2x16xf32>
    %181 = math.exp %180 : vector<2x16xf32>
    %cst_73 = arith.constant dense<0.000000e+00> : vector<2xf32>
    %182 = vector.multi_reduction <add>, %181, %cst_73 [1] : vector<2x16xf32> to vector<2xf32>
    %183 = vector.shape_cast %182 : vector<2xf32> to vector<2x1xf32>
    %184 = vector.broadcast %183 : vector<2x1xf32> to vector<2x16xf32>
    %185 = arith.divf %181, %184 : vector<2x16xf32>
    %186 = vector.shape_cast %185 : vector<2x16xf32> to vector<2x16x1xf32>
    %187 = vector.broadcast %186 : vector<2x16x1xf32> to vector<2x16x50xf32>
    %188 = arith.mulf %187, %38 : vector<2x16x50xf32>
    %cst_74 = arith.constant dense<0.000000e+00> : vector<2x50xf32>
    %189 = vector.multi_reduction <add>, %188, %cst_74 [1] : vector<2x16x50xf32> to vector<2x50xf32>
    %cst_75 = arith.constant 0.000000e+00 : f32
    %190 = vector.broadcast %cst_75 : f32 to vector<2x50xf32>
    %191 = arith.cmpf ogt, %189, %190 : vector<2x50xf32>
    %cst_76 = arith.constant 0.000000e+00 : f32
    %192 = vector.broadcast %cst_76 : f32 to vector<2x50xf32>
    %193 = arith.minimumf %189, %192 : vector<2x50xf32>
    %194 = math.exp %193 : vector<2x50xf32>
    %cst_77 = arith.constant 1.000000e+00 : f32
    %195 = vector.broadcast %cst_77 : f32 to vector<2x50xf32>
    %196 = arith.subf %194, %195 : vector<2x50xf32>
    %197 = arith.select %191, %189, %196 : vector<2x50xi1>, vector<2x50xf32>
    %cst_78 = arith.constant dense<0.000000e+00> : vector<2x50xf32>
    %198 = tpu.matmul %197, %46, %cst_78 {dimension_numbers = #tpu.dot_dimension_numbers<[1], [0], [0], [1], [0, 0, 1, 1], [], []>} : vector<2x50xf32>, vector<50x50xf32>, vector<2x50xf32> -> vector<2x50xf32>
    %199 = arith.addf %198, %64 : vector<2x50xf32>
    %200 = arith.addf %199, %136 : vector<2x50xf32>
    %cst_79 = arith.constant dense<0.000000e+00> : vector<2xf32>
    %201 = vector.multi_reduction <add>, %200, %cst_79 [1] : vector<2x50xf32> to vector<2xf32>
    %202 = vector.shape_cast %201 : vector<2xf32> to vector<2x1xf32>
    %cst_80 = arith.constant 5.000000e+01 : f32
    %203 = vector.broadcast %cst_80 : f32 to vector<2x1xf32>
    %204 = arith.divf %202, %203 : vector<2x1xf32>
    %205 = vector.broadcast %204 : vector<2x1xf32> to vector<2x50xf32>
    %206 = arith.subf %200, %205 : vector<2x50xf32>
    %207 = arith.mulf %206, %206 : vector<2x50xf32>
    %cst_81 = arith.constant dense<0.000000e+00> : vector<2xf32>
    %208 = vector.multi_reduction <add>, %207, %cst_81 [1] : vector<2x50xf32> to vector<2xf32>
    %209 = vector.shape_cast %208 : vector<2xf32> to vector<2x1xf32>
    %cst_82 = arith.constant 5.000000e+01 : f32
    %210 = vector.broadcast %cst_82 : f32 to vector<2x1xf32>
    %211 = arith.divf %209, %210 : vector<2x1xf32>
    %212 = vector.broadcast %204 : vector<2x1xf32> to vector<2x50xf32>
    %213 = arith.subf %200, %212 : vector<2x50xf32>
    %cst_83 = arith.constant 9.99999974E-6 : f32
    %214 = vector.broadcast %cst_83 : f32 to vector<2x1xf32>
    %215 = arith.addf %211, %214 : vector<2x1xf32>
    %216 = math.rsqrt %215 : vector<2x1xf32>
    %217 = vector.broadcast %216 : vector<2x1xf32> to vector<2x50xf32>
    %218 = arith.mulf %213, %217 : vector<2x50xf32>
    %219 = arith.mulf %218, %67 : vector<2x50xf32>
    %220 = arith.addf %219, %70 : vector<2x50xf32>
    %221 = arith.addf %220, %97 : vector<2x50xf32>
    %222 = arith.addf %136, %85 : vector<2x50xf32>
    %223 = arith.addf %221, %88 : vector<2x50xf32>
    %cst_84 = arith.constant dense<0.000000e+00> : vector<2x50xf32>
    %224 = tpu.matmul %221, %40, %cst_84 {dimension_numbers = #tpu.dot_dimension_numbers<[1], [0], [0], [1], [0, 0, 1, 1], [], []>} : vector<2x50xf32>, vector<50x50xf32>, vector<2x50xf32> -> vector<2x50xf32>
    %225 = arith.addf %224, %49 : vector<2x50xf32>
    %226 = arith.mulf %225, %222 : vector<2x50xf32>
    %cst_85 = arith.constant dense<0.000000e+00> : vector<2xf32>
    %227 = vector.multi_reduction <add>, %226, %cst_85 [1] : vector<2x50xf32> to vector<2xf32>
    %228 = vector.shape_cast %227 : vector<2xf32> to vector<2x1xf32>
    %229 = arith.mulf %225, %223 : vector<2x50xf32>
    %cst_86 = arith.constant dense<0.000000e+00> : vector<2xf32>
    %230 = vector.multi_reduction <add>, %229, %cst_86 [1] : vector<2x50xf32> to vector<2xf32>
    %231 = vector.shape_cast %230 : vector<2xf32> to vector<2x1xf32>
    %232 = arith.maximumf %228, %231 : vector<2x1xf32>
    %233 = arith.subf %228, %232 : vector<2x1xf32>
    %234 = math.exp %233 : vector<2x1xf32>
    %235 = arith.subf %231, %232 : vector<2x1xf32>
    %236 = math.exp %235 : vector<2x1xf32>
    %237 = vector.broadcast %234 : vector<2x1xf32> to vector<2x50xf32>
    %238 = arith.mulf %237, %222 : vector<2x50xf32>
    %239 = arith.addf %234, %236 : vector<2x1xf32>
    %240 = vector.broadcast %236 : vector<2x1xf32> to vector<2x50xf32>
    %241 = arith.mulf %240, %223 : vector<2x50xf32>
    %242 = arith.addf %238, %241 : vector<2x50xf32>
    %243 = vector.broadcast %239 : vector<2x1xf32> to vector<2x50xf32>
    %244 = arith.divf %242, %243 : vector<2x50xf32>
    %cst_87 = arith.constant dense<0.000000e+00> : vector<2x50xf32>
    %245 = tpu.matmul %244, %42, %cst_87 {dimension_numbers = #tpu.dot_dimension_numbers<[1], [0], [0], [1], [0, 0, 1, 1], [], []>} : vector<2x50xf32>, vector<50x50xf32>, vector<2x50xf32> -> vector<2x50xf32>
    %246 = arith.addf %245, %52 : vector<2x50xf32>
    %cst_88 = arith.constant dense<0.000000e+00> : vector<2xf32>
    %247 = vector.multi_reduction <add>, %246, %cst_88 [1] : vector<2x50xf32> to vector<2xf32>
    %248 = vector.shape_cast %247 : vector<2xf32> to vector<2x1xf32>
    %cst_89 = arith.constant 5.000000e+01 : f32
    %249 = vector.broadcast %cst_89 : f32 to vector<2x1xf32>
    %250 = arith.divf %248, %249 : vector<2x1xf32>
    %251 = vector.broadcast %250 : vector<2x1xf32> to vector<2x50xf32>
    %252 = arith.subf %246, %251 : vector<2x50xf32>
    %253 = arith.mulf %252, %252 : vector<2x50xf32>
    %cst_90 = arith.constant dense<0.000000e+00> : vector<2xf32>
    %254 = vector.multi_reduction <add>, %253, %cst_90 [1] : vector<2x50xf32> to vector<2xf32>
    %255 = vector.shape_cast %254 : vector<2xf32> to vector<2x1xf32>
    %cst_91 = arith.constant 5.000000e+01 : f32
    %256 = vector.broadcast %cst_91 : f32 to vector<2x1xf32>
    %257 = arith.divf %255, %256 : vector<2x1xf32>
    %258 = vector.broadcast %250 : vector<2x1xf32> to vector<2x50xf32>
    %259 = arith.subf %246, %258 : vector<2x50xf32>
    %cst_92 = arith.constant 9.99999974E-6 : f32
    %260 = vector.broadcast %cst_92 : f32 to vector<2x1xf32>
    %261 = arith.addf %257, %260 : vector<2x1xf32>
    %262 = math.rsqrt %261 : vector<2x1xf32>
    %263 = vector.broadcast %262 : vector<2x1xf32> to vector<2x50xf32>
    %264 = arith.mulf %259, %263 : vector<2x50xf32>
    %265 = arith.mulf %264, %55 : vector<2x50xf32>
    %266 = arith.addf %265, %58 : vector<2x50xf32>
    %cst_93 = arith.constant dense<0.000000e+00> : vector<2x50xf32>
    %267 = tpu.matmul %266, %44, %cst_93 {dimension_numbers = #tpu.dot_dimension_numbers<[1], [0], [0], [1], [0, 0, 1, 1], [], []>} : vector<2x50xf32>, vector<50x50xf32>, vector<2x50xf32> -> vector<2x50xf32>
    %268 = arith.addf %267, %61 : vector<2x50xf32>
    %269 = vector.shape_cast %268 : vector<2x50xf32> to vector<2x1x50xf32>
    %270 = vector.broadcast %269 : vector<2x1x50xf32> to vector<2x16x50xf32>
    %271 = arith.mulf %270, %37 : vector<2x16x50xf32>
    %cst_94 = arith.constant dense<0.000000e+00> : vector<2x16xf32>
    %272 = vector.multi_reduction <add>, %271, %cst_94 [2] : vector<2x16x50xf32> to vector<2x16xf32>
    %cst_95 = arith.constant dense<0xFF800000> : vector<2xf32>
    %273 = vector.multi_reduction <maximumf>, %272, %cst_95 [1] : vector<2x16xf32> to vector<2xf32>
    %274 = vector.shape_cast %273 : vector<2xf32> to vector<2x1xf32>
    %275 = vector.broadcast %274 : vector<2x1xf32> to vector<2x16xf32>
    %276 = arith.subf %272, %275 : vector<2x16xf32>
    %277 = math.exp %276 : vector<2x16xf32>
    %cst_96 = arith.constant dense<0.000000e+00> : vector<2xf32>
    %278 = vector.multi_reduction <add>, %277, %cst_96 [1] : vector<2x16xf32> to vector<2xf32>
    %279 = vector.shape_cast %278 : vector<2xf32> to vector<2x1xf32>
    %280 = vector.broadcast %279 : vector<2x1xf32> to vector<2x16xf32>
    %281 = arith.divf %277, %280 : vector<2x16xf32>
    %282 = vector.shape_cast %281 : vector<2x16xf32> to vector<2x16x1xf32>
    %283 = vector.broadcast %282 : vector<2x16x1xf32> to vector<2x16x50xf32>
    %284 = arith.mulf %283, %38 : vector<2x16x50xf32>
    %cst_97 = arith.constant dense<0.000000e+00> : vector<2x50xf32>
    %285 = vector.multi_reduction <add>, %284, %cst_97 [1] : vector<2x16x50xf32> to vector<2x50xf32>
    %cst_98 = arith.constant 0.000000e+00 : f32
    %286 = vector.broadcast %cst_98 : f32 to vector<2x50xf32>
    %287 = arith.cmpf ogt, %285, %286 : vector<2x50xf32>
    %cst_99 = arith.constant 0.000000e+00 : f32
    %288 = vector.broadcast %cst_99 : f32 to vector<2x50xf32>
    %289 = arith.minimumf %285, %288 : vector<2x50xf32>
    %290 = math.exp %289 : vector<2x50xf32>
    %cst_100 = arith.constant 1.000000e+00 : f32
    %291 = vector.broadcast %cst_100 : f32 to vector<2x50xf32>
    %292 = arith.subf %290, %291 : vector<2x50xf32>
    %293 = arith.select %287, %285, %292 : vector<2x50xi1>, vector<2x50xf32>
    %cst_101 = arith.constant dense<0.000000e+00> : vector<2x50xf32>
    %294 = tpu.matmul %293, %46, %cst_101 {dimension_numbers = #tpu.dot_dimension_numbers<[1], [0], [0], [1], [0, 0, 1, 1], [], []>} : vector<2x50xf32>, vector<50x50xf32>, vector<2x50xf32> -> vector<2x50xf32>
    %295 = arith.addf %294, %64 : vector<2x50xf32>
    %296 = arith.addf %295, %221 : vector<2x50xf32>
    %cst_102 = arith.constant dense<0.000000e+00> : vector<2xf32>
    %297 = vector.multi_reduction <add>, %296, %cst_102 [1] : vector<2x50xf32> to vector<2xf32>
    %298 = vector.shape_cast %297 : vector<2xf32> to vector<2x1xf32>
    %cst_103 = arith.constant 5.000000e+01 : f32
    %299 = vector.broadcast %cst_103 : f32 to vector<2x1xf32>
    %300 = arith.divf %298, %299 : vector<2x1xf32>
    %301 = vector.broadcast %300 : vector<2x1xf32> to vector<2x50xf32>
    %302 = arith.subf %296, %301 : vector<2x50xf32>
    %303 = arith.mulf %302, %302 : vector<2x50xf32>
    %cst_104 = arith.constant dense<0.000000e+00> : vector<2xf32>
    %304 = vector.multi_reduction <add>, %303, %cst_104 [1] : vector<2x50xf32> to vector<2xf32>
    %305 = vector.shape_cast %304 : vector<2xf32> to vector<2x1xf32>
    %cst_105 = arith.constant 5.000000e+01 : f32
    %306 = vector.broadcast %cst_105 : f32 to vector<2x1xf32>
    %307 = arith.divf %305, %306 : vector<2x1xf32>
    %308 = vector.broadcast %300 : vector<2x1xf32> to vector<2x50xf32>
    %309 = arith.subf %296, %308 : vector<2x50xf32>
    %cst_106 = arith.constant 9.99999974E-6 : f32
    %310 = vector.broadcast %cst_106 : f32 to vector<2x1xf32>
    %311 = arith.addf %307, %310 : vector<2x1xf32>
    %312 = math.rsqrt %311 : vector<2x1xf32>
    %313 = vector.broadcast %312 : vector<2x1xf32> to vector<2x50xf32>
    %314 = arith.mulf %309, %313 : vector<2x50xf32>
    %315 = arith.mulf %314, %67 : vector<2x50xf32>
    %316 = arith.addf %315, %70 : vector<2x50xf32>
    %317 = arith.addf %316, %106 : vector<2x50xf32>
    %318 = arith.addf %136, %82 : vector<2x50xf32>
    %319 = arith.addf %221, %85 : vector<2x50xf32>
    %320 = arith.addf %317, %88 : vector<2x50xf32>
    %cst_107 = arith.constant dense<0.000000e+00> : vector<2x50xf32>
    %321 = tpu.matmul %317, %40, %cst_107 {dimension_numbers = #tpu.dot_dimension_numbers<[1], [0], [0], [1], [0, 0, 1, 1], [], []>} : vector<2x50xf32>, vector<50x50xf32>, vector<2x50xf32> -> vector<2x50xf32>
    %322 = arith.addf %321, %49 : vector<2x50xf32>
    %323 = arith.mulf %322, %318 : vector<2x50xf32>
    %cst_108 = arith.constant dense<0.000000e+00> : vector<2xf32>
    %324 = vector.multi_reduction <add>, %323, %cst_108 [1] : vector<2x50xf32> to vector<2xf32>
    %325 = vector.shape_cast %324 : vector<2xf32> to vector<2x1xf32>
    %326 = arith.mulf %322, %319 : vector<2x50xf32>
    %cst_109 = arith.constant dense<0.000000e+00> : vector<2xf32>
    %327 = vector.multi_reduction <add>, %326, %cst_109 [1] : vector<2x50xf32> to vector<2xf32>
    %328 = vector.shape_cast %327 : vector<2xf32> to vector<2x1xf32>
    %329 = arith.mulf %322, %320 : vector<2x50xf32>
    %cst_110 = arith.constant dense<0.000000e+00> : vector<2xf32>
    %330 = vector.multi_reduction <add>, %329, %cst_110 [1] : vector<2x50xf32> to vector<2xf32>
    %331 = vector.shape_cast %330 : vector<2xf32> to vector<2x1xf32>
    %332 = arith.maximumf %325, %328 : vector<2x1xf32>
    %333 = arith.maximumf %332, %331 : vector<2x1xf32>
    %334 = arith.subf %325, %333 : vector<2x1xf32>
    %335 = math.exp %334 : vector<2x1xf32>
    %336 = arith.subf %328, %333 : vector<2x1xf32>
    %337 = math.exp %336 : vector<2x1xf32>
    %338 = arith.subf %331, %333 : vector<2x1xf32>
    %339 = math.exp %338 : vector<2x1xf32>
    %340 = vector.broadcast %335 : vector<2x1xf32> to vector<2x50xf32>
    %341 = arith.mulf %340, %318 : vector<2x50xf32>
    %342 = arith.addf %335, %337 : vector<2x1xf32>
    %343 = vector.broadcast %337 : vector<2x1xf32> to vector<2x50xf32>
    %344 = arith.mulf %343, %319 : vector<2x50xf32>
    %345 = arith.addf %341, %344 : vector<2x50xf32>
    %346 = arith.addf %342, %339 : vector<2x1xf32>
    %347 = vector.broadcast %339 : vector<2x1xf32> to vector<2x50xf32>
    %348 = arith.mulf %347, %320 : vector<2x50xf32>
    %349 = arith.addf %345, %348 : vector<2x50xf32>
    %350 = vector.broadcast %346 : vector<2x1xf32> to vector<2x50xf32>
    %351 = arith.divf %349, %350 : vector<2x50xf32>
    %cst_111 = arith.constant dense<0.000000e+00> : vector<2x50xf32>
    %352 = tpu.matmul %351, %42, %cst_111 {dimension_numbers = #tpu.dot_dimension_numbers<[1], [0], [0], [1], [0, 0, 1, 1], [], []>} : vector<2x50xf32>, vector<50x50xf32>, vector<2x50xf32> -> vector<2x50xf32>
    %353 = arith.addf %352, %52 : vector<2x50xf32>
    %cst_112 = arith.constant dense<0.000000e+00> : vector<2xf32>
    %354 = vector.multi_reduction <add>, %353, %cst_112 [1] : vector<2x50xf32> to vector<2xf32>
    %355 = vector.shape_cast %354 : vector<2xf32> to vector<2x1xf32>
    %cst_113 = arith.constant 5.000000e+01 : f32
    %356 = vector.broadcast %cst_113 : f32 to vector<2x1xf32>
    %357 = arith.divf %355, %356 : vector<2x1xf32>
    %358 = vector.broadcast %357 : vector<2x1xf32> to vector<2x50xf32>
    %359 = arith.subf %353, %358 : vector<2x50xf32>
    %360 = arith.mulf %359, %359 : vector<2x50xf32>
    %cst_114 = arith.constant dense<0.000000e+00> : vector<2xf32>
    %361 = vector.multi_reduction <add>, %360, %cst_114 [1] : vector<2x50xf32> to vector<2xf32>
    %362 = vector.shape_cast %361 : vector<2xf32> to vector<2x1xf32>
    %cst_115 = arith.constant 5.000000e+01 : f32
    %363 = vector.broadcast %cst_115 : f32 to vector<2x1xf32>
    %364 = arith.divf %362, %363 : vector<2x1xf32>
    %365 = vector.broadcast %357 : vector<2x1xf32> to vector<2x50xf32>
    %366 = arith.subf %353, %365 : vector<2x50xf32>
    %cst_116 = arith.constant 9.99999974E-6 : f32
    %367 = vector.broadcast %cst_116 : f32 to vector<2x1xf32>
    %368 = arith.addf %364, %367 : vector<2x1xf32>
    %369 = math.rsqrt %368 : vector<2x1xf32>
    %370 = vector.broadcast %369 : vector<2x1xf32> to vector<2x50xf32>
    %371 = arith.mulf %366, %370 : vector<2x50xf32>
    %372 = arith.mulf %371, %55 : vector<2x50xf32>
    %373 = arith.addf %372, %58 : vector<2x50xf32>
    %cst_117 = arith.constant dense<0.000000e+00> : vector<2x50xf32>
    %374 = tpu.matmul %373, %44, %cst_117 {dimension_numbers = #tpu.dot_dimension_numbers<[1], [0], [0], [1], [0, 0, 1, 1], [], []>} : vector<2x50xf32>, vector<50x50xf32>, vector<2x50xf32> -> vector<2x50xf32>
    %375 = arith.addf %374, %61 : vector<2x50xf32>
    %376 = vector.shape_cast %375 : vector<2x50xf32> to vector<2x1x50xf32>
    %377 = vector.broadcast %376 : vector<2x1x50xf32> to vector<2x16x50xf32>
    %378 = arith.mulf %377, %37 : vector<2x16x50xf32>
    %cst_118 = arith.constant dense<0.000000e+00> : vector<2x16xf32>
    %379 = vector.multi_reduction <add>, %378, %cst_118 [2] : vector<2x16x50xf32> to vector<2x16xf32>
    %cst_119 = arith.constant dense<0xFF800000> : vector<2xf32>
    %380 = vector.multi_reduction <maximumf>, %379, %cst_119 [1] : vector<2x16xf32> to vector<2xf32>
    %381 = vector.shape_cast %380 : vector<2xf32> to vector<2x1xf32>
    %382 = vector.broadcast %381 : vector<2x1xf32> to vector<2x16xf32>
    %383 = arith.subf %379, %382 : vector<2x16xf32>
    %384 = math.exp %383 : vector<2x16xf32>
    %cst_120 = arith.constant dense<0.000000e+00> : vector<2xf32>
    %385 = vector.multi_reduction <add>, %384, %cst_120 [1] : vector<2x16xf32> to vector<2xf32>
    %386 = vector.shape_cast %385 : vector<2xf32> to vector<2x1xf32>
    %387 = vector.broadcast %386 : vector<2x1xf32> to vector<2x16xf32>
    %388 = arith.divf %384, %387 : vector<2x16xf32>
    %389 = vector.shape_cast %388 : vector<2x16xf32> to vector<2x16x1xf32>
    %390 = vector.broadcast %389 : vector<2x16x1xf32> to vector<2x16x50xf32>
    %391 = arith.mulf %390, %38 : vector<2x16x50xf32>
    %cst_121 = arith.constant dense<0.000000e+00> : vector<2x50xf32>
    %392 = vector.multi_reduction <add>, %391, %cst_121 [1] : vector<2x16x50xf32> to vector<2x50xf32>
    %cst_122 = arith.constant 0.000000e+00 : f32
    %393 = vector.broadcast %cst_122 : f32 to vector<2x50xf32>
    %394 = arith.cmpf ogt, %392, %393 : vector<2x50xf32>
    %cst_123 = arith.constant 0.000000e+00 : f32
    %395 = vector.broadcast %cst_123 : f32 to vector<2x50xf32>
    %396 = arith.minimumf %392, %395 : vector<2x50xf32>
    %397 = math.exp %396 : vector<2x50xf32>
    %cst_124 = arith.constant 1.000000e+00 : f32
    %398 = vector.broadcast %cst_124 : f32 to vector<2x50xf32>
    %399 = arith.subf %397, %398 : vector<2x50xf32>
    %400 = arith.select %394, %392, %399 : vector<2x50xi1>, vector<2x50xf32>
    %cst_125 = arith.constant dense<0.000000e+00> : vector<2x50xf32>
    %401 = tpu.matmul %400, %46, %cst_125 {dimension_numbers = #tpu.dot_dimension_numbers<[1], [0], [0], [1], [0, 0, 1, 1], [], []>} : vector<2x50xf32>, vector<50x50xf32>, vector<2x50xf32> -> vector<2x50xf32>
    %402 = arith.addf %401, %64 : vector<2x50xf32>
    %403 = arith.addf %402, %317 : vector<2x50xf32>
    %cst_126 = arith.constant dense<0.000000e+00> : vector<2xf32>
    %404 = vector.multi_reduction <add>, %403, %cst_126 [1] : vector<2x50xf32> to vector<2xf32>
    %405 = vector.shape_cast %404 : vector<2xf32> to vector<2x1xf32>
    %cst_127 = arith.constant 5.000000e+01 : f32
    %406 = vector.broadcast %cst_127 : f32 to vector<2x1xf32>
    %407 = arith.divf %405, %406 : vector<2x1xf32>
    %408 = vector.broadcast %407 : vector<2x1xf32> to vector<2x50xf32>
    %409 = arith.subf %403, %408 : vector<2x50xf32>
    %410 = arith.mulf %409, %409 : vector<2x50xf32>
    %cst_128 = arith.constant dense<0.000000e+00> : vector<2xf32>
    %411 = vector.multi_reduction <add>, %410, %cst_128 [1] : vector<2x50xf32> to vector<2xf32>
    %412 = vector.shape_cast %411 : vector<2xf32> to vector<2x1xf32>
    %cst_129 = arith.constant 5.000000e+01 : f32
    %413 = vector.broadcast %cst_129 : f32 to vector<2x1xf32>
    %414 = arith.divf %412, %413 : vector<2x1xf32>
    %415 = vector.broadcast %407 : vector<2x1xf32> to vector<2x50xf32>
    %416 = arith.subf %403, %415 : vector<2x50xf32>
    %cst_130 = arith.constant 9.99999974E-6 : f32
    %417 = vector.broadcast %cst_130 : f32 to vector<2x1xf32>
    %418 = arith.addf %414, %417 : vector<2x1xf32>
    %419 = math.rsqrt %418 : vector<2x1xf32>
    %420 = vector.broadcast %419 : vector<2x1xf32> to vector<2x50xf32>
    %421 = arith.mulf %416, %420 : vector<2x50xf32>
    %422 = arith.mulf %421, %67 : vector<2x50xf32>
    %423 = arith.addf %422, %70 : vector<2x50xf32>
    %424 = arith.addf %423, %115 : vector<2x50xf32>
    %425 = arith.addf %136, %79 : vector<2x50xf32>
    %426 = arith.addf %221, %82 : vector<2x50xf32>
    %427 = arith.addf %317, %85 : vector<2x50xf32>
    %428 = arith.addf %424, %88 : vector<2x50xf32>
    %cst_131 = arith.constant dense<0.000000e+00> : vector<2x50xf32>
    %429 = tpu.matmul %424, %40, %cst_131 {dimension_numbers = #tpu.dot_dimension_numbers<[1], [0], [0], [1], [0, 0, 1, 1], [], []>} : vector<2x50xf32>, vector<50x50xf32>, vector<2x50xf32> -> vector<2x50xf32>
    %430 = arith.addf %429, %49 : vector<2x50xf32>
    %431 = arith.mulf %430, %425 : vector<2x50xf32>
    %cst_132 = arith.constant dense<0.000000e+00> : vector<2xf32>
    %432 = vector.multi_reduction <add>, %431, %cst_132 [1] : vector<2x50xf32> to vector<2xf32>
    %433 = vector.shape_cast %432 : vector<2xf32> to vector<2x1xf32>
    %434 = arith.mulf %430, %426 : vector<2x50xf32>
    %cst_133 = arith.constant dense<0.000000e+00> : vector<2xf32>
    %435 = vector.multi_reduction <add>, %434, %cst_133 [1] : vector<2x50xf32> to vector<2xf32>
    %436 = vector.shape_cast %435 : vector<2xf32> to vector<2x1xf32>
    %437 = arith.mulf %430, %427 : vector<2x50xf32>
    %cst_134 = arith.constant dense<0.000000e+00> : vector<2xf32>
    %438 = vector.multi_reduction <add>, %437, %cst_134 [1] : vector<2x50xf32> to vector<2xf32>
    %439 = vector.shape_cast %438 : vector<2xf32> to vector<2x1xf32>
    %440 = arith.mulf %430, %428 : vector<2x50xf32>
    %cst_135 = arith.constant dense<0.000000e+00> : vector<2xf32>
    %441 = vector.multi_reduction <add>, %440, %cst_135 [1] : vector<2x50xf32> to vector<2xf32>
    %442 = vector.shape_cast %441 : vector<2xf32> to vector<2x1xf32>
    %443 = arith.maximumf %433, %436 : vector<2x1xf32>
    %444 = arith.maximumf %443, %439 : vector<2x1xf32>
    %445 = arith.maximumf %444, %442 : vector<2x1xf32>
    %446 = arith.subf %433, %445 : vector<2x1xf32>
    %447 = math.exp %446 : vector<2x1xf32>
    %448 = arith.subf %436, %445 : vector<2x1xf32>
    %449 = math.exp %448 : vector<2x1xf32>
    %450 = arith.subf %439, %445 : vector<2x1xf32>
    %451 = math.exp %450 : vector<2x1xf32>
    %452 = arith.subf %442, %445 : vector<2x1xf32>
    %453 = math.exp %452 : vector<2x1xf32>
    %454 = vector.broadcast %447 : vector<2x1xf32> to vector<2x50xf32>
    %455 = arith.mulf %454, %425 : vector<2x50xf32>
    %456 = arith.addf %447, %449 : vector<2x1xf32>
    %457 = vector.broadcast %449 : vector<2x1xf32> to vector<2x50xf32>
    %458 = arith.mulf %457, %426 : vector<2x50xf32>
    %459 = arith.addf %455, %458 : vector<2x50xf32>
    %460 = arith.addf %456, %451 : vector<2x1xf32>
    %461 = vector.broadcast %451 : vector<2x1xf32> to vector<2x50xf32>
    %462 = arith.mulf %461, %427 : vector<2x50xf32>
    %463 = arith.addf %459, %462 : vector<2x50xf32>
    %464 = arith.addf %460, %453 : vector<2x1xf32>
    %465 = vector.broadcast %453 : vector<2x1xf32> to vector<2x50xf32>
    %466 = arith.mulf %465, %428 : vector<2x50xf32>
    %467 = arith.addf %463, %466 : vector<2x50xf32>
    %468 = vector.broadcast %464 : vector<2x1xf32> to vector<2x50xf32>
    %469 = arith.divf %467, %468 : vector<2x50xf32>
    %cst_136 = arith.constant dense<0.000000e+00> : vector<2x50xf32>
    %470 = tpu.matmul %469, %42, %cst_136 {dimension_numbers = #tpu.dot_dimension_numbers<[1], [0], [0], [1], [0, 0, 1, 1], [], []>} : vector<2x50xf32>, vector<50x50xf32>, vector<2x50xf32> -> vector<2x50xf32>
    %471 = arith.addf %470, %52 : vector<2x50xf32>
    %cst_137 = arith.constant dense<0.000000e+00> : vector<2xf32>
    %472 = vector.multi_reduction <add>, %471, %cst_137 [1] : vector<2x50xf32> to vector<2xf32>
    %473 = vector.shape_cast %472 : vector<2xf32> to vector<2x1xf32>
    %cst_138 = arith.constant 5.000000e+01 : f32
    %474 = vector.broadcast %cst_138 : f32 to vector<2x1xf32>
    %475 = arith.divf %473, %474 : vector<2x1xf32>
    %476 = vector.broadcast %475 : vector<2x1xf32> to vector<2x50xf32>
    %477 = arith.subf %471, %476 : vector<2x50xf32>
    %478 = arith.mulf %477, %477 : vector<2x50xf32>
    %cst_139 = arith.constant dense<0.000000e+00> : vector<2xf32>
    %479 = vector.multi_reduction <add>, %478, %cst_139 [1] : vector<2x50xf32> to vector<2xf32>
    %480 = vector.shape_cast %479 : vector<2xf32> to vector<2x1xf32>
    %cst_140 = arith.constant 5.000000e+01 : f32
    %481 = vector.broadcast %cst_140 : f32 to vector<2x1xf32>
    %482 = arith.divf %480, %481 : vector<2x1xf32>
    %483 = vector.broadcast %475 : vector<2x1xf32> to vector<2x50xf32>
    %484 = arith.subf %471, %483 : vector<2x50xf32>
    %cst_141 = arith.constant 9.99999974E-6 : f32
    %485 = vector.broadcast %cst_141 : f32 to vector<2x1xf32>
    %486 = arith.addf %482, %485 : vector<2x1xf32>
    %487 = math.rsqrt %486 : vector<2x1xf32>
    %488 = vector.broadcast %487 : vector<2x1xf32> to vector<2x50xf32>
    %489 = arith.mulf %484, %488 : vector<2x50xf32>
    %490 = arith.mulf %489, %55 : vector<2x50xf32>
    %491 = arith.addf %490, %58 : vector<2x50xf32>
    %cst_142 = arith.constant dense<0.000000e+00> : vector<2x50xf32>
    %492 = tpu.matmul %491, %44, %cst_142 {dimension_numbers = #tpu.dot_dimension_numbers<[1], [0], [0], [1], [0, 0, 1, 1], [], []>} : vector<2x50xf32>, vector<50x50xf32>, vector<2x50xf32> -> vector<2x50xf32>
    %493 = arith.addf %492, %61 : vector<2x50xf32>
    %494 = vector.shape_cast %493 : vector<2x50xf32> to vector<2x1x50xf32>
    %495 = vector.broadcast %494 : vector<2x1x50xf32> to vector<2x16x50xf32>
    %496 = arith.mulf %495, %37 : vector<2x16x50xf32>
    %cst_143 = arith.constant dense<0.000000e+00> : vector<2x16xf32>
    %497 = vector.multi_reduction <add>, %496, %cst_143 [2] : vector<2x16x50xf32> to vector<2x16xf32>
    %cst_144 = arith.constant dense<0xFF800000> : vector<2xf32>
    %498 = vector.multi_reduction <maximumf>, %497, %cst_144 [1] : vector<2x16xf32> to vector<2xf32>
    %499 = vector.shape_cast %498 : vector<2xf32> to vector<2x1xf32>
    %500 = vector.broadcast %499 : vector<2x1xf32> to vector<2x16xf32>
    %501 = arith.subf %497, %500 : vector<2x16xf32>
    %502 = math.exp %501 : vector<2x16xf32>
    %cst_145 = arith.constant dense<0.000000e+00> : vector<2xf32>
    %503 = vector.multi_reduction <add>, %502, %cst_145 [1] : vector<2x16xf32> to vector<2xf32>
    %504 = vector.shape_cast %503 : vector<2xf32> to vector<2x1xf32>
    %505 = vector.broadcast %504 : vector<2x1xf32> to vector<2x16xf32>
    %506 = arith.divf %502, %505 : vector<2x16xf32>
    %507 = vector.shape_cast %506 : vector<2x16xf32> to vector<2x16x1xf32>
    %508 = vector.broadcast %507 : vector<2x16x1xf32> to vector<2x16x50xf32>
    %509 = arith.mulf %508, %38 : vector<2x16x50xf32>
    %cst_146 = arith.constant dense<0.000000e+00> : vector<2x50xf32>
    %510 = vector.multi_reduction <add>, %509, %cst_146 [1] : vector<2x16x50xf32> to vector<2x50xf32>
    %cst_147 = arith.constant 0.000000e+00 : f32
    %511 = vector.broadcast %cst_147 : f32 to vector<2x50xf32>
    %512 = arith.cmpf ogt, %510, %511 : vector<2x50xf32>
    %cst_148 = arith.constant 0.000000e+00 : f32
    %513 = vector.broadcast %cst_148 : f32 to vector<2x50xf32>
    %514 = arith.minimumf %510, %513 : vector<2x50xf32>
    %515 = math.exp %514 : vector<2x50xf32>
    %cst_149 = arith.constant 1.000000e+00 : f32
    %516 = vector.broadcast %cst_149 : f32 to vector<2x50xf32>
    %517 = arith.subf %515, %516 : vector<2x50xf32>
    %518 = arith.select %512, %510, %517 : vector<2x50xi1>, vector<2x50xf32>
    %cst_150 = arith.constant dense<0.000000e+00> : vector<2x50xf32>
    %519 = tpu.matmul %518, %46, %cst_150 {dimension_numbers = #tpu.dot_dimension_numbers<[1], [0], [0], [1], [0, 0, 1, 1], [], []>} : vector<2x50xf32>, vector<50x50xf32>, vector<2x50xf32> -> vector<2x50xf32>
    %520 = arith.addf %519, %64 : vector<2x50xf32>
    %521 = arith.addf %520, %424 : vector<2x50xf32>
    %cst_151 = arith.constant dense<0.000000e+00> : vector<2xf32>
    %522 = vector.multi_reduction <add>, %521, %cst_151 [1] : vector<2x50xf32> to vector<2xf32>
    %523 = vector.shape_cast %522 : vector<2xf32> to vector<2x1xf32>
    %cst_152 = arith.constant 5.000000e+01 : f32
    %524 = vector.broadcast %cst_152 : f32 to vector<2x1xf32>
    %525 = arith.divf %523, %524 : vector<2x1xf32>
    %526 = vector.broadcast %525 : vector<2x1xf32> to vector<2x50xf32>
    %527 = arith.subf %521, %526 : vector<2x50xf32>
    %528 = arith.mulf %527, %527 : vector<2x50xf32>
    %cst_153 = arith.constant dense<0.000000e+00> : vector<2xf32>
    %529 = vector.multi_reduction <add>, %528, %cst_153 [1] : vector<2x50xf32> to vector<2xf32>
    %530 = vector.shape_cast %529 : vector<2xf32> to vector<2x1xf32>
    %cst_154 = arith.constant 5.000000e+01 : f32
    %531 = vector.broadcast %cst_154 : f32 to vector<2x1xf32>
    %532 = arith.divf %530, %531 : vector<2x1xf32>
    %533 = vector.broadcast %525 : vector<2x1xf32> to vector<2x50xf32>
    %534 = arith.subf %521, %533 : vector<2x50xf32>
    %cst_155 = arith.constant 9.99999974E-6 : f32
    %535 = vector.broadcast %cst_155 : f32 to vector<2x1xf32>
    %536 = arith.addf %532, %535 : vector<2x1xf32>
    %537 = math.rsqrt %536 : vector<2x1xf32>
    %538 = vector.broadcast %537 : vector<2x1xf32> to vector<2x50xf32>
    %539 = arith.mulf %534, %538 : vector<2x50xf32>
    %540 = arith.mulf %539, %67 : vector<2x50xf32>
    %541 = arith.addf %540, %70 : vector<2x50xf32>
    %542 = arith.addf %541, %124 : vector<2x50xf32>
    %543 = arith.addf %136, %76 : vector<2x50xf32>
    %544 = arith.addf %221, %79 : vector<2x50xf32>
    %545 = arith.addf %317, %82 : vector<2x50xf32>
    %546 = arith.addf %424, %85 : vector<2x50xf32>
    %547 = arith.addf %542, %88 : vector<2x50xf32>
    %cst_156 = arith.constant dense<0.000000e+00> : vector<2x50xf32>
    %548 = tpu.matmul %542, %40, %cst_156 {dimension_numbers = #tpu.dot_dimension_numbers<[1], [0], [0], [1], [0, 0, 1, 1], [], []>} : vector<2x50xf32>, vector<50x50xf32>, vector<2x50xf32> -> vector<2x50xf32>
    %549 = arith.addf %548, %49 : vector<2x50xf32>
    %550 = arith.mulf %549, %543 : vector<2x50xf32>
    %cst_157 = arith.constant dense<0.000000e+00> : vector<2xf32>
    %551 = vector.multi_reduction <add>, %550, %cst_157 [1] : vector<2x50xf32> to vector<2xf32>
    %552 = vector.shape_cast %551 : vector<2xf32> to vector<2x1xf32>
    %553 = arith.mulf %549, %544 : vector<2x50xf32>
    %cst_158 = arith.constant dense<0.000000e+00> : vector<2xf32>
    %554 = vector.multi_reduction <add>, %553, %cst_158 [1] : vector<2x50xf32> to vector<2xf32>
    %555 = vector.shape_cast %554 : vector<2xf32> to vector<2x1xf32>
    %556 = arith.mulf %549, %545 : vector<2x50xf32>
    %cst_159 = arith.constant dense<0.000000e+00> : vector<2xf32>
    %557 = vector.multi_reduction <add>, %556, %cst_159 [1] : vector<2x50xf32> to vector<2xf32>
    %558 = vector.shape_cast %557 : vector<2xf32> to vector<2x1xf32>
    %559 = arith.mulf %549, %546 : vector<2x50xf32>
    %cst_160 = arith.constant dense<0.000000e+00> : vector<2xf32>
    %560 = vector.multi_reduction <add>, %559, %cst_160 [1] : vector<2x50xf32> to vector<2xf32>
    %561 = vector.shape_cast %560 : vector<2xf32> to vector<2x1xf32>
    %562 = arith.mulf %549, %547 : vector<2x50xf32>
    %cst_161 = arith.constant dense<0.000000e+00> : vector<2xf32>
    %563 = vector.multi_reduction <add>, %562, %cst_161 [1] : vector<2x50xf32> to vector<2xf32>
    %564 = vector.shape_cast %563 : vector<2xf32> to vector<2x1xf32>
    %565 = arith.maximumf %552, %555 : vector<2x1xf32>
    %566 = arith.maximumf %565, %558 : vector<2x1xf32>
    %567 = arith.maximumf %566, %561 : vector<2x1xf32>
    %568 = arith.maximumf %567, %564 : vector<2x1xf32>
    %569 = arith.subf %552, %568 : vector<2x1xf32>
    %570 = math.exp %569 : vector<2x1xf32>
    %571 = arith.subf %555, %568 : vector<2x1xf32>
    %572 = math.exp %571 : vector<2x1xf32>
    %573 = arith.subf %558, %568 : vector<2x1xf32>
    %574 = math.exp %573 : vector<2x1xf32>
    %575 = arith.subf %561, %568 : vector<2x1xf32>
    %576 = math.exp %575 : vector<2x1xf32>
    %577 = arith.subf %564, %568 : vector<2x1xf32>
    %578 = math.exp %577 : vector<2x1xf32>
    %579 = vector.broadcast %570 : vector<2x1xf32> to vector<2x50xf32>
    %580 = arith.mulf %579, %543 : vector<2x50xf32>
    %581 = arith.addf %570, %572 : vector<2x1xf32>
    %582 = vector.broadcast %572 : vector<2x1xf32> to vector<2x50xf32>
    %583 = arith.mulf %582, %544 : vector<2x50xf32>
    %584 = arith.addf %580, %583 : vector<2x50xf32>
    %585 = arith.addf %581, %574 : vector<2x1xf32>
    %586 = vector.broadcast %574 : vector<2x1xf32> to vector<2x50xf32>
    %587 = arith.mulf %586, %545 : vector<2x50xf32>
    %588 = arith.addf %584, %587 : vector<2x50xf32>
    %589 = arith.addf %585, %576 : vector<2x1xf32>
    %590 = vector.broadcast %576 : vector<2x1xf32> to vector<2x50xf32>
    %591 = arith.mulf %590, %546 : vector<2x50xf32>
    %592 = arith.addf %588, %591 : vector<2x50xf32>
    %593 = arith.addf %589, %578 : vector<2x1xf32>
    %594 = vector.broadcast %578 : vector<2x1xf32> to vector<2x50xf32>
    %595 = arith.mulf %594, %547 : vector<2x50xf32>
    %596 = arith.addf %592, %595 : vector<2x50xf32>
    %597 = vector.broadcast %593 : vector<2x1xf32> to vector<2x50xf32>
    %598 = arith.divf %596, %597 : vector<2x50xf32>
    %cst_162 = arith.constant dense<0.000000e+00> : vector<2x50xf32>
    %599 = tpu.matmul %598, %42, %cst_162 {dimension_numbers = #tpu.dot_dimension_numbers<[1], [0], [0], [1], [0, 0, 1, 1], [], []>} : vector<2x50xf32>, vector<50x50xf32>, vector<2x50xf32> -> vector<2x50xf32>
    %600 = arith.addf %599, %52 : vector<2x50xf32>
    %cst_163 = arith.constant dense<0.000000e+00> : vector<2xf32>
    %601 = vector.multi_reduction <add>, %600, %cst_163 [1] : vector<2x50xf32> to vector<2xf32>
    %602 = vector.shape_cast %601 : vector<2xf32> to vector<2x1xf32>
    %cst_164 = arith.constant 5.000000e+01 : f32
    %603 = vector.broadcast %cst_164 : f32 to vector<2x1xf32>
    %604 = arith.divf %602, %603 : vector<2x1xf32>
    %605 = vector.broadcast %604 : vector<2x1xf32> to vector<2x50xf32>
    %606 = arith.subf %600, %605 : vector<2x50xf32>
    %607 = arith.mulf %606, %606 : vector<2x50xf32>
    %cst_165 = arith.constant dense<0.000000e+00> : vector<2xf32>
    %608 = vector.multi_reduction <add>, %607, %cst_165 [1] : vector<2x50xf32> to vector<2xf32>
    %609 = vector.shape_cast %608 : vector<2xf32> to vector<2x1xf32>
    %cst_166 = arith.constant 5.000000e+01 : f32
    %610 = vector.broadcast %cst_166 : f32 to vector<2x1xf32>
    %611 = arith.divf %609, %610 : vector<2x1xf32>
    %612 = vector.broadcast %604 : vector<2x1xf32> to vector<2x50xf32>
    %613 = arith.subf %600, %612 : vector<2x50xf32>
    %cst_167 = arith.constant 9.99999974E-6 : f32
    %614 = vector.broadcast %cst_167 : f32 to vector<2x1xf32>
    %615 = arith.addf %611, %614 : vector<2x1xf32>
    %616 = math.rsqrt %615 : vector<2x1xf32>
    %617 = vector.broadcast %616 : vector<2x1xf32> to vector<2x50xf32>
    %618 = arith.mulf %613, %617 : vector<2x50xf32>
    %619 = arith.mulf %618, %55 : vector<2x50xf32>
    %620 = arith.addf %619, %58 : vector<2x50xf32>
    %cst_168 = arith.constant dense<0.000000e+00> : vector<2x50xf32>
    %621 = tpu.matmul %620, %44, %cst_168 {dimension_numbers = #tpu.dot_dimension_numbers<[1], [0], [0], [1], [0, 0, 1, 1], [], []>} : vector<2x50xf32>, vector<50x50xf32>, vector<2x50xf32> -> vector<2x50xf32>
    %622 = arith.addf %621, %61 : vector<2x50xf32>
    %623 = vector.shape_cast %622 : vector<2x50xf32> to vector<2x1x50xf32>
    %624 = vector.broadcast %623 : vector<2x1x50xf32> to vector<2x16x50xf32>
    %625 = arith.mulf %624, %37 : vector<2x16x50xf32>
    %cst_169 = arith.constant dense<0.000000e+00> : vector<2x16xf32>
    %626 = vector.multi_reduction <add>, %625, %cst_169 [2] : vector<2x16x50xf32> to vector<2x16xf32>
    %cst_170 = arith.constant dense<0xFF800000> : vector<2xf32>
    %627 = vector.multi_reduction <maximumf>, %626, %cst_170 [1] : vector<2x16xf32> to vector<2xf32>
    %628 = vector.shape_cast %627 : vector<2xf32> to vector<2x1xf32>
    %629 = vector.broadcast %628 : vector<2x1xf32> to vector<2x16xf32>
    %630 = arith.subf %626, %629 : vector<2x16xf32>
    %631 = math.exp %630 : vector<2x16xf32>
    %cst_171 = arith.constant dense<0.000000e+00> : vector<2xf32>
    %632 = vector.multi_reduction <add>, %631, %cst_171 [1] : vector<2x16xf32> to vector<2xf32>
    %633 = vector.shape_cast %632 : vector<2xf32> to vector<2x1xf32>
    %634 = vector.broadcast %633 : vector<2x1xf32> to vector<2x16xf32>
    %635 = arith.divf %631, %634 : vector<2x16xf32>
    %636 = vector.shape_cast %635 : vector<2x16xf32> to vector<2x16x1xf32>
    %637 = vector.broadcast %636 : vector<2x16x1xf32> to vector<2x16x50xf32>
    %638 = arith.mulf %637, %38 : vector<2x16x50xf32>
    %cst_172 = arith.constant dense<0.000000e+00> : vector<2x50xf32>
    %639 = vector.multi_reduction <add>, %638, %cst_172 [1] : vector<2x16x50xf32> to vector<2x50xf32>
    %cst_173 = arith.constant 0.000000e+00 : f32
    %640 = vector.broadcast %cst_173 : f32 to vector<2x50xf32>
    %641 = arith.cmpf ogt, %639, %640 : vector<2x50xf32>
    %cst_174 = arith.constant 0.000000e+00 : f32
    %642 = vector.broadcast %cst_174 : f32 to vector<2x50xf32>
    %643 = arith.minimumf %639, %642 : vector<2x50xf32>
    %644 = math.exp %643 : vector<2x50xf32>
    %cst_175 = arith.constant 1.000000e+00 : f32
    %645 = vector.broadcast %cst_175 : f32 to vector<2x50xf32>
    %646 = arith.subf %644, %645 : vector<2x50xf32>
    %647 = arith.select %641, %639, %646 : vector<2x50xi1>, vector<2x50xf32>
    %cst_176 = arith.constant dense<0.000000e+00> : vector<2x50xf32>
    %648 = tpu.matmul %647, %46, %cst_176 {dimension_numbers = #tpu.dot_dimension_numbers<[1], [0], [0], [1], [0, 0, 1, 1], [], []>} : vector<2x50xf32>, vector<50x50xf32>, vector<2x50xf32> -> vector<2x50xf32>
    %649 = arith.addf %648, %64 : vector<2x50xf32>
    %650 = arith.addf %649, %542 : vector<2x50xf32>
    %cst_177 = arith.constant dense<0.000000e+00> : vector<2xf32>
    %651 = vector.multi_reduction <add>, %650, %cst_177 [1] : vector<2x50xf32> to vector<2xf32>
    %652 = vector.shape_cast %651 : vector<2xf32> to vector<2x1xf32>
    %cst_178 = arith.constant 5.000000e+01 : f32
    %653 = vector.broadcast %cst_178 : f32 to vector<2x1xf32>
    %654 = arith.divf %652, %653 : vector<2x1xf32>
    %655 = vector.broadcast %654 : vector<2x1xf32> to vector<2x50xf32>
    %656 = arith.subf %650, %655 : vector<2x50xf32>
    %657 = arith.mulf %656, %656 : vector<2x50xf32>
    %cst_179 = arith.constant dense<0.000000e+00> : vector<2xf32>
    %658 = vector.multi_reduction <add>, %657, %cst_179 [1] : vector<2x50xf32> to vector<2xf32>
    %659 = vector.shape_cast %658 : vector<2xf32> to vector<2x1xf32>
    %cst_180 = arith.constant 5.000000e+01 : f32
    %660 = vector.broadcast %cst_180 : f32 to vector<2x1xf32>
    %661 = arith.divf %659, %660 : vector<2x1xf32>
    %662 = vector.broadcast %654 : vector<2x1xf32> to vector<2x50xf32>
    %663 = arith.subf %650, %662 : vector<2x50xf32>
    %cst_181 = arith.constant 9.99999974E-6 : f32
    %664 = vector.broadcast %cst_181 : f32 to vector<2x1xf32>
    %665 = arith.addf %661, %664 : vector<2x1xf32>
    %666 = math.rsqrt %665 : vector<2x1xf32>
    %667 = vector.broadcast %666 : vector<2x1xf32> to vector<2x50xf32>
    %668 = arith.mulf %663, %667 : vector<2x50xf32>
    %669 = arith.mulf %668, %67 : vector<2x50xf32>
    %670 = arith.addf %669, %70 : vector<2x50xf32>
    %671 = arith.addf %670, %133 : vector<2x50xf32>
    %672 = arith.addf %136, %73 : vector<2x50xf32>
    %673 = arith.addf %221, %76 : vector<2x50xf32>
    %674 = arith.addf %317, %79 : vector<2x50xf32>
    %675 = arith.addf %424, %82 : vector<2x50xf32>
    %676 = arith.addf %542, %85 : vector<2x50xf32>
    %677 = arith.addf %671, %88 : vector<2x50xf32>
    %cst_182 = arith.constant dense<0.000000e+00> : vector<2x50xf32>
    %678 = tpu.matmul %671, %40, %cst_182 {dimension_numbers = #tpu.dot_dimension_numbers<[1], [0], [0], [1], [0, 0, 1, 1], [], []>} : vector<2x50xf32>, vector<50x50xf32>, vector<2x50xf32> -> vector<2x50xf32>
    %679 = arith.addf %678, %49 : vector<2x50xf32>
    %680 = arith.mulf %679, %672 : vector<2x50xf32>
    %cst_183 = arith.constant dense<0.000000e+00> : vector<2xf32>
    %681 = vector.multi_reduction <add>, %680, %cst_183 [1] : vector<2x50xf32> to vector<2xf32>
    %682 = vector.shape_cast %681 : vector<2xf32> to vector<2x1xf32>
    %683 = arith.mulf %679, %673 : vector<2x50xf32>
    %cst_184 = arith.constant dense<0.000000e+00> : vector<2xf32>
    %684 = vector.multi_reduction <add>, %683, %cst_184 [1] : vector<2x50xf32> to vector<2xf32>
    %685 = vector.shape_cast %684 : vector<2xf32> to vector<2x1xf32>
    %686 = arith.mulf %679, %674 : vector<2x50xf32>
    %cst_185 = arith.constant dense<0.000000e+00> : vector<2xf32>
    %687 = vector.multi_reduction <add>, %686, %cst_185 [1] : vector<2x50xf32> to vector<2xf32>
    %688 = vector.shape_cast %687 : vector<2xf32> to vector<2x1xf32>
    %689 = arith.mulf %679, %675 : vector<2x50xf32>
    %cst_186 = arith.constant dense<0.000000e+00> : vector<2xf32>
    %690 = vector.multi_reduction <add>, %689, %cst_186 [1] : vector<2x50xf32> to vector<2xf32>
    %691 = vector.shape_cast %690 : vector<2xf32> to vector<2x1xf32>
    %692 = arith.mulf %679, %676 : vector<2x50xf32>
    %cst_187 = arith.constant dense<0.000000e+00> : vector<2xf32>
    %693 = vector.multi_reduction <add>, %692, %cst_187 [1] : vector<2x50xf32> to vector<2xf32>
    %694 = vector.shape_cast %693 : vector<2xf32> to vector<2x1xf32>
    %695 = arith.mulf %679, %677 : vector<2x50xf32>
    %cst_188 = arith.constant dense<0.000000e+00> : vector<2xf32>
    %696 = vector.multi_reduction <add>, %695, %cst_188 [1] : vector<2x50xf32> to vector<2xf32>
    %697 = vector.shape_cast %696 : vector<2xf32> to vector<2x1xf32>
    %698 = arith.maximumf %682, %685 : vector<2x1xf32>
    %699 = arith.maximumf %698, %688 : vector<2x1xf32>
    %700 = arith.maximumf %699, %691 : vector<2x1xf32>
    %701 = arith.maximumf %700, %694 : vector<2x1xf32>
    %702 = arith.maximumf %701, %697 : vector<2x1xf32>
    %703 = arith.subf %682, %702 : vector<2x1xf32>
    %704 = math.exp %703 : vector<2x1xf32>
    %705 = arith.subf %685, %702 : vector<2x1xf32>
    %706 = math.exp %705 : vector<2x1xf32>
    %707 = arith.subf %688, %702 : vector<2x1xf32>
    %708 = math.exp %707 : vector<2x1xf32>
    %709 = arith.subf %691, %702 : vector<2x1xf32>
    %710 = math.exp %709 : vector<2x1xf32>
    %711 = arith.subf %694, %702 : vector<2x1xf32>
    %712 = math.exp %711 : vector<2x1xf32>
    %713 = arith.subf %697, %702 : vector<2x1xf32>
    %714 = math.exp %713 : vector<2x1xf32>
    %715 = vector.broadcast %704 : vector<2x1xf32> to vector<2x50xf32>
    %716 = arith.mulf %715, %672 : vector<2x50xf32>
    %717 = arith.addf %704, %706 : vector<2x1xf32>
    %718 = vector.broadcast %706 : vector<2x1xf32> to vector<2x50xf32>
    %719 = arith.mulf %718, %673 : vector<2x50xf32>
    %720 = arith.addf %716, %719 : vector<2x50xf32>
    %721 = arith.addf %717, %708 : vector<2x1xf32>
    %722 = vector.broadcast %708 : vector<2x1xf32> to vector<2x50xf32>
    %723 = arith.mulf %722, %674 : vector<2x50xf32>
    %724 = arith.addf %720, %723 : vector<2x50xf32>
    %725 = arith.addf %721, %710 : vector<2x1xf32>
    %726 = vector.broadcast %710 : vector<2x1xf32> to vector<2x50xf32>
    %727 = arith.mulf %726, %675 : vector<2x50xf32>
    %728 = arith.addf %724, %727 : vector<2x50xf32>
    %729 = arith.addf %725, %712 : vector<2x1xf32>
    %730 = vector.broadcast %712 : vector<2x1xf32> to vector<2x50xf32>
    %731 = arith.mulf %730, %676 : vector<2x50xf32>
    %732 = arith.addf %728, %731 : vector<2x50xf32>
    %733 = arith.addf %729, %714 : vector<2x1xf32>
    %734 = vector.broadcast %714 : vector<2x1xf32> to vector<2x50xf32>
    %735 = arith.mulf %734, %677 : vector<2x50xf32>
    %736 = arith.addf %732, %735 : vector<2x50xf32>
    %737 = vector.broadcast %733 : vector<2x1xf32> to vector<2x50xf32>
    %738 = arith.divf %736, %737 : vector<2x50xf32>
    %cst_189 = arith.constant dense<0.000000e+00> : vector<2x50xf32>
    %739 = tpu.matmul %738, %42, %cst_189 {dimension_numbers = #tpu.dot_dimension_numbers<[1], [0], [0], [1], [0, 0, 1, 1], [], []>} : vector<2x50xf32>, vector<50x50xf32>, vector<2x50xf32> -> vector<2x50xf32>
    %740 = arith.addf %739, %52 : vector<2x50xf32>
    %cst_190 = arith.constant dense<0.000000e+00> : vector<2xf32>
    %741 = vector.multi_reduction <add>, %740, %cst_190 [1] : vector<2x50xf32> to vector<2xf32>
    %742 = vector.shape_cast %741 : vector<2xf32> to vector<2x1xf32>
    %cst_191 = arith.constant 5.000000e+01 : f32
    %743 = vector.broadcast %cst_191 : f32 to vector<2x1xf32>
    %744 = arith.divf %742, %743 : vector<2x1xf32>
    %745 = vector.broadcast %744 : vector<2x1xf32> to vector<2x50xf32>
    %746 = arith.subf %740, %745 : vector<2x50xf32>
    %747 = arith.mulf %746, %746 : vector<2x50xf32>
    %cst_192 = arith.constant dense<0.000000e+00> : vector<2xf32>
    %748 = vector.multi_reduction <add>, %747, %cst_192 [1] : vector<2x50xf32> to vector<2xf32>
    %749 = vector.shape_cast %748 : vector<2xf32> to vector<2x1xf32>
    %cst_193 = arith.constant 5.000000e+01 : f32
    %750 = vector.broadcast %cst_193 : f32 to vector<2x1xf32>
    %751 = arith.divf %749, %750 : vector<2x1xf32>
    %752 = vector.broadcast %744 : vector<2x1xf32> to vector<2x50xf32>
    %753 = arith.subf %740, %752 : vector<2x50xf32>
    %cst_194 = arith.constant 9.99999974E-6 : f32
    %754 = vector.broadcast %cst_194 : f32 to vector<2x1xf32>
    %755 = arith.addf %751, %754 : vector<2x1xf32>
    %756 = math.rsqrt %755 : vector<2x1xf32>
    %757 = vector.broadcast %756 : vector<2x1xf32> to vector<2x50xf32>
    %758 = arith.mulf %753, %757 : vector<2x50xf32>
    %759 = arith.mulf %758, %55 : vector<2x50xf32>
    %760 = arith.addf %759, %58 : vector<2x50xf32>
    %cst_195 = arith.constant dense<0.000000e+00> : vector<2x50xf32>
    %761 = tpu.matmul %760, %44, %cst_195 {dimension_numbers = #tpu.dot_dimension_numbers<[1], [0], [0], [1], [0, 0, 1, 1], [], []>} : vector<2x50xf32>, vector<50x50xf32>, vector<2x50xf32> -> vector<2x50xf32>
    %762 = arith.addf %761, %61 : vector<2x50xf32>
    %763 = vector.shape_cast %762 : vector<2x50xf32> to vector<2x1x50xf32>
    %764 = vector.broadcast %763 : vector<2x1x50xf32> to vector<2x16x50xf32>
    %765 = arith.mulf %764, %37 : vector<2x16x50xf32>
    %cst_196 = arith.constant dense<0.000000e+00> : vector<2x16xf32>
    %766 = vector.multi_reduction <add>, %765, %cst_196 [2] : vector<2x16x50xf32> to vector<2x16xf32>
    %cst_197 = arith.constant dense<0xFF800000> : vector<2xf32>
    %767 = vector.multi_reduction <maximumf>, %766, %cst_197 [1] : vector<2x16xf32> to vector<2xf32>
    %768 = vector.shape_cast %767 : vector<2xf32> to vector<2x1xf32>
    %769 = vector.broadcast %768 : vector<2x1xf32> to vector<2x16xf32>
    %770 = arith.subf %766, %769 : vector<2x16xf32>
    %771 = math.exp %770 : vector<2x16xf32>
    %cst_198 = arith.constant dense<0.000000e+00> : vector<2xf32>
    %772 = vector.multi_reduction <add>, %771, %cst_198 [1] : vector<2x16xf32> to vector<2xf32>
    %773 = vector.shape_cast %772 : vector<2xf32> to vector<2x1xf32>
    %774 = vector.broadcast %773 : vector<2x1xf32> to vector<2x16xf32>
    %775 = arith.divf %771, %774 : vector<2x16xf32>
    %776 = vector.shape_cast %775 : vector<2x16xf32> to vector<2x16x1xf32>
    %777 = vector.broadcast %776 : vector<2x16x1xf32> to vector<2x16x50xf32>
    %778 = arith.mulf %777, %38 : vector<2x16x50xf32>
    %cst_199 = arith.constant dense<0.000000e+00> : vector<2x50xf32>
    %779 = vector.multi_reduction <add>, %778, %cst_199 [1] : vector<2x16x50xf32> to vector<2x50xf32>
    %cst_200 = arith.constant 0.000000e+00 : f32
    %780 = vector.broadcast %cst_200 : f32 to vector<2x50xf32>
    %781 = arith.cmpf ogt, %779, %780 : vector<2x50xf32>
    %cst_201 = arith.constant 0.000000e+00 : f32
    %782 = vector.broadcast %cst_201 : f32 to vector<2x50xf32>
    %783 = arith.minimumf %779, %782 : vector<2x50xf32>
    %784 = math.exp %783 : vector<2x50xf32>
    %cst_202 = arith.constant 1.000000e+00 : f32
    %785 = vector.broadcast %cst_202 : f32 to vector<2x50xf32>
    %786 = arith.subf %784, %785 : vector<2x50xf32>
    %787 = arith.select %781, %779, %786 : vector<2x50xi1>, vector<2x50xf32>
    %cst_203 = arith.constant dense<0.000000e+00> : vector<2x50xf32>
    %788 = tpu.matmul %787, %46, %cst_203 {dimension_numbers = #tpu.dot_dimension_numbers<[1], [0], [0], [1], [0, 0, 1, 1], [], []>} : vector<2x50xf32>, vector<50x50xf32>, vector<2x50xf32> -> vector<2x50xf32>
    %789 = arith.addf %788, %64 : vector<2x50xf32>
    %790 = arith.addf %789, %671 : vector<2x50xf32>
    %cst_204 = arith.constant dense<0.000000e+00> : vector<2xf32>
    %791 = vector.multi_reduction <add>, %790, %cst_204 [1] : vector<2x50xf32> to vector<2xf32>
    %792 = vector.shape_cast %791 : vector<2xf32> to vector<2x1xf32>
    %cst_205 = arith.constant 5.000000e+01 : f32
    %793 = vector.broadcast %cst_205 : f32 to vector<2x1xf32>
    %794 = arith.divf %792, %793 : vector<2x1xf32>
    %795 = vector.broadcast %794 : vector<2x1xf32> to vector<2x50xf32>
    %796 = arith.subf %790, %795 : vector<2x50xf32>
    %797 = arith.mulf %796, %796 : vector<2x50xf32>
    %cst_206 = arith.constant dense<0.000000e+00> : vector<2xf32>
    %798 = vector.multi_reduction <add>, %797, %cst_206 [1] : vector<2x50xf32> to vector<2xf32>
    %799 = vector.shape_cast %798 : vector<2xf32> to vector<2x1xf32>
    %cst_207 = arith.constant 5.000000e+01 : f32
    %800 = vector.broadcast %cst_207 : f32 to vector<2x1xf32>
    %801 = arith.divf %799, %800 : vector<2x1xf32>
    %802 = vector.broadcast %794 : vector<2x1xf32> to vector<2x50xf32>
    %803 = arith.subf %790, %802 : vector<2x50xf32>
    %cst_208 = arith.constant 9.99999974E-6 : f32
    %804 = vector.broadcast %cst_208 : f32 to vector<2x1xf32>
    %805 = arith.addf %801, %804 : vector<2x1xf32>
    %806 = math.rsqrt %805 : vector<2x1xf32>
    %807 = vector.broadcast %806 : vector<2x1xf32> to vector<2x50xf32>
    %808 = arith.mulf %803, %807 : vector<2x50xf32>
    %809 = arith.mulf %808, %67 : vector<2x50xf32>
    %810 = arith.addf %809, %70 : vector<2x50xf32>
    %811 = vector.extract_strided_slice %220 {offsets = [0, 0], sizes = [1, 50], strides = [1, 1]} : vector<2x50xf32> to vector<1x50xf32>
    %812 = vector.extract_strided_slice %316 {offsets = [0, 0], sizes = [1, 50], strides = [1, 1]} : vector<2x50xf32> to vector<1x50xf32>
    %813 = vector.extract_strided_slice %423 {offsets = [0, 0], sizes = [1, 50], strides = [1, 1]} : vector<2x50xf32> to vector<1x50xf32>
    %814 = vector.extract_strided_slice %541 {offsets = [0, 0], sizes = [1, 50], strides = [1, 1]} : vector<2x50xf32> to vector<1x50xf32>
    %815 = vector.extract_strided_slice %670 {offsets = [0, 0], sizes = [1, 50], strides = [1, 1]} : vector<2x50xf32> to vector<1x50xf32>
    %816 = vector.extract_strided_slice %810 {offsets = [0, 0], sizes = [1, 50], strides = [1, 1]} : vector<2x50xf32> to vector<1x50xf32>
    %817 = vector.extract_strided_slice %220 {offsets = [1, 0], sizes = [1, 50], strides = [1, 1]} : vector<2x50xf32> to vector<1x50xf32>
    %818 = vector.extract_strided_slice %316 {offsets = [1, 0], sizes = [1, 50], strides = [1, 1]} : vector<2x50xf32> to vector<1x50xf32>
    %819 = vector.extract_strided_slice %423 {offsets = [1, 0], sizes = [1, 50], strides = [1, 1]} : vector<2x50xf32> to vector<1x50xf32>
    %820 = vector.extract_strided_slice %541 {offsets = [1, 0], sizes = [1, 50], strides = [1, 1]} : vector<2x50xf32> to vector<1x50xf32>
    %821 = vector.extract_strided_slice %670 {offsets = [1, 0], sizes = [1, 50], strides = [1, 1]} : vector<2x50xf32> to vector<1x50xf32>
    %822 = vector.extract_strided_slice %810 {offsets = [1, 0], sizes = [1, 50], strides = [1, 1]} : vector<2x50xf32> to vector<1x50xf32>
    %823 = tpu.concatenate %811, %812, %813, %814, %815, %816, %817, %818, %819, %820, %821, %822 in 0 : vector<1x50xf32>, vector<1x50xf32>, vector<1x50xf32>, vector<1x50xf32>, vector<1x50xf32>, vector<1x50xf32>, vector<1x50xf32>, vector<1x50xf32>, vector<1x50xf32>, vector<1x50xf32>, vector<1x50xf32>, vector<1x50xf32> -> vector<12x50xf32>
    %c5 = arith.constant 5 : index
    %c0_209 = arith.constant 0 : index
    %c0_210 = arith.constant 0 : index
    %824 = vector.load %arg4[%c5, %c0_209, %c0_210] : memref<7x50x50xf32, #tpu.memory_space<vmem>>, vector<1x50x50xf32>
    %825 = vector.shape_cast %824 : vector<1x50x50xf32> to vector<50x50xf32>
    %cst_211 = arith.constant dense<0.000000e+00> : vector<12x50xf32>
    %826 = tpu.matmul %823, %825, %cst_211 {dimension_numbers = #tpu.dot_dimension_numbers<[1], [0], [0], [1], [0, 0, 1, 1], [], []>} : vector<12x50xf32>, vector<50x50xf32>, vector<12x50xf32> -> vector<12x50xf32>
    %827 = vector.extract_strided_slice %0 {offsets = [12, 0], sizes = [1, 50], strides = [1, 1]} : vector<21x50xf32> to vector<1x50xf32>
    %828 = vector.broadcast %827 : vector<1x50xf32> to vector<12x50xf32>
    %829 = arith.addf %826, %828 : vector<12x50xf32>
    %cst_212 = arith.constant 0.000000e+00 : f32
    %830 = vector.broadcast %cst_212 : f32 to vector<12x50xf32>
    %831 = arith.cmpf ogt, %829, %830 : vector<12x50xf32>
    %cst_213 = arith.constant 0.000000e+00 : f32
    %832 = vector.broadcast %cst_213 : f32 to vector<12x50xf32>
    %833 = arith.minimumf %829, %832 : vector<12x50xf32>
    %834 = math.exp %833 : vector<12x50xf32>
    %cst_214 = arith.constant 1.000000e+00 : f32
    %835 = vector.broadcast %cst_214 : f32 to vector<12x50xf32>
    %836 = arith.subf %834, %835 : vector<12x50xf32>
    %837 = arith.select %831, %829, %836 : vector<12x50xi1>, vector<12x50xf32>
    %c6 = arith.constant 6 : index
    %c0_215 = arith.constant 0 : index
    %c0_216 = arith.constant 0 : index
    %838 = vector.load %arg4[%c6, %c0_215, %c0_216] : memref<7x50x50xf32, #tpu.memory_space<vmem>>, vector<1x50x50xf32>
    %839 = vector.shape_cast %838 : vector<1x50x50xf32> to vector<50x50xf32>
    %cst_217 = arith.constant dense<0.000000e+00> : vector<12x50xf32>
    %840 = tpu.matmul %837, %839, %cst_217 {dimension_numbers = #tpu.dot_dimension_numbers<[1], [0], [0], [1], [0, 0, 1, 1], [], []>} : vector<12x50xf32>, vector<50x50xf32>, vector<12x50xf32> -> vector<12x50xf32>
    %841 = vector.extract_strided_slice %0 {offsets = [13, 0], sizes = [1, 50], strides = [1, 1]} : vector<21x50xf32> to vector<1x50xf32>
    %842 = vector.broadcast %841 : vector<1x50xf32> to vector<12x50xf32>
    %843 = arith.addf %840, %842 : vector<12x50xf32>
    %c0_218 = arith.constant 0 : index
    %c0_219 = arith.constant 0 : index
    %844 = vector.load %arg6[%c0_218, %c0_219] : memref<12x50xf32, #tpu.memory_space<vmem>>, vector<12x50xf32>
    tpu.vector_store %arg6[%c0_218, %c0_219], %843 {strides = array<i32>} : memref<12x50xf32, #tpu.memory_space<vmem>>, vector<12x50xf32>,
    return
  }
}

</mosaic_0001>

<llo_original>
// kernel: custom_decoder_forward.1
$region0: #{custom_decoder_forward.1}
  #allocation0 [shape = 'u32[]', space=smem, size = 0x4, offset = 0x4, fixed_abs, tag = 'smem constant byte address 0x4 - core index']
  #allocation1 [shape = 'u32[144,128]{1,0:T(1,128)}', space=vmem, size = 0x12000, scoped, tag = 'internal scratch']
  %s0 = inlined_call_operand.vmem [shape: s32[2,6], index: 0, kind: input, shape index: {}]
  %s1 = inlined_call_operand.vmem [shape: f32[32,64], index: 1, kind: input, shape index: {}]
  %s2 = inlined_call_operand.vmem [shape: f32[64,50], index: 2, kind: input, shape index: {}]
  %s3 = inlined_call_operand.vmem [shape: f32[12,1,50], index: 3, kind: input, shape index: {}]
  %s4 = inlined_call_operand.hbm [shape: f32[7,50,50], index: 4, kind: input, shape index: {}]
  %s5 = inlined_call_operand.vmem [shape: f32[21,50], index: 5, kind: input, shape index: {}]
  %s6 = inlined_call_operand.vmem [shape: f32[12,50], index: 6, kind: output, shape index: {}]
  %s7 = sld [smem:[#allocation0]]
  $region42: #{custom_decoder_forward.1} parent=0
    _
  %s9 = ssub.s32 1, %s7
  %s10 = scalar_select 0, %s9, %s7
  $region1: #{custom_decoder_forward.1} parent=0
    #allocation2 [shape = 'u8[1024]{0}', space=smem, size = 0x400, scoped, tag = 'input window, operand 0, single buffered']
    #allocation3 [shape = 's32[1]{0}', space=sflag, size = 0x4, scoped, tag = 'scoped memory for custom_decoder_forward.1']
    #allocation4 [shape = 's32[1]{0}', space=sflag, size = 0x4, scoped, tag = 'scoped memory for custom_decoder_forward.1']
    #allocation5 [shape = 'u8[200704]{0}', space=vmem, size = 0x31000, scoped, tag = 'input window, operand 4, single buffered']
    %11 = vsyncpa [#allocation4], 0
    %12 = vsyncpa [#allocation3], 0
    // Predicated region
    $region2: #{custom_decoder_forward.1} parent=1 // pred_check
      _
    $region3: #{custom_decoder_forward.1} parent=1 // pred_check_branch
      %14 = sbr.rel (0) target = $region5
    $region4: #{custom_decoder_forward.1} parent=1 // pred_region
      %s16 = ssub.s32 32, 32
      %17 = vsyncadd [#allocation4], %s16
      %s19 = sshll.u32 %s0, 4
      %s20 = int_to_ptr.vmem [resolvable:$true] %s19
      %22 = dma.vmem_to_smem %s20, 32, [#allocation2], [#allocation4]
    $region5: #{custom_decoder_forward.1} parent=1 // pred_fallthru
      _
    // Predicated region
    $region6: #{custom_decoder_forward.1} parent=1 // pred_check
      _
    $region7: #{custom_decoder_forward.1} parent=1 // pred_check_branch
      %24 = sbr.rel (0) target = $region9
    $region8: #{custom_decoder_forward.1} parent=1 // pred_region
      _
    $region9: #{custom_decoder_forward.1} parent=1 // pred_fallthru
      _
    // Predicated region
    $region10: #{custom_decoder_forward.1} parent=1 // pred_check
      _
    $region11: #{custom_decoder_forward.1} parent=1 // pred_check_branch
      %26 = sbr.rel (0) target = $region13
    $region12: #{custom_decoder_forward.1} parent=1 // pred_region
      _
    $region13: #{custom_decoder_forward.1} parent=1 // pred_fallthru
      _
    // Predicated region
    $region14: #{custom_decoder_forward.1} parent=1 // pred_check
      _
    $region15: #{custom_decoder_forward.1} parent=1 // pred_check_branch
      %28 = sbr.rel (0) target = $region17
    $region16: #{custom_decoder_forward.1} parent=1 // pred_region
      _
    $region17: #{custom_decoder_forward.1} parent=1 // pred_fallthru
      _
    // Predicated region
    $region18: #{custom_decoder_forward.1} parent=1 // pred_check
      _
    $region19: #{custom_decoder_forward.1} parent=1 // pred_check_branch
      %30 = sbr.rel (0) target = $region21
    $region20: #{custom_decoder_forward.1} parent=1 // pred_region
      %s32 = ssub.s32 6272, 6272
      %33 = vsyncadd [#allocation3], %s32
      %s34 = sshll.u32 [#allocation5], 4
      %s35 = int_to_ptr.vmem [resolvable:$true] %s34
      %40 = dma.hbm_to_vmem [thread:$0]  %s4, 6272, %s35, [#allocation3], 128, 128, 8
    $region21: #{custom_decoder_forward.1} parent=1 // pred_fallthru
      _
    // Predicated region
    $region22: #{custom_decoder_forward.1} parent=1 // pred_check
      _
    $region23: #{custom_decoder_forward.1} parent=1 // pred_check_branch
      %42 = sbr.rel (0) target = $region25
    $region24: #{custom_decoder_forward.1} parent=1 // pred_region
      _
    $region25: #{custom_decoder_forward.1} parent=1 // pred_fallthru
      _
    // Predicated region
    $region26: #{custom_decoder_forward.1} parent=1 // pred_check
      _
    $region27: #{custom_decoder_forward.1} parent=1 // pred_check_branch
      %44 = sbr.rel (0) target = $region29
    $region28: #{custom_decoder_forward.1} parent=1 // pred_region
      %45 = dma.done [#allocation4], 32
    $region29: #{custom_decoder_forward.1} parent=1 // pred_fallthru
      _
    // Predicated region
    $region30: #{custom_decoder_forward.1} parent=1 // pred_check
      _
    $region31: #{custom_decoder_forward.1} parent=1 // pred_check_branch
      %47 = sbr.rel (0) target = $region33
    $region32: #{custom_decoder_forward.1} parent=1 // pred_region
      %48 = dma.done [#allocation3], 6272
    $region33: #{custom_decoder_forward.1} parent=1 // pred_fallthru
      _
    %49 = sfence
    %v50 = vld [vmem:[%s5] sm:$0xff]
    %v51 = vld [vmem:[%s5 + $0x8] sm:$0xff]
    %v52 = vld [vmem:[%s5 + $0x10] sm:$0x1f]
    %v53 = vld [vmem:[%s1] sm:$0xff]
    %v54 = vld [vmem:[%s1 + $0x8] sm:$0xff]
    %v55 = vld [vmem:[%s1 + $0x10] sm:$0xff]
    %v56 = vld [vmem:[%s1 + $0x18] sm:$0xff]
    %v57 = vld [vmem:[%s2] sm:$0xff]
    %v58 = vld [vmem:[%s2 + $0x8] sm:$0xff]
    %v59 = vld [vmem:[%s2 + $0x10] sm:$0xff]
    %v60 = vld [vmem:[%s2 + $0x18] sm:$0xff]
    %v61 = vld [vmem:[%s2 + $0x20] sm:$0xff]
    %v62 = vld [vmem:[%s2 + $0x28] sm:$0xff]
    %v63 = vld [vmem:[%s2 + $0x30] sm:$0xff]
    %v64 = vld [vmem:[%s2 + $0x38] sm:$0xff]
    %v65 = vlaneseq
    %v66 = vshrl.u32 %v65, 7
    %v67 = vsub.s32 0, %v66
    %v68 = vrot.slane %v50, %v67
    %vm69 = vcmask 523264
    %v71 = vsel %vm69, %v53, 0
    %v74 = vsel %vm69, %v54, 0
    %v77 = vsel %vm69, %v55, 0
    %v80 = vsel %vm69, %v56, 0
    %82 = vmatprep.subr.mxu0 0.0
    %83 = vmatpush1.msra.mxu0 %v57
    %84 = vmatprep.subr.mxu0 0.0
    %85 = vmatpush1.msra.mxu0 %v58
    %86 = vmatprep.subr.mxu0 0.0
    %87 = vmatpush1.msra.mxu0 %v59
    %88 = vmatprep.subr.mxu0 0.0
    %89 = vmatpush1.msra.mxu0 %v60
    %90 = vmatprep.subr.mxu0 0.0
    %91 = vmatpush1.msra.mxu0 %v61
    %92 = vmatprep.subr.mxu0 0.0
    %93 = vmatpush1.msra.mxu0 %v62
    %94 = vmatprep.subr.mxu0 0.0
    %95 = vmatpush1.msra.mxu0 %v63
    %96 = vmatprep.subr.mxu0 0.0
    %97 = vmatpush1.msra.mxu0 %v64
    %98 = vmatprep.subr.mxu0 0.0
    %99 = vmatpush1.msra.mxu0 0.0
    %100 = vmatprep.subr.mxu0 0.0
    %101 = vmatpush1.msra.mxu0 0.0
    %102 = vmatprep.subr.mxu0 0.0
    %103 = vmatpush1.msra.mxu0 0.0
    %104 = vmatprep.subr.mxu0 0.0
    %105 = vmatpush1.msra.mxu0 0.0
    %106 = vmatprep.subr.mxu0 0.0
    %107 = vmatpush1.msra.mxu0 0.0
    %108 = vmatprep.subr.mxu0 0.0
    %109 = vmatpush1.msra.mxu0 0.0
    %110 = vmatprep.subr.mxu0 0.0
    %111 = vmatpush1.msra.mxu0 0.0
    %112 = vmatprep.subr.mxu0 0.0
    %113 = vmatpush1.msra.mxu0 0.0
    %114 = vmatprep.subr.mxu0 0.0
    %115 = vmatpush1.msra.mxu0 0.0
    %116 = vmatprep.subr.mxu0 0.0
    %117 = vmatpush1.msra.mxu0 0.0
    %118 = vmatprep.subr.mxu0 0.0
    %119 = vmatpush1.msra.mxu0 0.0
    %120 = vmatprep.subr.mxu0 0.0
    %121 = vmatpush1.msra.mxu0 0.0
    %122 = vmatprep.subr.mxu0 0.0
    %123 = vmatpush1.msra.mxu0 0.0
    %124 = vmatprep.subr.mxu0 0.0
    %125 = vmatpush1.msra.mxu0 0.0
    %126 = vmatprep.subr.mxu0 0.0
    %127 = vmatpush1.msra.mxu0 0.0
    %128 = vmatprep.subr.mxu0 0.0
    %129 = vmatpush1.msra.mxu0 0.0
    %130 = vmatprep.subr.mxu0 0.0
    %131 = vmatpush1.msra.mxu0 0.0
    %132 = vmatprep.subr.mxu0 0.0
    %133 = vmatpush1.msra.mxu0 0.0
    %134 = vmatprep.subr.mxu0 0.0
    %135 = vmatpush1.msra.mxu0 0.0
    %136 = vmatprep.subr.mxu0 0.0
    %137 = vmatpush1.msra.mxu0 0.0
    %138 = vmatprep.subr.mxu0 0.0
    %139 = vmatpush1.msra.mxu0 0.0
    %140 = vmatprep.subr.mxu0 0.0
    %141 = vmatpush1.msra.mxu0 0.0
    %142 = vmatprep.subr.mxu0 0.0
    %143 = vmatpush1.msra.mxu0 0.0
    %144 = vmatprep.subr.mxu0 0.0
    %145 = vmatpush1.msra.mxu0 0.0
    %146 = vmatprep.mubr.f32.mxu0 0.0
    %147 = vmatmul.mubr.f32.gmra.mrb[0].mxu0 %v71
    %v148 = vpop.f32.mrb[0].mxu0
    %v149 = vadd.f32 %v68, %v148
    %v150 = vpop.f32.mrb[0].mxu0
    %151 = vmatprep.mubr.f32.mxu0 0.0
    %152 = vmatmul.mubr.f32.gmra.mrb[0].mxu0 %v74
    %v153 = vpop.f32.mrb[0].mxu0
    %v154 = vadd.f32 %v68, %v153
    %v155 = vpop.f32.mrb[0].mxu0
    %156 = vmatprep.mubr.f32.mxu0 0.0
    %157 = vmatmul.mubr.f32.gmra.mrb[0].mxu0 %v77
    %v158 = vpop.f32.mrb[0].mxu0
    %v159 = vadd.f32 %v68, %v158
    %v160 = vpop.f32.mrb[0].mxu0
    %161 = vmatprep.mubr.f32.mxu0 0.0
    %162 = vmatmul.mubr.f32.gmra.mrb[0].mxu0 %v80
    %v163 = vpop.f32.mrb[0].mxu0
    %v164 = vadd.f32 %v68, %v163
    %v165 = vpop.f32.mrb[0].mxu0
    %166 = vdwg.mxu0
    %vm167 = vcmask 408576
    %v168 = vsel %vm167, %v149, 0.0
    %169 = vadd.xlane.f32.xlu0 %v168
    %v170 = vpop.xlane.xlu0 %169
    %v171 = vsel %vm167, %v154, 0.0
    %172 = vadd.xlane.f32.xlu0 %v171
    %v173 = vpop.xlane.xlu0 %172
    %v174 = vsel %vm167, %v159, 0.0
    %175 = vadd.xlane.f32.xlu0 %v174
    %v176 = vpop.xlane.xlu0 %175
    %v177 = vsel %vm167, %v164, 0.0
    %178 = vadd.xlane.f32.xlu0 %v177
    %v179 = vpop.xlane.xlu0 %178
    %v180 = vrcp.pop 50.0
    %v181 = vmul.f32 %v170, %v180
    %v182 = vmul.f32 %v173, %v180
    %v183 = vmul.f32 %v176, %v180
    %v184 = vmul.f32 %v179, %v180
    %v185 = vsub.f32 %v149, %v181
    %v186 = vsub.f32 %v154, %v182
    %v187 = vsub.f32 %v159, %v183
    %v188 = vsub.f32 %v164, %v184
    %v189 = vmul.f32 %v185, %v185
    %v190 = vmul.f32 %v186, %v186
    %v191 = vmul.f32 %v187, %v187
    %v192 = vmul.f32 %v188, %v188
    %v193 = vsel %vm167, %v189, 0.0
    %194 = vadd.xlane.f32.xlu0 %v193
    %v195 = vpop.xlane.xlu0 %194
    %v196 = vsel %vm167, %v190, 0.0
    %197 = vadd.xlane.f32.xlu0 %v196
    %v198 = vpop.xlane.xlu0 %197
    %v199 = vsel %vm167, %v191, 0.0
    %200 = vadd.xlane.f32.xlu0 %v199
    %v201 = vpop.xlane.xlu0 %200
    %v202 = vsel %vm167, %v192, 0.0
    %203 = vadd.xlane.f32.xlu0 %v202
    %v204 = vpop.xlane.xlu0 %203
    %v205 = vmul.f32 %v195, %v180
    %v206 = vmul.f32 %v198, %v180
    %v207 = vmul.f32 %v201, %v180
    %v208 = vmul.f32 %v204, %v180
    %v209 = vadd.f32 %v205, 1e-05
    %v210 = vadd.f32 %v206, 1e-05
    %v211 = vadd.f32 %v207, 1e-05
    %v212 = vadd.f32 %v208, 1e-05
    %v213 = vrsqrt.pop %v209
    %v214 = vrsqrt.pop %v210
    %v215 = vrsqrt.pop %v211
    %v216 = vrsqrt.pop %v212
    %v217 = vmul.f32 %v185, %v213
    %v218 = vmul.f32 %v186, %v214
    %v219 = vmul.f32 %v187, %v215
    %v220 = vmul.f32 %v188, %v216
    %v221 = vlaneseq
    %v222 = vshrl.u32 %v221, 7
    %v223 = vsub.s32 1, %v222
    %v224 = vrot.slane %v50, %v223
    %v225 = vmul.f32 %v217, %v224
    %v226 = vmul.f32 %v218, %v224
    %v227 = vmul.f32 %v219, %v224
    %v228 = vmul.f32 %v220, %v224
    %v229 = vlaneseq
    %v230 = vshrl.u32 %v229, 7
    %v231 = vsub.s32 2, %v230
    %v232 = vrot.slane %v50, %v231
    %v233 = vadd.f32 %v225, %v232
    %v234 = vadd.f32 %v226, %v232
    %v235 = vadd.f32 %v227, %v232
    %v236 = vadd.f32 %v228, %v232
    %s237 = scalar_lea.vmem [#allocation5], 168
    %v238 = vld [vmem:[%s237] sm:$0xff]
    %v239 = vld [vmem:[%s237 + $0x8] sm:$0xff]
    %v240 = vld [vmem:[%s237 + $0x10] sm:$0xff]
    %v241 = vld [vmem:[%s237 + $0x18] sm:$0xff]
    %v242 = vld [vmem:[%s237 + $0x20] sm:$0xff]
    %v243 = vld [vmem:[%s237 + $0x28] sm:$0xff]
    %v244 = vld [vmem:[%s237 + $0x30] sm:$0x3]
    %v245 = vlaneseq
    %v246 = vshrl.u32 %v245, 7
    %v247 = vsub.s32 0, %v246
    %v248 = vrot.slane %v51, %v247
    %v250 = vsel %vm167, %v233, 0
    %v253 = vsel %vm167, %v234, 0
    %v256 = vsel %vm167, %v235, 0
    %v259 = vsel %vm167, %v236, 0
    %vm261 = vcmask 1041408
    %v263 = vsel %vm261, %v244, 0
    %265 = vmatprep.subr.mxu0 0.0
    %266 = vmatpush1.msra.mxu0 %v238
    %267 = vmatprep.subr.mxu0 0.0
    %268 = vmatpush1.msra.mxu0 %v239
    %269 = vmatprep.subr.mxu0 0.0
    %270 = vmatpush1.msra.mxu0 %v240
    %271 = vmatprep.subr.mxu0 0.0
    %272 = vmatpush1.msra.mxu0 %v241
    %273 = vmatprep.subr.mxu0 0.0
    %274 = vmatpush1.msra.mxu0 %v242
    %275 = vmatprep.subr.mxu0 0.0
    %276 = vmatpush1.msra.mxu0 %v243
    %277 = vmatprep.subr.mxu0 0.0
    %278 = vmatpush1.msra.mxu0 %v263
    %279 = vmatprep.subr.mxu0 0.0
    %280 = vmatpush1.msra.mxu0 0.0
    %281 = vmatprep.subr.mxu0 0.0
    %282 = vmatpush1.msra.mxu0 0.0
    %283 = vmatprep.subr.mxu0 0.0
    %284 = vmatpush1.msra.mxu0 0.0
    %285 = vmatprep.subr.mxu0 0.0
    %286 = vmatpush1.msra.mxu0 0.0
    %287 = vmatprep.subr.mxu0 0.0
    %288 = vmatpush1.msra.mxu0 0.0
    %289 = vmatprep.subr.mxu0 0.0
    %290 = vmatpush1.msra.mxu0 0.0
    %291 = vmatprep.subr.mxu0 0.0
    %292 = vmatpush1.msra.mxu0 0.0
    %293 = vmatprep.subr.mxu0 0.0
    %294 = vmatpush1.msra.mxu0 0.0
    %295 = vmatprep.subr.mxu0 0.0
    %296 = vmatpush1.msra.mxu0 0.0
    %297 = vmatprep.subr.mxu0 0.0
    %298 = vmatpush1.msra.mxu0 0.0
    %299 = vmatprep.subr.mxu0 0.0
    %300 = vmatpush1.msra.mxu0 0.0
    %301 = vmatprep.subr.mxu0 0.0
    %302 = vmatpush1.msra.mxu0 0.0
    %303 = vmatprep.subr.mxu0 0.0
    %304 = vmatpush1.msra.mxu0 0.0
    %305 = vmatprep.subr.mxu0 0.0
    %306 = vmatpush1.msra.mxu0 0.0
    %307 = vmatprep.subr.mxu0 0.0
    %308 = vmatpush1.msra.mxu0 0.0
    %309 = vmatprep.subr.mxu0 0.0
    %310 = vmatpush1.msra.mxu0 0.0
    %311 = vmatprep.subr.mxu0 0.0
    %312 = vmatpush1.msra.mxu0 0.0
    %313 = vmatprep.subr.mxu0 0.0
    %314 = vmatpush1.msra.mxu0 0.0
    %315 = vmatprep.subr.mxu0 0.0
    %316 = vmatpush1.msra.mxu0 0.0
    %317 = vmatprep.subr.mxu0 0.0
    %318 = vmatpush1.msra.mxu0 0.0
    %319 = vmatprep.subr.mxu0 0.0
    %320 = vmatpush1.msra.mxu0 0.0
    %321 = vmatprep.subr.mxu0 0.0
    %322 = vmatpush1.msra.mxu0 0.0
    %323 = vmatprep.subr.mxu0 0.0
    %324 = vmatpush1.msra.mxu0 0.0
    %325 = vmatprep.subr.mxu0 0.0
    %326 = vmatpush1.msra.mxu0 0.0
    %327 = vmatprep.subr.mxu0 0.0
    %328 = vmatpush1.msra.mxu0 0.0
    %329 = vmatprep.mubr.f32.mxu0 0.0
    %330 = vmatmul.mubr.f32.gmra.mrb[0].mxu0 %v250
    %v331 = vpop.f32.mrb[0].mxu0
    %v332 = vadd.f32 %v248, %v331
    %v333 = vpop.f32.mrb[0].mxu0
    %334 = vmatprep.mubr.f32.mxu0 0.0
    %335 = vmatmul.mubr.f32.gmra.mrb[0].mxu0 %v253
    %v336 = vpop.f32.mrb[0].mxu0
    %v337 = vadd.f32 %v248, %v336
    %v338 = vpop.f32.mrb[0].mxu0
    %339 = vmatprep.mubr.f32.mxu0 0.0
    %340 = vmatmul.mubr.f32.gmra.mrb[0].mxu0 %v256
    %v341 = vpop.f32.mrb[0].mxu0
    %v342 = vadd.f32 %v248, %v341
    %v343 = vpop.f32.mrb[0].mxu0
    %344 = vmatprep.mubr.f32.mxu0 0.0
    %345 = vmatmul.mubr.f32.gmra.mrb[0].mxu0 %v259
    %v346 = vpop.f32.mrb[0].mxu0
    %v347 = vadd.f32 %v248, %v346
    %v348 = vpop.f32.mrb[0].mxu0
    %349 = vdwg.mxu0
    %v350 = vld [vmem:[#allocation5] sm:$0xff]
    %v351 = vld [vmem:[#allocation5 + $0x8] sm:$0xff]
    %v352 = vld [vmem:[#allocation5 + $0x10] sm:$0xff]
    %v353 = vld [vmem:[#allocation5 + $0x18] sm:$0xff]
    %v354 = vld [vmem:[#allocation5 + $0x20] sm:$0xff]
    %v355 = vld [vmem:[#allocation5 + $0x28] sm:$0xff]
    %v356 = vld [vmem:[#allocation5 + $0x30] sm:$0x3]
    %s357 = scalar_lea.vmem [#allocation5], 56
    %v358 = vld [vmem:[%s357] sm:$0xff]
    %v359 = vld [vmem:[%s357 + $0x8] sm:$0xff]
    %v360 = vld [vmem:[%s357 + $0x10] sm:$0xff]
    %v361 = vld [vmem:[%s357 + $0x18] sm:$0xff]
    %v362 = vld [vmem:[%s357 + $0x20] sm:$0xff]
    %v363 = vld [vmem:[%s357 + $0x28] sm:$0xff]
    %v364 = vld [vmem:[%s357 + $0x30] sm:$0x3]
    %s365 = scalar_lea.vmem [#allocation5], 112
    %v366 = vld [vmem:[%s365] sm:$0xff]
    %v367 = vld [vmem:[%s365 + $0x8] sm:$0xff]
    %v368 = vld [vmem:[%s365 + $0x10] sm:$0xff]
    %v369 = vld [vmem:[%s365 + $0x18] sm:$0xff]
    %v370 = vld [vmem:[%s365 + $0x20] sm:$0xff]
    %v371 = vld [vmem:[%s365 + $0x28] sm:$0xff]
    %v372 = vld [vmem:[%s365 + $0x30] sm:$0x3]
    %s373 = scalar_lea.vmem [#allocation5], 224
    %v374 = vld [vmem:[%s373] sm:$0xff]
    %v375 = vld [vmem:[%s373 + $0x8] sm:$0xff]
    %v376 = vld [vmem:[%s373 + $0x10] sm:$0xff]
    %v377 = vld [vmem:[%s373 + $0x18] sm:$0xff]
    %v378 = vld [vmem:[%s373 + $0x20] sm:$0xff]
    %v379 = vld [vmem:[%s373 + $0x28] sm:$0xff]
    %v380 = vld [vmem:[%s373 + $0x30] sm:$0x3]
    %v381 = vlaneseq
    %v382 = vshrl.u32 %v381, 7
    %v383 = vsub.s32 3, %v382
    %v384 = vrot.slane %v50, %v383
    %v385 = vlaneseq
    %v386 = vshrl.u32 %v385, 7
    %v387 = vsub.s32 4, %v386
    %v388 = vrot.slane %v50, %v387
    %v389 = vlaneseq
    %v390 = vshrl.u32 %v389, 7
    %v391 = vsub.s32 5, %v390
    %v392 = vrot.slane %v50, %v391
    %v393 = vlaneseq
    %v394 = vshrl.u32 %v393, 7
    %v395 = vsub.s32 6, %v394
    %v396 = vrot.slane %v50, %v395
    %v397 = vlaneseq
    %v398 = vshrl.u32 %v397, 7
    %v399 = vsub.s32 7, %v398
    %v400 = vrot.slane %v50, %v399
    %v401 = vlaneseq
    %v402 = vshrl.u32 %v401, 7
    %v403 = vsub.s32 1, %v402
    %v404 = vrot.slane %v51, %v403
    %v405 = vlaneseq
    %v406 = vshrl.u32 %v405, 7
    %v407 = vsub.s32 2, %v406
    %v408 = vrot.slane %v51, %v407
    %v409 = vlaneseq
    %v410 = vshrl.u32 %v409, 7
    %v411 = vsub.s32 3, %v410
    %v412 = vrot.slane %v51, %v411
    %v413 = vlaneseq
    %v414 = vshrl.u32 %v413, 7
    %v415 = vsub.s32 7, %v414
    %v416 = vrot.slane %v51, %v415
    %v417 = vlaneseq
    %v418 = vshrl.u32 %v417, 7
    %v419 = vsub.s32 0, %v418
    %v420 = vrot.slane %v52, %v419
    %v421 = vlaneseq
    %v422 = vshrl.u32 %v421, 7
    %v423 = vsub.s32 1, %v422
    %v424 = vrot.slane %v52, %v423
    %v425 = vlaneseq
    %v426 = vshrl.u32 %v425, 7
    %v427 = vsub.s32 2, %v426
    %v428 = vrot.slane %v52, %v427
    %v429 = vlaneseq
    %v430 = vshrl.u32 %v429, 7
    %v431 = vsub.s32 3, %v430
    %v432 = vrot.slane %v52, %v431
    %v433 = vlaneseq
    %v434 = vshrl.u32 %v433, 7
    %v435 = vsub.s32 4, %v434
    %v436 = vrot.slane %v52, %v435
    %s437 = sld [smem:[#allocation2]]
    %s438 = scalar_lea.vmem %s3, %s437
    %v439 = vld [vmem:[%s438] sm:$0x1]
    %s440 = sld [smem:[#allocation2 + $0x80]]
    %s441 = scalar_lea.vmem %s3, %s440
    %v442 = vld [vmem:[%s441] sm:$0x1]
    %v444 = vlaneseq
    %v445 = vshrl.u32 %v444, 7
    %v446 = vsub.s32 0, %v445
    %v447 = vrot.slane %v442, %v446
    %vm449 = vcmask 1040384
    %v450 = vsel %vm449, %v439, %v447
    %s451 = sld [smem:[#allocation2 + $0x1]]
    %s452 = scalar_lea.vmem %s3, %s451
    %v453 = vld [vmem:[%s452] sm:$0x1]
    %s454 = sld [smem:[#allocation2 + $0x81]]
    %s455 = scalar_lea.vmem %s3, %s454
    %v456 = vld [vmem:[%s455] sm:$0x1]
    %v458 = vlaneseq
    %v459 = vshrl.u32 %v458, 7
    %v460 = vsub.s32 0, %v459
    %v461 = vrot.slane %v456, %v460
    %v463 = vsel %vm449, %v453, %v461
    %s464 = sld [smem:[#allocation2 + $0x2]]
    %s465 = scalar_lea.vmem %s3, %s464
    %v466 = vld [vmem:[%s465] sm:$0x1]
    %s467 = sld [smem:[#allocation2 + $0x82]]
    %s468 = scalar_lea.vmem %s3, %s467
    %v469 = vld [vmem:[%s468] sm:$0x1]
    %v471 = vlaneseq
    %v472 = vshrl.u32 %v471, 7
    %v473 = vsub.s32 0, %v472
    %v474 = vrot.slane %v469, %v473
    %v476 = vsel %vm449, %v466, %v474
    %s477 = sld [smem:[#allocation2 + $0x3]]
    %s478 = scalar_lea.vmem %s3, %s477
    %v479 = vld [vmem:[%s478] sm:$0x1]
    %s480 = sld [smem:[#allocation2 + $0x83]]
    %s481 = scalar_lea.vmem %s3, %s480
    %v482 = vld [vmem:[%s481] sm:$0x1]
    %v484 = vlaneseq
    %v485 = vshrl.u32 %v484, 7
    %v486 = vsub.s32 0, %v485
    %v487 = vrot.slane %v482, %v486
    %v489 = vsel %vm449, %v479, %v487
    %s490 = sld [smem:[#allocation2 + $0x4]]
    %s491 = scalar_lea.vmem %s3, %s490
    %v492 = vld [vmem:[%s491] sm:$0x1]
    %s493 = sld [smem:[#allocation2 + $0x84]]
    %s494 = scalar_lea.vmem %s3, %s493
    %v495 = vld [vmem:[%s494] sm:$0x1]
    %v497 = vlaneseq
    %v498 = vshrl.u32 %v497, 7
    %v499 = vsub.s32 0, %v498
    %v500 = vrot.slane %v495, %v499
    %v502 = vsel %vm449, %v492, %v500
    %v503 = vlaneseq
    %v504 = vshrl.u32 %v503, 7
    %v505 = vsub.s32 6, %v504
    %v506 = vrot.slane %v51, %v505
    %v507 = vadd.f32 %v506, %v436
    %v509 = vsel %vm167, %v506, 0
    %v512 = vsel %vm261, %v356, 0
    %514 = vmatprep.subr.mxu0 0.0
    %515 = vmatpush1.msra.mxu0 %v350
    %516 = vmatprep.subr.mxu0 0.0
    %517 = vmatpush1.msra.mxu0 %v351
    %518 = vmatprep.subr.mxu0 0.0
    %519 = vmatpush1.msra.mxu0 %v352
    %520 = vmatprep.subr.mxu0 0.0
    %521 = vmatpush1.msra.mxu0 %v353
    %522 = vmatprep.subr.mxu0 0.0
    %523 = vmatpush1.msra.mxu0 %v354
    %524 = vmatprep.subr.mxu0 0.0
    %525 = vmatpush1.msra.mxu0 %v355
    %526 = vmatprep.subr.mxu0 0.0
    %527 = vmatpush1.msra.mxu0 %v512
    %528 = vmatprep.subr.mxu0 0.0
    %529 = vmatpush1.msra.mxu0 0.0
    %530 = vmatprep.subr.mxu0 0.0
    %531 = vmatpush1.msra.mxu0 0.0
    %532 = vmatprep.subr.mxu0 0.0
    %533 = vmatpush1.msra.mxu0 0.0
    %534 = vmatprep.subr.mxu0 0.0
    %535 = vmatpush1.msra.mxu0 0.0
    %536 = vmatprep.subr.mxu0 0.0
    %537 = vmatpush1.msra.mxu0 0.0
    %538 = vmatprep.subr.mxu0 0.0
    %539 = vmatpush1.msra.mxu0 0.0
    %540 = vmatprep.subr.mxu0 0.0
    %541 = vmatpush1.msra.mxu0 0.0
    %542 = vmatprep.subr.mxu0 0.0
    %543 = vmatpush1.msra.mxu0 0.0
    %544 = vmatprep.subr.mxu0 0.0
    %545 = vmatpush1.msra.mxu0 0.0
    %546 = vmatprep.subr.mxu0 0.0
    %547 = vmatpush1.msra.mxu0 0.0
    %548 = vmatprep.subr.mxu0 0.0
    %549 = vmatpush1.msra.mxu0 0.0
    %550 = vmatprep.subr.mxu0 0.0
    %551 = vmatpush1.msra.mxu0 0.0
    %552 = vmatprep.subr.mxu0 0.0
    %553 = vmatpush1.msra.mxu0 0.0
    %554 = vmatprep.subr.mxu0 0.0
    %555 = vmatpush1.msra.mxu0 0.0
    %556 = vmatprep.subr.mxu0 0.0
    %557 = vmatpush1.msra.mxu0 0.0
    %558 = vmatprep.subr.mxu0 0.0
    %559 = vmatpush1.msra.mxu0 0.0
    %560 = vmatprep.subr.mxu0 0.0
    %561 = vmatpush1.msra.mxu0 0.0
    %562 = vmatprep.subr.mxu0 0.0
    %563 = vmatpush1.msra.mxu0 0.0
    %564 = vmatprep.subr.mxu0 0.0
    %565 = vmatpush1.msra.mxu0 0.0
    %566 = vmatprep.subr.mxu0 0.0
    %567 = vmatpush1.msra.mxu0 0.0
    %568 = vmatprep.subr.mxu0 0.0
    %569 = vmatpush1.msra.mxu0 0.0
    %570 = vmatprep.subr.mxu0 0.0
    %571 = vmatpush1.msra.mxu0 0.0
    %572 = vmatprep.subr.mxu0 0.0
    %573 = vmatpush1.msra.mxu0 0.0
    %574 = vmatprep.subr.mxu0 0.0
    %575 = vmatpush1.msra.mxu0 0.0
    %576 = vmatprep.subr.mxu0 0.0
    %577 = vmatpush1.msra.mxu0 0.0
    %578 = vmatprep.mubr.f32.mxu0 0.0
    %579 = vmatmul.mubr.f32.gmra.mrb[0].mxu0 %v509
    %v580 = vpop.f32.mrb[0].mxu0
    %v581 = vadd.f32 %v384, %v580
    %v582 = vpop.f32.mrb[0].mxu0
    %583 = vdwg.mxu0
    %v584 = vmul.f32 %v581, %v507
    %vm585 = vcmask 402432
    %v586 = vsel %vm585, %v584, 0.0
    %587 = vadd.xlane.f32.xlu0 %v586
    %v588 = vpop.xlane.xlu0 %587
    %v589 = vsub.f32 %v588, %v588
    %v590 = vmul.f32 %v589, 1.442695
    %v591 = vpow.pop %v590
    %v592 = vmul.f32 %v591, %v507
    %v593 = vrcp.pop %v591
    %v594 = vmul.f32 %v592, %v593
    %v596 = vsel %vm167, %v594, 0
    %v599 = vsel %vm261, %v364, 0
    %601 = vmatprep.subr.mxu0 0.0
    %602 = vmatpush1.msra.mxu0 %v358
    %603 = vmatprep.subr.mxu0 0.0
    %604 = vmatpush1.msra.mxu0 %v359
    %605 = vmatprep.subr.mxu0 0.0
    %606 = vmatpush1.msra.mxu0 %v360
    %607 = vmatprep.subr.mxu0 0.0
    %608 = vmatpush1.msra.mxu0 %v361
    %609 = vmatprep.subr.mxu0 0.0
    %610 = vmatpush1.msra.mxu0 %v362
    %611 = vmatprep.subr.mxu0 0.0
    %612 = vmatpush1.msra.mxu0 %v363
    %613 = vmatprep.subr.mxu0 0.0
    %614 = vmatpush1.msra.mxu0 %v599
    %615 = vmatprep.subr.mxu0 0.0
    %616 = vmatpush1.msra.mxu0 0.0
    %617 = vmatprep.subr.mxu0 0.0
    %618 = vmatpush1.msra.mxu0 0.0
    %619 = vmatprep.subr.mxu0 0.0
    %620 = vmatpush1.msra.mxu0 0.0
    %621 = vmatprep.subr.mxu0 0.0
    %622 = vmatpush1.msra.mxu0 0.0
    %623 = vmatprep.subr.mxu0 0.0
    %624 = vmatpush1.msra.mxu0 0.0
    %625 = vmatprep.subr.mxu0 0.0
    %626 = vmatpush1.msra.mxu0 0.0
    %627 = vmatprep.subr.mxu0 0.0
    %628 = vmatpush1.msra.mxu0 0.0
    %629 = vmatprep.subr.mxu0 0.0
    %630 = vmatpush1.msra.mxu0 0.0
    %631 = vmatprep.subr.mxu0 0.0
    %632 = vmatpush1.msra.mxu0 0.0
    %633 = vmatprep.subr.mxu0 0.0
    %634 = vmatpush1.msra.mxu0 0.0
    %635 = vmatprep.subr.mxu0 0.0
    %636 = vmatpush1.msra.mxu0 0.0
    %637 = vmatprep.subr.mxu0 0.0
    %638 = vmatpush1.msra.mxu0 0.0
    %639 = vmatprep.subr.mxu0 0.0
    %640 = vmatpush1.msra.mxu0 0.0
    %641 = vmatprep.subr.mxu0 0.0
    %642 = vmatpush1.msra.mxu0 0.0
    %643 = vmatprep.subr.mxu0 0.0
    %644 = vmatpush1.msra.mxu0 0.0
    %645 = vmatprep.subr.mxu0 0.0
    %646 = vmatpush1.msra.mxu0 0.0
    %647 = vmatprep.subr.mxu0 0.0
    %648 = vmatpush1.msra.mxu0 0.0
    %649 = vmatprep.subr.mxu0 0.0
    %650 = vmatpush1.msra.mxu0 0.0
    %651 = vmatprep.subr.mxu0 0.0
    %652 = vmatpush1.msra.mxu0 0.0
    %653 = vmatprep.subr.mxu0 0.0
    %654 = vmatpush1.msra.mxu0 0.0
    %655 = vmatprep.subr.mxu0 0.0
    %656 = vmatpush1.msra.mxu0 0.0
    %657 = vmatprep.subr.mxu0 0.0
    %658 = vmatpush1.msra.mxu0 0.0
    %659 = vmatprep.subr.mxu0 0.0
    %660 = vmatpush1.msra.mxu0 0.0
    %661 = vmatprep.subr.mxu0 0.0
    %662 = vmatpush1.msra.mxu0 0.0
    %663 = vmatprep.subr.mxu0 0.0
    %664 = vmatpush1.msra.mxu0 0.0
    %665 = vmatprep.mubr.f32.mxu0 0.0
    %666 = vmatmul.mubr.f32.gmra.mrb[0].mxu0 %v596
    %v667 = vpop.f32.mrb[0].mxu0
    %v668 = vadd.f32 %v388, %v667
    %v669 = vpop.f32.mrb[0].mxu0
    %670 = vdwg.mxu0
    %v671 = vsel %vm585, %v668, 0.0
    %672 = vadd.xlane.f32.xlu0 %v671
    %v673 = vpop.xlane.xlu0 %672
    %v674 = vmul.f32 %v673, %v180
    %v675 = vsub.f32 %v668, %v674
    %v676 = vmul.f32 %v675, %v675
    %v677 = vsel %vm585, %v676, 0.0
    %678 = vadd.xlane.f32.xlu0 %v677
    %v679 = vpop.xlane.xlu0 %678
    %v680 = vmul.f32 %v679, %v180
    %v681 = vadd.f32 %v680, 1e-05
    %v682 = vrsqrt.pop %v681
    %v683 = vmul.f32 %v675, %v682
    %v684 = vmul.f32 %v683, %v392
    %v685 = vadd.f32 %v684, %v396
    %v687 = vsel %vm167, %v685, 0
    %v690 = vsel %vm261, %v372, 0
    %692 = vmatprep.subr.mxu0 0.0
    %693 = vmatpush1.msra.mxu0 %v366
    %694 = vmatprep.subr.mxu0 0.0
    %695 = vmatpush1.msra.mxu0 %v367
    %696 = vmatprep.subr.mxu0 0.0
    %697 = vmatpush1.msra.mxu0 %v368
    %698 = vmatprep.subr.mxu0 0.0
    %699 = vmatpush1.msra.mxu0 %v369
    %700 = vmatprep.subr.mxu0 0.0
    %701 = vmatpush1.msra.mxu0 %v370
    %702 = vmatprep.subr.mxu0 0.0
    %703 = vmatpush1.msra.mxu0 %v371
    %704 = vmatprep.subr.mxu0 0.0
    %705 = vmatpush1.msra.mxu0 %v690
    %706 = vmatprep.subr.mxu0 0.0
    %707 = vmatpush1.msra.mxu0 0.0
    %708 = vmatprep.subr.mxu0 0.0
    %709 = vmatpush1.msra.mxu0 0.0
    %710 = vmatprep.subr.mxu0 0.0
    %711 = vmatpush1.msra.mxu0 0.0
    %712 = vmatprep.subr.mxu0 0.0
    %713 = vmatpush1.msra.mxu0 0.0
    %714 = vmatprep.subr.mxu0 0.0
    %715 = vmatpush1.msra.mxu0 0.0
    %716 = vmatprep.subr.mxu0 0.0
    %717 = vmatpush1.msra.mxu0 0.0
    %718 = vmatprep.subr.mxu0 0.0
    %719 = vmatpush1.msra.mxu0 0.0
    %720 = vmatprep.subr.mxu0 0.0
    %721 = vmatpush1.msra.mxu0 0.0
    %722 = vmatprep.subr.mxu0 0.0
    %723 = vmatpush1.msra.mxu0 0.0
    %724 = vmatprep.subr.mxu0 0.0
    %725 = vmatpush1.msra.mxu0 0.0
    %726 = vmatprep.subr.mxu0 0.0
    %727 = vmatpush1.msra.mxu0 0.0
    %728 = vmatprep.subr.mxu0 0.0
    %729 = vmatpush1.msra.mxu0 0.0
    %730 = vmatprep.subr.mxu0 0.0
    %731 = vmatpush1.msra.mxu0 0.0
    %732 = vmatprep.subr.mxu0 0.0
    %733 = vmatpush1.msra.mxu0 0.0
    %734 = vmatprep.subr.mxu0 0.0
    %735 = vmatpush1.msra.mxu0 0.0
    %736 = vmatprep.subr.mxu0 0.0
    %737 = vmatpush1.msra.mxu0 0.0
    %738 = vmatprep.subr.mxu0 0.0
    %739 = vmatpush1.msra.mxu0 0.0
    %740 = vmatprep.subr.mxu0 0.0
    %741 = vmatpush1.msra.mxu0 0.0
    %742 = vmatprep.subr.mxu0 0.0
    %743 = vmatpush1.msra.mxu0 0.0
    %744 = vmatprep.subr.mxu0 0.0
    %745 = vmatpush1.msra.mxu0 0.0
    %746 = vmatprep.subr.mxu0 0.0
    %747 = vmatpush1.msra.mxu0 0.0
    %748 = vmatprep.subr.mxu0 0.0
    %749 = vmatpush1.msra.mxu0 0.0
    %750 = vmatprep.subr.mxu0 0.0
    %751 = vmatpush1.msra.mxu0 0.0
    %752 = vmatprep.subr.mxu0 0.0
    %753 = vmatpush1.msra.mxu0 0.0
    %754 = vmatprep.subr.mxu0 0.0
    %755 = vmatpush1.msra.mxu0 0.0
    %756 = vmatprep.mubr.f32.mxu0 0.0
    %757 = vmatmul.mubr.f32.gmra.mrb[0].mxu0 %v687
    %v758 = vpop.f32.mrb[0].mxu0
    %v759 = vadd.f32 %v400, %v758
    %v760 = vpop.f32.mrb[0].mxu0
    %761 = vdwg.mxu0
    %v764 = vunpack.c.l.s4 1966171168
    %v765 = vunpack.c.0.s8 %v764
    %v766 = vlaneseq
    %v767 = vshrl.u32 %v766, 7
    %v768 = vsub.s32 %v765, %v767
    %v769 = vrot.slane %v759, %v768
    %v770 = vcombine.high %v769, %v769
    %v772 = vunpack.c.l.s4 1966171168
    %v773 = vunpack.c.0.s8 %v772
    %v774 = vlaneseq
    %v775 = vshrl.u32 %v774, 7
    %v776 = vsub.s32 %v773, %v775
    %v777 = vrot.slane %v769, %v776
    %v779 = vunpack.c.l.s4 1966171168
    %v780 = vunpack.c.0.s8 %v779
    %v781 = vlaneseq
    %v782 = vshrl.u32 %v781, 7
    %v783 = vsub.s32 %v780, %v782
    %v784 = vrot.slane %v770, %v783
    %v785 = vlaneseq
    %v786 = vshrl.u32 %v785, 7
    %v787 = vsub.s32 0, %v786
    %v788 = vrot.slane %v777, %v787
    %v789 = vlaneseq
    %v790 = vshrl.u32 %v789, 7
    %v791 = vsub.s32 0, %v790
    %v792 = vrot.slane %v784, %v791
    %v795 = vmul.f32 %v788, %v233
    %v796 = vmul.f32 %v788, %v234
    %v797 = vmul.f32 %v792, %v235
    %v798 = vmul.f32 %v792, %v236
    %v799 = vsel %vm167, %v795, 0.0
    %800 = vadd.xlane.f32.xlu0 %v799
    %v801 = vpop.xlane.xlu0 %800
    %v802 = vsel %vm167, %v796, 0.0
    %803 = vadd.xlane.f32.xlu0 %v802
    %v804 = vpop.xlane.xlu0 %803
    %v805 = vsel %vm167, %v797, 0.0
    %806 = vadd.xlane.f32.xlu0 %v805
    %v807 = vpop.xlane.xlu0 %806
    %v808 = vsel %vm167, %v798, 0.0
    %809 = vadd.xlane.f32.xlu0 %v808
    %v810 = vpop.xlane.xlu0 %809
    %v815 = vlaneseq
    %v816 = vand.u32 %v815, 127
    %v817 = vlaneseq
    %v818 = vshrl.u32 %v817, 7
    %v819 = vsub.s32 %v816, %v818
    %v820 = vrot.slane %v801, %v819
    %v821 = vadd.s32 %v816, 4294967288
    %v822 = vlaneseq
    %v823 = vshrl.u32 %v822, 7
    %v824 = vsub.s32 %v821, %v823
    %v825 = vrot.slane %v804, %v824
    %vm826 = vcmask 130112
    %v827 = vsel %vm826, %v825, %v820
    %v828 = vlaneseq
    %v829 = vshrl.u32 %v828, 7
    %v830 = vsub.s32 %v816, %v829
    %v831 = vrot.slane %v807, %v830
    %v832 = vlaneseq
    %v833 = vshrl.u32 %v832, 7
    %v834 = vsub.s32 %v821, %v833
    %v835 = vrot.slane %v810, %v834
    %v836 = vsel %vm826, %v835, %v831
    %vm837 = vcmask 1041409
    %v838 = vsel %vm837, %v836, %v827
    %vm840 = vcmask 123904
    %v841 = vsel %vm840, %v838, -inf
    %842 = vmax.xlane.f32.xlu0 %v841
    %v843 = vpop.xlane.xlu0 %842
    %v845 = vlaneseq
    %v846 = vshrl.u32 %v845, 7
    %v847 = vsub.s32 0, %v846
    %v848 = vrot.slane %v843, %v847
    %v849 = vlaneseq
    %v850 = vshrl.u32 %v849, 7
    %v851 = vsub.s32 1, %v850
    %v852 = vrot.slane %v843, %v851
    %v855 = vsub.f32 %v801, %v848
    %v856 = vsub.f32 %v804, %v848
    %v857 = vsub.f32 %v807, %v852
    %v858 = vsub.f32 %v810, %v852
    %v859 = vmul.f32 %v855, 1.442695
    %v860 = vpow.pop %v859
    %v861 = vmul.f32 %v856, 1.442695
    %v862 = vpow.pop %v861
    %v863 = vmul.f32 %v857, 1.442695
    %v864 = vpow.pop %v863
    %v865 = vmul.f32 %v858, 1.442695
    %v866 = vpow.pop %v865
    %871 = vset.pattern.permute.xlu0 0
    %872 = vperm.xlu0 %871, %v860
    %v873 = vpop.permute.xlu0 %872
    %874 = vset.pattern.permute.xlu0 0
    %875 = vperm.xlu0 %874, %v862
    %v876 = vpop.permute.xlu0 %875
    %877 = vset.pattern.permute.xlu0 0
    %878 = vperm.xlu0 %877, %v864
    %v879 = vpop.permute.xlu0 %878
    %880 = vset.pattern.permute.xlu0 0
    %881 = vperm.xlu0 %880, %v866
    %v882 = vpop.permute.xlu0 %881
    %v883 = vlaneseq
    %v884 = vshrl.u32 %v883, 7
    %v885 = vsub.s32 %v816, %v884
    %v886 = vrot.slane %v873, %v885
    %v887 = vlaneseq
    %v888 = vshrl.u32 %v887, 7
    %v889 = vsub.s32 %v821, %v888
    %v890 = vrot.slane %v876, %v889
    %v891 = vsel %vm826, %v890, %v886
    %v892 = vlaneseq
    %v893 = vshrl.u32 %v892, 7
    %v894 = vsub.s32 %v816, %v893
    %v895 = vrot.slane %v879, %v894
    %v896 = vlaneseq
    %v897 = vshrl.u32 %v896, 7
    %v898 = vsub.s32 %v821, %v897
    %v899 = vrot.slane %v882, %v898
    %v900 = vsel %vm826, %v899, %v895
    %v901 = vsel %vm837, %v900, %v891
    %v903 = vsel %vm840, %v901, 0.0
    %904 = vadd.xlane.f32.xlu0 %v903
    %v905 = vpop.xlane.xlu0 %904
    %v907 = vlaneseq
    %v908 = vshrl.u32 %v907, 7
    %v909 = vsub.s32 0, %v908
    %v910 = vrot.slane %v905, %v909
    %v911 = vlaneseq
    %v912 = vshrl.u32 %v911, 7
    %v913 = vsub.s32 1, %v912
    %v914 = vrot.slane %v905, %v913
    %v917 = vrcp.pop %v910
    %v918 = vmul.f32 %v860, %v917
    %v919 = vmul.f32 %v862, %v917
    %v920 = vrcp.pop %v914
    %v921 = vmul.f32 %v864, %v920
    %v922 = vmul.f32 %v866, %v920
    %924 = vset.pattern.permute.xlu0 0
    %925 = vperm.xlu0 %924, %v918
    %v926 = vpop.permute.xlu0 %925
    %929 = vset.pattern.permute.xlu0 0
    %930 = vperm.xlu0 %929, %v919
    %v931 = vpop.permute.xlu0 %930
    %934 = vset.pattern.permute.xlu0 0
    %935 = vperm.xlu0 %934, %v921
    %v936 = vpop.permute.xlu0 %935
    %939 = vset.pattern.permute.xlu0 0
    %940 = vperm.xlu0 %939, %v922
    %v941 = vpop.permute.xlu0 %940
    %v943 = vmul.f32 %v926, %v332
    %v944 = vmul.f32 %v931, %v337
    %v945 = vmul.f32 %v936, %v342
    %v946 = vmul.f32 %v941, %v347
    %v947 = vsel %vm167, %v943, 0.0
    %v948 = vsel %vm167, %v944, 0.0
    %v949 = vadd.f32 %v947, %v948
    %v950 = vrot.slane %v949, 4
    %v951 = vadd.f32 %v949, %v950
    %v952 = vrot.slane %v951, 2
    %v953 = vadd.f32 %v951, %v952
    %v954 = vrot.slane %v953, 1
    %v955 = vadd.f32 %v953, %v954
    %v956 = vsel %vm167, %v945, 0.0
    %v957 = vsel %vm167, %v946, 0.0
    %v958 = vadd.f32 %v956, %v957
    %v959 = vrot.slane %v958, 4
    %v960 = vadd.f32 %v958, %v959
    %v961 = vrot.slane %v960, 2
    %v962 = vadd.f32 %v960, %v961
    %v963 = vrot.slane %v962, 1
    %v964 = vadd.f32 %v962, %v963
    %vm965 = vcmp.gt.f32.partialorder %v955, 0.0
    %vm966 = vcmp.gt.f32.partialorder %v964, 0.0
    %v967 = vmin.f32 %v955, 0.0
    %v968 = vmin.f32 %v964, 0.0
    %v969 = vmul.f32 %v967, 1.442695
    %v970 = vpow.pop %v969
    %v971 = vmul.f32 %v968, 1.442695
    %v972 = vpow.pop %v971
    %v973 = vsub.f32 %v970, 1.0
    %v974 = vsub.f32 %v972, 1.0
    %v975 = vsel %vm965, %v955, %v973
    %v976 = vsel %vm966, %v964, %v974
    %v979 = vsel %vm837, %v976, %v975
    %v980 = vsel %vm167, %v979, 0
    %v983 = vsel %vm261, %v380, 0
    %985 = vmatprep.subr.mxu0 0.0
    %986 = vmatpush1.msra.mxu0 %v374
    %987 = vmatprep.subr.mxu0 0.0
    %988 = vmatpush1.msra.mxu0 %v375
    %989 = vmatprep.subr.mxu0 0.0
    %990 = vmatpush1.msra.mxu0 %v376
    %991 = vmatprep.subr.mxu0 0.0
    %992 = vmatpush1.msra.mxu0 %v377
    %993 = vmatprep.subr.mxu0 0.0
    %994 = vmatpush1.msra.mxu0 %v378
    %995 = vmatprep.subr.mxu0 0.0
    %996 = vmatpush1.msra.mxu0 %v379
    %997 = vmatprep.subr.mxu0 0.0
    %998 = vmatpush1.msra.mxu0 %v983
    %999 = vmatprep.subr.mxu0 0.0
    %1000 = vmatpush1.msra.mxu0 0.0
    %1001 = vmatprep.subr.mxu0 0.0
    %1002 = vmatpush1.msra.mxu0 0.0
    %1003 = vmatprep.subr.mxu0 0.0
    %1004 = vmatpush1.msra.mxu0 0.0
    %1005 = vmatprep.subr.mxu0 0.0
    %1006 = vmatpush1.msra.mxu0 0.0
    %1007 = vmatprep.subr.mxu0 0.0
    %1008 = vmatpush1.msra.mxu0 0.0
    %1009 = vmatprep.subr.mxu0 0.0
    %1010 = vmatpush1.msra.mxu0 0.0
    %1011 = vmatprep.subr.mxu0 0.0
    %1012 = vmatpush1.msra.mxu0 0.0
    %1013 = vmatprep.subr.mxu0 0.0
    %1014 = vmatpush1.msra.mxu0 0.0
    %1015 = vmatprep.subr.mxu0 0.0
    %1016 = vmatpush1.msra.mxu0 0.0
    %1017 = vmatprep.subr.mxu0 0.0
    %1018 = vmatpush1.msra.mxu0 0.0
    %1019 = vmatprep.subr.mxu0 0.0
    %1020 = vmatpush1.msra.mxu0 0.0
    %1021 = vmatprep.subr.mxu0 0.0
    %1022 = vmatpush1.msra.mxu0 0.0
    %1023 = vmatprep.subr.mxu0 0.0
    %1024 = vmatpush1.msra.mxu0 0.0
    %1025 = vmatprep.subr.mxu0 0.0
    %1026 = vmatpush1.msra.mxu0 0.0
    %1027 = vmatprep.subr.mxu0 0.0
    %1028 = vmatpush1.msra.mxu0 0.0
    %1029 = vmatprep.subr.mxu0 0.0
    %1030 = vmatpush1.msra.mxu0 0.0
    %1031 = vmatprep.subr.mxu0 0.0
    %1032 = vmatpush1.msra.mxu0 0.0
    %1033 = vmatprep.subr.mxu0 0.0
    %1034 = vmatpush1.msra.mxu0 0.0
    %1035 = vmatprep.subr.mxu0 0.0
    %1036 = vmatpush1.msra.mxu0 0.0
    %1037 = vmatprep.subr.mxu0 0.0
    %1038 = vmatpush1.msra.mxu0 0.0
    %1039 = vmatprep.subr.mxu0 0.0
    %1040 = vmatpush1.msra.mxu0 0.0
    %1041 = vmatprep.subr.mxu0 0.0
    %1042 = vmatpush1.msra.mxu0 0.0
    %1043 = vmatprep.subr.mxu0 0.0
    %1044 = vmatpush1.msra.mxu0 0.0
    %1045 = vmatprep.subr.mxu0 0.0
    %1046 = vmatpush1.msra.mxu0 0.0
    %1047 = vmatprep.subr.mxu0 0.0
    %1048 = vmatpush1.msra.mxu0 0.0
    %1049 = vmatprep.mubr.f32.mxu0 0.0
    %1050 = vmatmul.mubr.f32.gmra.mrb[0].mxu0 %v980
    %v1051 = vpop.f32.mrb[0].mxu0
    %v1052 = vadd.f32 %v404, %v1051
    %v1053 = vpop.f32.mrb[0].mxu0
    %1054 = vdwg.mxu0
    %v1055 = vadd.f32 %v1052, %v506
    %v1056 = vsel %vm585, %v1055, 0.0
    %1057 = vadd.xlane.f32.xlu0 %v1056
    %v1058 = vpop.xlane.xlu0 %1057
    %v1059 = vmul.f32 %v1058, %v180
    %v1060 = vsub.f32 %v1055, %v1059
    %v1061 = vmul.f32 %v1060, %v1060
    %v1062 = vsel %vm585, %v1061, 0.0
    %1063 = vadd.xlane.f32.xlu0 %v1062
    %v1064 = vpop.xlane.xlu0 %1063
    %v1065 = vmul.f32 %v1064, %v180
    %v1066 = vadd.f32 %v1065, 1e-05
    %v1067 = vrsqrt.pop %v1066
    %v1068 = vmul.f32 %v1060, %v1067
    %v1069 = vmul.f32 %v1068, %v408
    %v1070 = vadd.f32 %v1069, %v412
    %v1071 = vadd.f32 %v1070, %v450
    %v1072 = vadd.f32 %v506, %v432
    %v1073 = vadd.f32 %v1071, %v436
    %v1075 = vsel %vm167, %v1071, 0
    %1077 = vmatprep.subr.mxu0 0.0
    %1078 = vmatpush1.msra.mxu0 %v350
    %1079 = vmatprep.subr.mxu0 0.0
    %1080 = vmatpush1.msra.mxu0 %v351
    %1081 = vmatprep.subr.mxu0 0.0
    %1082 = vmatpush1.msra.mxu0 %v352
    %1083 = vmatprep.subr.mxu0 0.0
    %1084 = vmatpush1.msra.mxu0 %v353
    %1085 = vmatprep.subr.mxu0 0.0
    %1086 = vmatpush1.msra.mxu0 %v354
    %1087 = vmatprep.subr.mxu0 0.0
    %1088 = vmatpush1.msra.mxu0 %v355
    %1089 = vmatprep.subr.mxu0 0.0
    %1090 = vmatpush1.msra.mxu0 %v512
    %1091 = vmatprep.subr.mxu0 0.0
    %1092 = vmatpush1.msra.mxu0 0.0
    %1093 = vmatprep.subr.mxu0 0.0
    %1094 = vmatpush1.msra.mxu0 0.0
    %1095 = vmatprep.subr.mxu0 0.0
    %1096 = vmatpush1.msra.mxu0 0.0
    %1097 = vmatprep.subr.mxu0 0.0
    %1098 = vmatpush1.msra.mxu0 0.0
    %1099 = vmatprep.subr.mxu0 0.0
    %1100 = vmatpush1.msra.mxu0 0.0
    %1101 = vmatprep.subr.mxu0 0.0
    %1102 = vmatpush1.msra.mxu0 0.0
    %1103 = vmatprep.subr.mxu0 0.0
    %1104 = vmatpush1.msra.mxu0 0.0
    %1105 = vmatprep.subr.mxu0 0.0
    %1106 = vmatpush1.msra.mxu0 0.0
    %1107 = vmatprep.subr.mxu0 0.0
    %1108 = vmatpush1.msra.mxu0 0.0
    %1109 = vmatprep.subr.mxu0 0.0
    %1110 = vmatpush1.msra.mxu0 0.0
    %1111 = vmatprep.subr.mxu0 0.0
    %1112 = vmatpush1.msra.mxu0 0.0
    %1113 = vmatprep.subr.mxu0 0.0
    %1114 = vmatpush1.msra.mxu0 0.0
    %1115 = vmatprep.subr.mxu0 0.0
    %1116 = vmatpush1.msra.mxu0 0.0
    %1117 = vmatprep.subr.mxu0 0.0
    %1118 = vmatpush1.msra.mxu0 0.0
    %1119 = vmatprep.subr.mxu0 0.0
    %1120 = vmatpush1.msra.mxu0 0.0
    %1121 = vmatprep.subr.mxu0 0.0
    %1122 = vmatpush1.msra.mxu0 0.0
    %1123 = vmatprep.subr.mxu0 0.0
    %1124 = vmatpush1.msra.mxu0 0.0
    %1125 = vmatprep.subr.mxu0 0.0
    %1126 = vmatpush1.msra.mxu0 0.0
    %1127 = vmatprep.subr.mxu0 0.0
    %1128 = vmatpush1.msra.mxu0 0.0
    %1129 = vmatprep.subr.mxu0 0.0
    %1130 = vmatpush1.msra.mxu0 0.0
    %1131 = vmatprep.subr.mxu0 0.0
    %1132 = vmatpush1.msra.mxu0 0.0
    %1133 = vmatprep.subr.mxu0 0.0
    %1134 = vmatpush1.msra.mxu0 0.0
    %1135 = vmatprep.subr.mxu0 0.0
    %1136 = vmatpush1.msra.mxu0 0.0
    %1137 = vmatprep.subr.mxu0 0.0
    %1138 = vmatpush1.msra.mxu0 0.0
    %1139 = vmatprep.subr.mxu0 0.0
    %1140 = vmatpush1.msra.mxu0 0.0
    %1141 = vmatprep.mubr.f32.mxu0 0.0
    %1142 = vmatmul.mubr.f32.gmra.mrb[0].mxu0 %v1075
    %v1143 = vpop.f32.mrb[0].mxu0
    %v1144 = vadd.f32 %v384, %v1143
    %v1145 = vpop.f32.mrb[0].mxu0
    %1146 = vdwg.mxu0
    %v1147 = vmul.f32 %v1144, %v1072
    %v1148 = vsel %vm585, %v1147, 0.0
    %1149 = vadd.xlane.f32.xlu0 %v1148
    %v1150 = vpop.xlane.xlu0 %1149
    %v1151 = vmul.f32 %v1144, %v1073
    %v1152 = vsel %vm585, %v1151, 0.0
    %1153 = vadd.xlane.f32.xlu0 %v1152
    %v1154 = vpop.xlane.xlu0 %1153
    %v1155 = vmax.f32 %v1150, %v1154
    %v1156 = vsub.f32 %v1150, %v1155
    %v1157 = vmul.f32 %v1156, 1.442695
    %v1158 = vpow.pop %v1157
    %v1159 = vsub.f32 %v1154, %v1155
    %v1160 = vmul.f32 %v1159, 1.442695
    %v1161 = vpow.pop %v1160
    %v1162 = vmul.f32 %v1158, %v1072
    %v1163 = vadd.f32 %v1158, %v1161
    %v1164 = vmul.f32 %v1161, %v1073
    %v1165 = vadd.f32 %v1162, %v1164
    %v1166 = vrcp.pop %v1163
    %v1167 = vmul.f32 %v1165, %v1166
    %v1169 = vsel %vm167, %v1167, 0
    %1171 = vmatprep.subr.mxu0 0.0
    %1172 = vmatpush1.msra.mxu0 %v358
    %1173 = vmatprep.subr.mxu0 0.0
    %1174 = vmatpush1.msra.mxu0 %v359
    %1175 = vmatprep.subr.mxu0 0.0
    %1176 = vmatpush1.msra.mxu0 %v360
    %1177 = vmatprep.subr.mxu0 0.0
    %1178 = vmatpush1.msra.mxu0 %v361
    %1179 = vmatprep.subr.mxu0 0.0
    %1180 = vmatpush1.msra.mxu0 %v362
    %1181 = vmatprep.subr.mxu0 0.0
    %1182 = vmatpush1.msra.mxu0 %v363
    %1183 = vmatprep.subr.mxu0 0.0
    %1184 = vmatpush1.msra.mxu0 %v599
    %1185 = vmatprep.subr.mxu0 0.0
    %1186 = vmatpush1.msra.mxu0 0.0
    %1187 = vmatprep.subr.mxu0 0.0
    %1188 = vmatpush1.msra.mxu0 0.0
    %1189 = vmatprep.subr.mxu0 0.0
    %1190 = vmatpush1.msra.mxu0 0.0
    %1191 = vmatprep.subr.mxu0 0.0
    %1192 = vmatpush1.msra.mxu0 0.0
    %1193 = vmatprep.subr.mxu0 0.0
    %1194 = vmatpush1.msra.mxu0 0.0
    %1195 = vmatprep.subr.mxu0 0.0
    %1196 = vmatpush1.msra.mxu0 0.0
    %1197 = vmatprep.subr.mxu0 0.0
    %1198 = vmatpush1.msra.mxu0 0.0
    %1199 = vmatprep.subr.mxu0 0.0
    %1200 = vmatpush1.msra.mxu0 0.0
    %1201 = vmatprep.subr.mxu0 0.0
    %1202 = vmatpush1.msra.mxu0 0.0
    %1203 = vmatprep.subr.mxu0 0.0
    %1204 = vmatpush1.msra.mxu0 0.0
    %1205 = vmatprep.subr.mxu0 0.0
    %1206 = vmatpush1.msra.mxu0 0.0
    %1207 = vmatprep.subr.mxu0 0.0
    %1208 = vmatpush1.msra.mxu0 0.0
    %1209 = vmatprep.subr.mxu0 0.0
    %1210 = vmatpush1.msra.mxu0 0.0
    %1211 = vmatprep.subr.mxu0 0.0
    %1212 = vmatpush1.msra.mxu0 0.0
    %1213 = vmatprep.subr.mxu0 0.0
    %1214 = vmatpush1.msra.mxu0 0.0
    %1215 = vmatprep.subr.mxu0 0.0
    %1216 = vmatpush1.msra.mxu0 0.0
    %1217 = vmatprep.subr.mxu0 0.0
    %1218 = vmatpush1.msra.mxu0 0.0
    %1219 = vmatprep.subr.mxu0 0.0
    %1220 = vmatpush1.msra.mxu0 0.0
    %1221 = vmatprep.subr.mxu0 0.0
    %1222 = vmatpush1.msra.mxu0 0.0
    %1223 = vmatprep.subr.mxu0 0.0
    %1224 = vmatpush1.msra.mxu0 0.0
    %1225 = vmatprep.subr.mxu0 0.0
    %1226 = vmatpush1.msra.mxu0 0.0
    %1227 = vmatprep.subr.mxu0 0.0
    %1228 = vmatpush1.msra.mxu0 0.0
    %1229 = vmatprep.subr.mxu0 0.0
    %1230 = vmatpush1.msra.mxu0 0.0
    %1231 = vmatprep.subr.mxu0 0.0
    %1232 = vmatpush1.msra.mxu0 0.0
    %1233 = vmatprep.subr.mxu0 0.0
    %1234 = vmatpush1.msra.mxu0 0.0
    %1235 = vmatprep.mubr.f32.mxu0 0.0
    %1236 = vmatmul.mubr.f32.gmra.mrb[0].mxu0 %v1169
    %v1237 = vpop.f32.mrb[0].mxu0
    %v1238 = vadd.f32 %v388, %v1237
    %v1239 = vpop.f32.mrb[0].mxu0
    %1240 = vdwg.mxu0
    %v1241 = vsel %vm585, %v1238, 0.0
    %1242 = vadd.xlane.f32.xlu0 %v1241
    %v1243 = vpop.xlane.xlu0 %1242
    %v1244 = vmul.f32 %v1243, %v180
    %v1245 = vsub.f32 %v1238, %v1244
    %v1246 = vmul.f32 %v1245, %v1245
    %v1247 = vsel %vm585, %v1246, 0.0
    %1248 = vadd.xlane.f32.xlu0 %v1247
    %v1249 = vpop.xlane.xlu0 %1248
    %v1250 = vmul.f32 %v1249, %v180
    %v1251 = vadd.f32 %v1250, 1e-05
    %v1252 = vrsqrt.pop %v1251
    %v1253 = vmul.f32 %v1245, %v1252
    %v1254 = vmul.f32 %v1253, %v392
    %v1255 = vadd.f32 %v1254, %v396
    %v1257 = vsel %vm167, %v1255, 0
    %1259 = vmatprep.subr.mxu0 0.0
    %1260 = vmatpush1.msra.mxu0 %v366
    %1261 = vmatprep.subr.mxu0 0.0
    %1262 = vmatpush1.msra.mxu0 %v367
    %1263 = vmatprep.subr.mxu0 0.0
    %1264 = vmatpush1.msra.mxu0 %v368
    %1265 = vmatprep.subr.mxu0 0.0
    %1266 = vmatpush1.msra.mxu0 %v369
    %1267 = vmatprep.subr.mxu0 0.0
    %1268 = vmatpush1.msra.mxu0 %v370
    %1269 = vmatprep.subr.mxu0 0.0
    %1270 = vmatpush1.msra.mxu0 %v371
    %1271 = vmatprep.subr.mxu0 0.0
    %1272 = vmatpush1.msra.mxu0 %v690
    %1273 = vmatprep.subr.mxu0 0.0
    %1274 = vmatpush1.msra.mxu0 0.0
    %1275 = vmatprep.subr.mxu0 0.0
    %1276 = vmatpush1.msra.mxu0 0.0
    %1277 = vmatprep.subr.mxu0 0.0
    %1278 = vmatpush1.msra.mxu0 0.0
    %1279 = vmatprep.subr.mxu0 0.0
    %1280 = vmatpush1.msra.mxu0 0.0
    %1281 = vmatprep.subr.mxu0 0.0
    %1282 = vmatpush1.msra.mxu0 0.0
    %1283 = vmatprep.subr.mxu0 0.0
    %1284 = vmatpush1.msra.mxu0 0.0
    %1285 = vmatprep.subr.mxu0 0.0
    %1286 = vmatpush1.msra.mxu0 0.0
    %1287 = vmatprep.subr.mxu0 0.0
    %1288 = vmatpush1.msra.mxu0 0.0
    %1289 = vmatprep.subr.mxu0 0.0
    %1290 = vmatpush1.msra.mxu0 0.0
    %1291 = vmatprep.subr.mxu0 0.0
    %1292 = vmatpush1.msra.mxu0 0.0
    %1293 = vmatprep.subr.mxu0 0.0
    %1294 = vmatpush1.msra.mxu0 0.0
    %1295 = vmatprep.subr.mxu0 0.0
    %1296 = vmatpush1.msra.mxu0 0.0
    %1297 = vmatprep.subr.mxu0 0.0
    %1298 = vmatpush1.msra.mxu0 0.0
    %1299 = vmatprep.subr.mxu0 0.0
    %1300 = vmatpush1.msra.mxu0 0.0
    %1301 = vmatprep.subr.mxu0 0.0
    %1302 = vmatpush1.msra.mxu0 0.0
    %1303 = vmatprep.subr.mxu0 0.0
    %1304 = vmatpush1.msra.mxu0 0.0
    %1305 = vmatprep.subr.mxu0 0.0
    %1306 = vmatpush1.msra.mxu0 0.0
    %1307 = vmatprep.subr.mxu0 0.0
    %1308 = vmatpush1.msra.mxu0 0.0
    %1309 = vmatprep.subr.mxu0 0.0
    %1310 = vmatpush1.msra.mxu0 0.0
    %1311 = vmatprep.subr.mxu0 0.0
    %1312 = vmatpush1.msra.mxu0 0.0
    %1313 = vmatprep.subr.mxu0 0.0
    %1314 = vmatpush1.msra.mxu0 0.0
    %1315 = vmatprep.subr.mxu0 0.0
    %1316 = vmatpush1.msra.mxu0 0.0
    %1317 = vmatprep.subr.mxu0 0.0
    %1318 = vmatpush1.msra.mxu0 0.0
    %1319 = vmatprep.subr.mxu0 0.0
    %1320 = vmatpush1.msra.mxu0 0.0
    %1321 = vmatprep.subr.mxu0 0.0
    %1322 = vmatpush1.msra.mxu0 0.0
    %1323 = vmatprep.mubr.f32.mxu0 0.0
    %1324 = vmatmul.mubr.f32.gmra.mrb[0].mxu0 %v1257
    %v1325 = vpop.f32.mrb[0].mxu0
    %v1326 = vadd.f32 %v400, %v1325
    %v1327 = vpop.f32.mrb[0].mxu0
    %1328 = vdwg.mxu0
    %v1331 = vunpack.c.l.s4 1966171168
    %v1332 = vunpack.c.0.s8 %v1331
    %v1333 = vlaneseq
    %v1334 = vshrl.u32 %v1333, 7
    %v1335 = vsub.s32 %v1332, %v1334
    %v1336 = vrot.slane %v1326, %v1335
    %v1337 = vcombine.high %v1336, %v1336
    %v1339 = vunpack.c.l.s4 1966171168
    %v1340 = vunpack.c.0.s8 %v1339
    %v1341 = vlaneseq
    %v1342 = vshrl.u32 %v1341, 7
    %v1343 = vsub.s32 %v1340, %v1342
    %v1344 = vrot.slane %v1336, %v1343
    %v1346 = vunpack.c.l.s4 1966171168
    %v1347 = vunpack.c.0.s8 %v1346
    %v1348 = vlaneseq
    %v1349 = vshrl.u32 %v1348, 7
    %v1350 = vsub.s32 %v1347, %v1349
    %v1351 = vrot.slane %v1337, %v1350
    %v1352 = vlaneseq
    %v1353 = vshrl.u32 %v1352, 7
    %v1354 = vsub.s32 0, %v1353
    %v1355 = vrot.slane %v1344, %v1354
    %v1356 = vlaneseq
    %v1357 = vshrl.u32 %v1356, 7
    %v1358 = vsub.s32 0, %v1357
    %v1359 = vrot.slane %v1351, %v1358
    %v1362 = vmul.f32 %v1355, %v233
    %v1363 = vmul.f32 %v1355, %v234
    %v1364 = vmul.f32 %v1359, %v235
    %v1365 = vmul.f32 %v1359, %v236
    %v1366 = vsel %vm167, %v1362, 0.0
    %1367 = vadd.xlane.f32.xlu0 %v1366
    %v1368 = vpop.xlane.xlu0 %1367
    %v1369 = vsel %vm167, %v1363, 0.0
    %1370 = vadd.xlane.f32.xlu0 %v1369
    %v1371 = vpop.xlane.xlu0 %1370
    %v1372 = vsel %vm167, %v1364, 0.0
    %1373 = vadd.xlane.f32.xlu0 %v1372
    %v1374 = vpop.xlane.xlu0 %1373
    %v1375 = vsel %vm167, %v1365, 0.0
    %1376 = vadd.xlane.f32.xlu0 %v1375
    %v1377 = vpop.xlane.xlu0 %1376
    %v1382 = vlaneseq
    %v1383 = vshrl.u32 %v1382, 7
    %v1384 = vsub.s32 %v816, %v1383
    %v1385 = vrot.slane %v1368, %v1384
    %v1386 = vlaneseq
    %v1387 = vshrl.u32 %v1386, 7
    %v1388 = vsub.s32 %v821, %v1387
    %v1389 = vrot.slane %v1371, %v1388
    %v1390 = vsel %vm826, %v1389, %v1385
    %v1391 = vlaneseq
    %v1392 = vshrl.u32 %v1391, 7
    %v1393 = vsub.s32 %v816, %v1392
    %v1394 = vrot.slane %v1374, %v1393
    %v1395 = vlaneseq
    %v1396 = vshrl.u32 %v1395, 7
    %v1397 = vsub.s32 %v821, %v1396
    %v1398 = vrot.slane %v1377, %v1397
    %v1399 = vsel %vm826, %v1398, %v1394
    %v1400 = vsel %vm837, %v1399, %v1390
    %v1402 = vsel %vm840, %v1400, -inf
    %1403 = vmax.xlane.f32.xlu0 %v1402
    %v1404 = vpop.xlane.xlu0 %1403
    %v1406 = vlaneseq
    %v1407 = vshrl.u32 %v1406, 7
    %v1408 = vsub.s32 0, %v1407
    %v1409 = vrot.slane %v1404, %v1408
    %v1410 = vlaneseq
    %v1411 = vshrl.u32 %v1410, 7
    %v1412 = vsub.s32 1, %v1411
    %v1413 = vrot.slane %v1404, %v1412
    %v1416 = vsub.f32 %v1368, %v1409
    %v1417 = vsub.f32 %v1371, %v1409
    %v1418 = vsub.f32 %v1374, %v1413
    %v1419 = vsub.f32 %v1377, %v1413
    %v1420 = vmul.f32 %v1416, 1.442695
    %v1421 = vpow.pop %v1420
    %v1422 = vmul.f32 %v1417, 1.442695
    %v1423 = vpow.pop %v1422
    %v1424 = vmul.f32 %v1418, 1.442695
    %v1425 = vpow.pop %v1424
    %v1426 = vmul.f32 %v1419, 1.442695
    %v1427 = vpow.pop %v1426
    %1432 = vset.pattern.permute.xlu0 0
    %1433 = vperm.xlu0 %1432, %v1421
    %v1434 = vpop.permute.xlu0 %1433
    %1435 = vset.pattern.permute.xlu0 0
    %1436 = vperm.xlu0 %1435, %v1423
    %v1437 = vpop.permute.xlu0 %1436
    %1438 = vset.pattern.permute.xlu0 0
    %1439 = vperm.xlu0 %1438, %v1425
    %v1440 = vpop.permute.xlu0 %1439
    %1441 = vset.pattern.permute.xlu0 0
    %1442 = vperm.xlu0 %1441, %v1427
    %v1443 = vpop.permute.xlu0 %1442
    %v1444 = vlaneseq
    %v1445 = vshrl.u32 %v1444, 7
    %v1446 = vsub.s32 %v816, %v1445
    %v1447 = vrot.slane %v1434, %v1446
    %v1448 = vlaneseq
    %v1449 = vshrl.u32 %v1448, 7
    %v1450 = vsub.s32 %v821, %v1449
    %v1451 = vrot.slane %v1437, %v1450
    %v1452 = vsel %vm826, %v1451, %v1447
    %v1453 = vlaneseq
    %v1454 = vshrl.u32 %v1453, 7
    %v1455 = vsub.s32 %v816, %v1454
    %v1456 = vrot.slane %v1440, %v1455
    %v1457 = vlaneseq
    %v1458 = vshrl.u32 %v1457, 7
    %v1459 = vsub.s32 %v821, %v1458
    %v1460 = vrot.slane %v1443, %v1459
    %v1461 = vsel %vm826, %v1460, %v1456
    %v1462 = vsel %vm837, %v1461, %v1452
    %v1464 = vsel %vm840, %v1462, 0.0
    %1465 = vadd.xlane.f32.xlu0 %v1464
    %v1466 = vpop.xlane.xlu0 %1465
    %v1468 = vlaneseq
    %v1469 = vshrl.u32 %v1468, 7
    %v1470 = vsub.s32 0, %v1469
    %v1471 = vrot.slane %v1466, %v1470
    %v1472 = vlaneseq
    %v1473 = vshrl.u32 %v1472, 7
    %v1474 = vsub.s32 1, %v1473
    %v1475 = vrot.slane %v1466, %v1474
    %v1478 = vrcp.pop %v1471
    %v1479 = vmul.f32 %v1421, %v1478
    %v1480 = vmul.f32 %v1423, %v1478
    %v1481 = vrcp.pop %v1475
    %v1482 = vmul.f32 %v1425, %v1481
    %v1483 = vmul.f32 %v1427, %v1481
    %1485 = vset.pattern.permute.xlu0 0
    %1486 = vperm.xlu0 %1485, %v1479
    %v1487 = vpop.permute.xlu0 %1486
    %1490 = vset.pattern.permute.xlu0 0
    %1491 = vperm.xlu0 %1490, %v1480
    %v1492 = vpop.permute.xlu0 %1491
    %1495 = vset.pattern.permute.xlu0 0
    %1496 = vperm.xlu0 %1495, %v1482
    %v1497 = vpop.permute.xlu0 %1496
    %1500 = vset.pattern.permute.xlu0 0
    %1501 = vperm.xlu0 %1500, %v1483
    %v1502 = vpop.permute.xlu0 %1501
    %v1504 = vmul.f32 %v1487, %v332
    %v1505 = vmul.f32 %v1492, %v337
    %v1506 = vmul.f32 %v1497, %v342
    %v1507 = vmul.f32 %v1502, %v347
    %v1508 = vsel %vm167, %v1504, 0.0
    %v1509 = vsel %vm167, %v1505, 0.0
    %v1510 = vadd.f32 %v1508, %v1509
    %v1511 = vrot.slane %v1510, 4
    %v1512 = vadd.f32 %v1510, %v1511
    %v1513 = vrot.slane %v1512, 2
    %v1514 = vadd.f32 %v1512, %v1513
    %v1515 = vrot.slane %v1514, 1
    %v1516 = vadd.f32 %v1514, %v1515
    %v1517 = vsel %vm167, %v1506, 0.0
    %v1518 = vsel %vm167, %v1507, 0.0
    %v1519 = vadd.f32 %v1517, %v1518
    %v1520 = vrot.slane %v1519, 4
    %v1521 = vadd.f32 %v1519, %v1520
    %v1522 = vrot.slane %v1521, 2
    %v1523 = vadd.f32 %v1521, %v1522
    %v1524 = vrot.slane %v1523, 1
    %v1525 = vadd.f32 %v1523, %v1524
    %vm1526 = vcmp.gt.f32.partialorder %v1516, 0.0
    %vm1527 = vcmp.gt.f32.partialorder %v1525, 0.0
    %v1528 = vmin.f32 %v1516, 0.0
    %v1529 = vmin.f32 %v1525, 0.0
    %v1530 = vmul.f32 %v1528, 1.442695
    %v1531 = vpow.pop %v1530
    %v1532 = vmul.f32 %v1529, 1.442695
    %v1533 = vpow.pop %v1532
    %v1534 = vsub.f32 %v1531, 1.0
    %v1535 = vsub.f32 %v1533, 1.0
    %v1536 = vsel %vm1526, %v1516, %v1534
    %v1537 = vsel %vm1527, %v1525, %v1535
    %v1540 = vsel %vm837, %v1537, %v1536
    %v1541 = vsel %vm167, %v1540, 0
    %1543 = vmatprep.subr.mxu0 0.0
    %1544 = vmatpush1.msra.mxu0 %v374
    %1545 = vmatprep.subr.mxu0 0.0
    %1546 = vmatpush1.msra.mxu0 %v375
    %1547 = vmatprep.subr.mxu0 0.0
    %1548 = vmatpush1.msra.mxu0 %v376
    %1549 = vmatprep.subr.mxu0 0.0
    %1550 = vmatpush1.msra.mxu0 %v377
    %1551 = vmatprep.subr.mxu0 0.0
    %1552 = vmatpush1.msra.mxu0 %v378
    %1553 = vmatprep.subr.mxu0 0.0
    %1554 = vmatpush1.msra.mxu0 %v379
    %1555 = vmatprep.subr.mxu0 0.0
    %1556 = vmatpush1.msra.mxu0 %v983
    %1557 = vmatprep.subr.mxu0 0.0
    %1558 = vmatpush1.msra.mxu0 0.0
    %1559 = vmatprep.subr.mxu0 0.0
    %1560 = vmatpush1.msra.mxu0 0.0
    %1561 = vmatprep.subr.mxu0 0.0
    %1562 = vmatpush1.msra.mxu0 0.0
    %1563 = vmatprep.subr.mxu0 0.0
    %1564 = vmatpush1.msra.mxu0 0.0
    %1565 = vmatprep.subr.mxu0 0.0
    %1566 = vmatpush1.msra.mxu0 0.0
    %1567 = vmatprep.subr.mxu0 0.0
    %1568 = vmatpush1.msra.mxu0 0.0
    %1569 = vmatprep.subr.mxu0 0.0
    %1570 = vmatpush1.msra.mxu0 0.0
    %1571 = vmatprep.subr.mxu0 0.0
    %1572 = vmatpush1.msra.mxu0 0.0
    %1573 = vmatprep.subr.mxu0 0.0
    %1574 = vmatpush1.msra.mxu0 0.0
    %1575 = vmatprep.subr.mxu0 0.0
    %1576 = vmatpush1.msra.mxu0 0.0
    %1577 = vmatprep.subr.mxu0 0.0
    %1578 = vmatpush1.msra.mxu0 0.0
    %1579 = vmatprep.subr.mxu0 0.0
    %1580 = vmatpush1.msra.mxu0 0.0
    %1581 = vmatprep.subr.mxu0 0.0
    %1582 = vmatpush1.msra.mxu0 0.0
    %1583 = vmatprep.subr.mxu0 0.0
    %1584 = vmatpush1.msra.mxu0 0.0
    %1585 = vmatprep.subr.mxu0 0.0
    %1586 = vmatpush1.msra.mxu0 0.0
    %1587 = vmatprep.subr.mxu0 0.0
    %1588 = vmatpush1.msra.mxu0 0.0
    %1589 = vmatprep.subr.mxu0 0.0
    %1590 = vmatpush1.msra.mxu0 0.0
    %1591 = vmatprep.subr.mxu0 0.0
    %1592 = vmatpush1.msra.mxu0 0.0
    %1593 = vmatprep.subr.mxu0 0.0
    %1594 = vmatpush1.msra.mxu0 0.0
    %1595 = vmatprep.subr.mxu0 0.0
    %1596 = vmatpush1.msra.mxu0 0.0
    %1597 = vmatprep.subr.mxu0 0.0
    %1598 = vmatpush1.msra.mxu0 0.0
    %1599 = vmatprep.subr.mxu0 0.0
    %1600 = vmatpush1.msra.mxu0 0.0
    %1601 = vmatprep.subr.mxu0 0.0
    %1602 = vmatpush1.msra.mxu0 0.0
    %1603 = vmatprep.subr.mxu0 0.0
    %1604 = vmatpush1.msra.mxu0 0.0
    %1605 = vmatprep.subr.mxu0 0.0
    %1606 = vmatpush1.msra.mxu0 0.0
    %1607 = vmatprep.mubr.f32.mxu0 0.0
    %1608 = vmatmul.mubr.f32.gmra.mrb[0].mxu0 %v1541
    %v1609 = vpop.f32.mrb[0].mxu0
    %v1610 = vadd.f32 %v404, %v1609
    %v1611 = vpop.f32.mrb[0].mxu0
    %1612 = vdwg.mxu0
    %v1613 = vadd.f32 %v1610, %v1071
    %v1614 = vsel %vm585, %v1613, 0.0
    %1615 = vadd.xlane.f32.xlu0 %v1614
    %v1616 = vpop.xlane.xlu0 %1615
    %v1617 = vmul.f32 %v1616, %v180
    %v1618 = vsub.f32 %v1613, %v1617
    %v1619 = vmul.f32 %v1618, %v1618
    %v1620 = vsel %vm585, %v1619, 0.0
    %1621 = vadd.xlane.f32.xlu0 %v1620
    %v1622 = vpop.xlane.xlu0 %1621
    %v1623 = vmul.f32 %v1622, %v180
    %v1624 = vadd.f32 %v1623, 1e-05
    %v1625 = vrsqrt.pop %v1624
    %v1626 = vmul.f32 %v1618, %v1625
    %v1627 = vmul.f32 %v1626, %v408
    %v1628 = vadd.f32 %v1627, %v412
    %v1629 = vadd.f32 %v1628, %v463
    %v1630 = vadd.f32 %v506, %v428
    %v1631 = vadd.f32 %v1071, %v432
    %v1632 = vadd.f32 %v1629, %v436
    %v1634 = vsel %vm167, %v1629, 0
    %1636 = vmatprep.subr.mxu0 0.0
    %1637 = vmatpush1.msra.mxu0 %v350
    %1638 = vmatprep.subr.mxu0 0.0
    %1639 = vmatpush1.msra.mxu0 %v351
    %1640 = vmatprep.subr.mxu0 0.0
    %1641 = vmatpush1.msra.mxu0 %v352
    %1642 = vmatprep.subr.mxu0 0.0
    %1643 = vmatpush1.msra.mxu0 %v353
    %1644 = vmatprep.subr.mxu0 0.0
    %1645 = vmatpush1.msra.mxu0 %v354
    %1646 = vmatprep.subr.mxu0 0.0
    %1647 = vmatpush1.msra.mxu0 %v355
    %1648 = vmatprep.subr.mxu0 0.0
    %1649 = vmatpush1.msra.mxu0 %v512
    %1650 = vmatprep.subr.mxu0 0.0
    %1651 = vmatpush1.msra.mxu0 0.0
    %1652 = vmatprep.subr.mxu0 0.0
    %1653 = vmatpush1.msra.mxu0 0.0
    %1654 = vmatprep.subr.mxu0 0.0
    %1655 = vmatpush1.msra.mxu0 0.0
    %1656 = vmatprep.subr.mxu0 0.0
    %1657 = vmatpush1.msra.mxu0 0.0
    %1658 = vmatprep.subr.mxu0 0.0
    %1659 = vmatpush1.msra.mxu0 0.0
    %1660 = vmatprep.subr.mxu0 0.0
    %1661 = vmatpush1.msra.mxu0 0.0
    %1662 = vmatprep.subr.mxu0 0.0
    %1663 = vmatpush1.msra.mxu0 0.0
    %1664 = vmatprep.subr.mxu0 0.0
    %1665 = vmatpush1.msra.mxu0 0.0
    %1666 = vmatprep.subr.mxu0 0.0
    %1667 = vmatpush1.msra.mxu0 0.0
    %1668 = vmatprep.subr.mxu0 0.0
    %1669 = vmatpush1.msra.mxu0 0.0
    %1670 = vmatprep.subr.mxu0 0.0
    %1671 = vmatpush1.msra.mxu0 0.0
    %1672 = vmatprep.subr.mxu0 0.0
    %1673 = vmatpush1.msra.mxu0 0.0
    %1674 = vmatprep.subr.mxu0 0.0
    %1675 = vmatpush1.msra.mxu0 0.0
    %1676 = vmatprep.subr.mxu0 0.0
    %1677 = vmatpush1.msra.mxu0 0.0
    %1678 = vmatprep.subr.mxu0 0.0
    %1679 = vmatpush1.msra.mxu0 0.0
    %1680 = vmatprep.subr.mxu0 0.0
    %1681 = vmatpush1.msra.mxu0 0.0
    %1682 = vmatprep.subr.mxu0 0.0
    %1683 = vmatpush1.msra.mxu0 0.0
    %1684 = vmatprep.subr.mxu0 0.0
    %1685 = vmatpush1.msra.mxu0 0.0
    %1686 = vmatprep.subr.mxu0 0.0
    %1687 = vmatpush1.msra.mxu0 0.0
    %1688 = vmatprep.subr.mxu0 0.0
    %1689 = vmatpush1.msra.mxu0 0.0
    %1690 = vmatprep.subr.mxu0 0.0
    %1691 = vmatpush1.msra.mxu0 0.0
    %1692 = vmatprep.subr.mxu0 0.0
    %1693 = vmatpush1.msra.mxu0 0.0
    %1694 = vmatprep.subr.mxu0 0.0
    %1695 = vmatpush1.msra.mxu0 0.0
    %1696 = vmatprep.subr.mxu0 0.0
    %1697 = vmatpush1.msra.mxu0 0.0
    %1698 = vmatprep.subr.mxu0 0.0
    %1699 = vmatpush1.msra.mxu0 0.0
    %1700 = vmatprep.mubr.f32.mxu0 0.0
    %1701 = vmatmul.mubr.f32.gmra.mrb[0].mxu0 %v1634
    %v1702 = vpop.f32.mrb[0].mxu0
    %v1703 = vadd.f32 %v384, %v1702
    %v1704 = vpop.f32.mrb[0].mxu0
    %1705 = vdwg.mxu0
    %v1706 = vmul.f32 %v1703, %v1630
    %v1707 = vsel %vm585, %v1706, 0.0
    %1708 = vadd.xlane.f32.xlu0 %v1707
    %v1709 = vpop.xlane.xlu0 %1708
    %v1710 = vmul.f32 %v1703, %v1631
    %v1711 = vsel %vm585, %v1710, 0.0
    %1712 = vadd.xlane.f32.xlu0 %v1711
    %v1713 = vpop.xlane.xlu0 %1712
    %v1714 = vmul.f32 %v1703, %v1632
    %v1715 = vsel %vm585, %v1714, 0.0
    %1716 = vadd.xlane.f32.xlu0 %v1715
    %v1717 = vpop.xlane.xlu0 %1716
    %v1718 = vmax.f32 %v1709, %v1713
    %v1719 = vmax.f32 %v1718, %v1717
    %v1720 = vsub.f32 %v1709, %v1719
    %v1721 = vmul.f32 %v1720, 1.442695
    %v1722 = vpow.pop %v1721
    %v1723 = vsub.f32 %v1713, %v1719
    %v1724 = vmul.f32 %v1723, 1.442695
    %v1725 = vpow.pop %v1724
    %v1726 = vsub.f32 %v1717, %v1719
    %v1727 = vmul.f32 %v1726, 1.442695
    %v1728 = vpow.pop %v1727
    %v1729 = vmul.f32 %v1722, %v1630
    %v1730 = vadd.f32 %v1722, %v1725
    %v1731 = vmul.f32 %v1725, %v1631
    %v1732 = vadd.f32 %v1729, %v1731
    %v1733 = vadd.f32 %v1730, %v1728
    %v1734 = vmul.f32 %v1728, %v1632
    %v1735 = vadd.f32 %v1732, %v1734
    %v1736 = vrcp.pop %v1733
    %v1737 = vmul.f32 %v1735, %v1736
    %v1739 = vsel %vm167, %v1737, 0
    %1741 = vmatprep.subr.mxu0 0.0
    %1742 = vmatpush1.msra.mxu0 %v358
    %1743 = vmatprep.subr.mxu0 0.0
    %1744 = vmatpush1.msra.mxu0 %v359
    %1745 = vmatprep.subr.mxu0 0.0
    %1746 = vmatpush1.msra.mxu0 %v360
    %1747 = vmatprep.subr.mxu0 0.0
    %1748 = vmatpush1.msra.mxu0 %v361
    %1749 = vmatprep.subr.mxu0 0.0
    %1750 = vmatpush1.msra.mxu0 %v362
    %1751 = vmatprep.subr.mxu0 0.0
    %1752 = vmatpush1.msra.mxu0 %v363
    %1753 = vmatprep.subr.mxu0 0.0
    %1754 = vmatpush1.msra.mxu0 %v599
    %1755 = vmatprep.subr.mxu0 0.0
    %1756 = vmatpush1.msra.mxu0 0.0
    %1757 = vmatprep.subr.mxu0 0.0
    %1758 = vmatpush1.msra.mxu0 0.0
    %1759 = vmatprep.subr.mxu0 0.0
    %1760 = vmatpush1.msra.mxu0 0.0
    %1761 = vmatprep.subr.mxu0 0.0
    %1762 = vmatpush1.msra.mxu0 0.0
    %1763 = vmatprep.subr.mxu0 0.0
    %1764 = vmatpush1.msra.mxu0 0.0
    %1765 = vmatprep.subr.mxu0 0.0
    %1766 = vmatpush1.msra.mxu0 0.0
    %1767 = vmatprep.subr.mxu0 0.0
    %1768 = vmatpush1.msra.mxu0 0.0
    %1769 = vmatprep.subr.mxu0 0.0
    %1770 = vmatpush1.msra.mxu0 0.0
    %1771 = vmatprep.subr.mxu0 0.0
    %1772 = vmatpush1.msra.mxu0 0.0
    %1773 = vmatprep.subr.mxu0 0.0
    %1774 = vmatpush1.msra.mxu0 0.0
    %1775 = vmatprep.subr.mxu0 0.0
    %1776 = vmatpush1.msra.mxu0 0.0
    %1777 = vmatprep.subr.mxu0 0.0
    %1778 = vmatpush1.msra.mxu0 0.0
    %1779 = vmatprep.subr.mxu0 0.0
    %1780 = vmatpush1.msra.mxu0 0.0
    %1781 = vmatprep.subr.mxu0 0.0
    %1782 = vmatpush1.msra.mxu0 0.0
    %1783 = vmatprep.subr.mxu0 0.0
    %1784 = vmatpush1.msra.mxu0 0.0
    %1785 = vmatprep.subr.mxu0 0.0
    %1786 = vmatpush1.msra.mxu0 0.0
    %1787 = vmatprep.subr.mxu0 0.0
    %1788 = vmatpush1.msra.mxu0 0.0
    %1789 = vmatprep.subr.mxu0 0.0
    %1790 = vmatpush1.msra.mxu0 0.0
    %1791 = vmatprep.subr.mxu0 0.0
    %1792 = vmatpush1.msra.mxu0 0.0
    %1793 = vmatprep.subr.mxu0 0.0
    %1794 = vmatpush1.msra.mxu0 0.0
    %1795 = vmatprep.subr.mxu0 0.0
    %1796 = vmatpush1.msra.mxu0 0.0
    %1797 = vmatprep.subr.mxu0 0.0
    %1798 = vmatpush1.msra.mxu0 0.0
    %1799 = vmatprep.subr.mxu0 0.0
    %1800 = vmatpush1.msra.mxu0 0.0
    %1801 = vmatprep.subr.mxu0 0.0
    %1802 = vmatpush1.msra.mxu0 0.0
    %1803 = vmatprep.subr.mxu0 0.0
    %1804 = vmatpush1.msra.mxu0 0.0
    %1805 = vmatprep.mubr.f32.mxu0 0.0
    %1806 = vmatmul.mubr.f32.gmra.mrb[0].mxu0 %v1739
    %v1807 = vpop.f32.mrb[0].mxu0
    %v1808 = vadd.f32 %v388, %v1807
    %v1809 = vpop.f32.mrb[0].mxu0
    %1810 = vdwg.mxu0
    %v1811 = vsel %vm585, %v1808, 0.0
    %1812 = vadd.xlane.f32.xlu0 %v1811
    %v1813 = vpop.xlane.xlu0 %1812
    %v1814 = vmul.f32 %v1813, %v180
    %v1815 = vsub.f32 %v1808, %v1814
    %v1816 = vmul.f32 %v1815, %v1815
    %v1817 = vsel %vm585, %v1816, 0.0
    %1818 = vadd.xlane.f32.xlu0 %v1817
    %v1819 = vpop.xlane.xlu0 %1818
    %v1820 = vmul.f32 %v1819, %v180
    %v1821 = vadd.f32 %v1820, 1e-05
    %v1822 = vrsqrt.pop %v1821
    %v1823 = vmul.f32 %v1815, %v1822
    %v1824 = vmul.f32 %v1823, %v392
    %v1825 = vadd.f32 %v1824, %v396
    %v1827 = vsel %vm167, %v1825, 0
    %1829 = vmatprep.subr.mxu0 0.0
    %1830 = vmatpush1.msra.mxu0 %v366
    %1831 = vmatprep.subr.mxu0 0.0
    %1832 = vmatpush1.msra.mxu0 %v367
    %1833 = vmatprep.subr.mxu0 0.0
    %1834 = vmatpush1.msra.mxu0 %v368
    %1835 = vmatprep.subr.mxu0 0.0
    %1836 = vmatpush1.msra.mxu0 %v369
    %1837 = vmatprep.subr.mxu0 0.0
    %1838 = vmatpush1.msra.mxu0 %v370
    %1839 = vmatprep.subr.mxu0 0.0
    %1840 = vmatpush1.msra.mxu0 %v371
    %1841 = vmatprep.subr.mxu0 0.0
    %1842 = vmatpush1.msra.mxu0 %v690
    %1843 = vmatprep.subr.mxu0 0.0
    %1844 = vmatpush1.msra.mxu0 0.0
    %1845 = vmatprep.subr.mxu0 0.0
    %1846 = vmatpush1.msra.mxu0 0.0
    %1847 = vmatprep.subr.mxu0 0.0
    %1848 = vmatpush1.msra.mxu0 0.0
    %1849 = vmatprep.subr.mxu0 0.0
    %1850 = vmatpush1.msra.mxu0 0.0
    %1851 = vmatprep.subr.mxu0 0.0
    %1852 = vmatpush1.msra.mxu0 0.0
    %1853 = vmatprep.subr.mxu0 0.0
    %1854 = vmatpush1.msra.mxu0 0.0
    %1855 = vmatprep.subr.mxu0 0.0
    %1856 = vmatpush1.msra.mxu0 0.0
    %1857 = vmatprep.subr.mxu0 0.0
    %1858 = vmatpush1.msra.mxu0 0.0
    %1859 = vmatprep.subr.mxu0 0.0
    %1860 = vmatpush1.msra.mxu0 0.0
    %1861 = vmatprep.subr.mxu0 0.0
    %1862 = vmatpush1.msra.mxu0 0.0
    %1863 = vmatprep.subr.mxu0 0.0
    %1864 = vmatpush1.msra.mxu0 0.0
    %1865 = vmatprep.subr.mxu0 0.0
    %1866 = vmatpush1.msra.mxu0 0.0
    %1867 = vmatprep.subr.mxu0 0.0
    %1868 = vmatpush1.msra.mxu0 0.0
    %1869 = vmatprep.subr.mxu0 0.0
    %1870 = vmatpush1.msra.mxu0 0.0
    %1871 = vmatprep.subr.mxu0 0.0
    %1872 = vmatpush1.msra.mxu0 0.0
    %1873 = vmatprep.subr.mxu0 0.0
    %1874 = vmatpush1.msra.mxu0 0.0
    %1875 = vmatprep.subr.mxu0 0.0
    %1876 = vmatpush1.msra.mxu0 0.0
    %1877 = vmatprep.subr.mxu0 0.0
    %1878 = vmatpush1.msra.mxu0 0.0
    %1879 = vmatprep.subr.mxu0 0.0
    %1880 = vmatpush1.msra.mxu0 0.0
    %1881 = vmatprep.subr.mxu0 0.0
    %1882 = vmatpush1.msra.mxu0 0.0
    %1883 = vmatprep.subr.mxu0 0.0
    %1884 = vmatpush1.msra.mxu0 0.0
    %1885 = vmatprep.subr.mxu0 0.0
    %1886 = vmatpush1.msra.mxu0 0.0
    %1887 = vmatprep.subr.mxu0 0.0
    %1888 = vmatpush1.msra.mxu0 0.0
    %1889 = vmatprep.subr.mxu0 0.0
    %1890 = vmatpush1.msra.mxu0 0.0
    %1891 = vmatprep.subr.mxu0 0.0
    %1892 = vmatpush1.msra.mxu0 0.0
    %1893 = vmatprep.mubr.f32.mxu0 0.0
    %1894 = vmatmul.mubr.f32.gmra.mrb[0].mxu0 %v1827
    %v1895 = vpop.f32.mrb[0].mxu0
    %v1896 = vadd.f32 %v400, %v1895
    %v1897 = vpop.f32.mrb[0].mxu0
    %1898 = vdwg.mxu0
    %v1901 = vunpack.c.l.s4 1966171168
    %v1902 = vunpack.c.0.s8 %v1901
    %v1903 = vlaneseq
    %v1904 = vshrl.u32 %v1903, 7
    %v1905 = vsub.s32 %v1902, %v1904
    %v1906 = vrot.slane %v1896, %v1905
    %v1907 = vcombine.high %v1906, %v1906
    %v1909 = vunpack.c.l.s4 1966171168
    %v1910 = vunpack.c.0.s8 %v1909
    %v1911 = vlaneseq
    %v1912 = vshrl.u32 %v1911, 7
    %v1913 = vsub.s32 %v1910, %v1912
    %v1914 = vrot.slane %v1906, %v1913
    %v1916 = vunpack.c.l.s4 1966171168
    %v1917 = vunpack.c.0.s8 %v1916
    %v1918 = vlaneseq
    %v1919 = vshrl.u32 %v1918, 7
    %v1920 = vsub.s32 %v1917, %v1919
    %v1921 = vrot.slane %v1907, %v1920
    %v1922 = vlaneseq
    %v1923 = vshrl.u32 %v1922, 7
    %v1924 = vsub.s32 0, %v1923
    %v1925 = vrot.slane %v1914, %v1924
    %v1926 = vlaneseq
    %v1927 = vshrl.u32 %v1926, 7
    %v1928 = vsub.s32 0, %v1927
    %v1929 = vrot.slane %v1921, %v1928
    %v1932 = vmul.f32 %v1925, %v233
    %v1933 = vmul.f32 %v1925, %v234
    %v1934 = vmul.f32 %v1929, %v235
    %v1935 = vmul.f32 %v1929, %v236
    %v1936 = vsel %vm167, %v1932, 0.0
    %1937 = vadd.xlane.f32.xlu0 %v1936
    %v1938 = vpop.xlane.xlu0 %1937
    %v1939 = vsel %vm167, %v1933, 0.0
    %1940 = vadd.xlane.f32.xlu0 %v1939
    %v1941 = vpop.xlane.xlu0 %1940
    %v1942 = vsel %vm167, %v1934, 0.0
    %1943 = vadd.xlane.f32.xlu0 %v1942
    %v1944 = vpop.xlane.xlu0 %1943
    %v1945 = vsel %vm167, %v1935, 0.0
    %1946 = vadd.xlane.f32.xlu0 %v1945
    %v1947 = vpop.xlane.xlu0 %1946
    %v1952 = vlaneseq
    %v1953 = vshrl.u32 %v1952, 7
    %v1954 = vsub.s32 %v816, %v1953
    %v1955 = vrot.slane %v1938, %v1954
    %v1956 = vlaneseq
    %v1957 = vshrl.u32 %v1956, 7
    %v1958 = vsub.s32 %v821, %v1957
    %v1959 = vrot.slane %v1941, %v1958
    %v1960 = vsel %vm826, %v1959, %v1955
    %v1961 = vlaneseq
    %v1962 = vshrl.u32 %v1961, 7
    %v1963 = vsub.s32 %v816, %v1962
    %v1964 = vrot.slane %v1944, %v1963
    %v1965 = vlaneseq
    %v1966 = vshrl.u32 %v1965, 7
    %v1967 = vsub.s32 %v821, %v1966
    %v1968 = vrot.slane %v1947, %v1967
    %v1969 = vsel %vm826, %v1968, %v1964
    %v1970 = vsel %vm837, %v1969, %v1960
    %v1972 = vsel %vm840, %v1970, -inf
    %1973 = vmax.xlane.f32.xlu0 %v1972
    %v1974 = vpop.xlane.xlu0 %1973
    %v1976 = vlaneseq
    %v1977 = vshrl.u32 %v1976, 7
    %v1978 = vsub.s32 0, %v1977
    %v1979 = vrot.slane %v1974, %v1978
    %v1980 = vlaneseq
    %v1981 = vshrl.u32 %v1980, 7
    %v1982 = vsub.s32 1, %v1981
    %v1983 = vrot.slane %v1974, %v1982
    %v1986 = vsub.f32 %v1938, %v1979
    %v1987 = vsub.f32 %v1941, %v1979
    %v1988 = vsub.f32 %v1944, %v1983
    %v1989 = vsub.f32 %v1947, %v1983
    %v1990 = vmul.f32 %v1986, 1.442695
    %v1991 = vpow.pop %v1990
    %v1992 = vmul.f32 %v1987, 1.442695
    %v1993 = vpow.pop %v1992
    %v1994 = vmul.f32 %v1988, 1.442695
    %v1995 = vpow.pop %v1994
    %v1996 = vmul.f32 %v1989, 1.442695
    %v1997 = vpow.pop %v1996
    %2002 = vset.pattern.permute.xlu0 0
    %2003 = vperm.xlu0 %2002, %v1991
    %v2004 = vpop.permute.xlu0 %2003
    %2005 = vset.pattern.permute.xlu0 0
    %2006 = vperm.xlu0 %2005, %v1993
    %v2007 = vpop.permute.xlu0 %2006
    %2008 = vset.pattern.permute.xlu0 0
    %2009 = vperm.xlu0 %2008, %v1995
    %v2010 = vpop.permute.xlu0 %2009
    %2011 = vset.pattern.permute.xlu0 0
    %2012 = vperm.xlu0 %2011, %v1997
    %v2013 = vpop.permute.xlu0 %2012
    %v2014 = vlaneseq
    %v2015 = vshrl.u32 %v2014, 7
    %v2016 = vsub.s32 %v816, %v2015
    %v2017 = vrot.slane %v2004, %v2016
    %v2018 = vlaneseq
    %v2019 = vshrl.u32 %v2018, 7
    %v2020 = vsub.s32 %v821, %v2019
    %v2021 = vrot.slane %v2007, %v2020
    %v2022 = vsel %vm826, %v2021, %v2017
    %v2023 = vlaneseq
    %v2024 = vshrl.u32 %v2023, 7
    %v2025 = vsub.s32 %v816, %v2024
    %v2026 = vrot.slane %v2010, %v2025
    %v2027 = vlaneseq
    %v2028 = vshrl.u32 %v2027, 7
    %v2029 = vsub.s32 %v821, %v2028
    %v2030 = vrot.slane %v2013, %v2029
    %v2031 = vsel %vm826, %v2030, %v2026
    %v2032 = vsel %vm837, %v2031, %v2022
    %v2034 = vsel %vm840, %v2032, 0.0
    %2035 = vadd.xlane.f32.xlu0 %v2034
    %v2036 = vpop.xlane.xlu0 %2035
    %v2038 = vlaneseq
    %v2039 = vshrl.u32 %v2038, 7
    %v2040 = vsub.s32 0, %v2039
    %v2041 = vrot.slane %v2036, %v2040
    %v2042 = vlaneseq
    %v2043 = vshrl.u32 %v2042, 7
    %v2044 = vsub.s32 1, %v2043
    %v2045 = vrot.slane %v2036, %v2044
    %v2048 = vrcp.pop %v2041
    %v2049 = vmul.f32 %v1991, %v2048
    %v2050 = vmul.f32 %v1993, %v2048
    %v2051 = vrcp.pop %v2045
    %v2052 = vmul.f32 %v1995, %v2051
    %v2053 = vmul.f32 %v1997, %v2051
    %2055 = vset.pattern.permute.xlu0 0
    %2056 = vperm.xlu0 %2055, %v2049
    %v2057 = vpop.permute.xlu0 %2056
    %2060 = vset.pattern.permute.xlu0 0
    %2061 = vperm.xlu0 %2060, %v2050
    %v2062 = vpop.permute.xlu0 %2061
    %2065 = vset.pattern.permute.xlu0 0
    %2066 = vperm.xlu0 %2065, %v2052
    %v2067 = vpop.permute.xlu0 %2066
    %2070 = vset.pattern.permute.xlu0 0
    %2071 = vperm.xlu0 %2070, %v2053
    %v2072 = vpop.permute.xlu0 %2071
    %v2074 = vmul.f32 %v2057, %v332
    %v2075 = vmul.f32 %v2062, %v337
    %v2076 = vmul.f32 %v2067, %v342
    %v2077 = vmul.f32 %v2072, %v347
    %v2078 = vsel %vm167, %v2074, 0.0
    %v2079 = vsel %vm167, %v2075, 0.0
    %v2080 = vadd.f32 %v2078, %v2079
    %v2081 = vrot.slane %v2080, 4
    %v2082 = vadd.f32 %v2080, %v2081
    %v2083 = vrot.slane %v2082, 2
    %v2084 = vadd.f32 %v2082, %v2083
    %v2085 = vrot.slane %v2084, 1
    %v2086 = vadd.f32 %v2084, %v2085
    %v2087 = vsel %vm167, %v2076, 0.0
    %v2088 = vsel %vm167, %v2077, 0.0
    %v2089 = vadd.f32 %v2087, %v2088
    %v2090 = vrot.slane %v2089, 4
    %v2091 = vadd.f32 %v2089, %v2090
    %v2092 = vrot.slane %v2091, 2
    %v2093 = vadd.f32 %v2091, %v2092
    %v2094 = vrot.slane %v2093, 1
    %v2095 = vadd.f32 %v2093, %v2094
    %vm2096 = vcmp.gt.f32.partialorder %v2086, 0.0
    %vm2097 = vcmp.gt.f32.partialorder %v2095, 0.0
    %v2098 = vmin.f32 %v2086, 0.0
    %v2099 = vmin.f32 %v2095, 0.0
    %v2100 = vmul.f32 %v2098, 1.442695
    %v2101 = vpow.pop %v2100
    %v2102 = vmul.f32 %v2099, 1.442695
    %v2103 = vpow.pop %v2102
    %v2104 = vsub.f32 %v2101, 1.0
    %v2105 = vsub.f32 %v2103, 1.0
    %v2106 = vsel %vm2096, %v2086, %v2104
    %v2107 = vsel %vm2097, %v2095, %v2105
    %v2110 = vsel %vm837, %v2107, %v2106
    %v2111 = vsel %vm167, %v2110, 0
    %2113 = vmatprep.subr.mxu0 0.0
    %2114 = vmatpush1.msra.mxu0 %v374
    %2115 = vmatprep.subr.mxu0 0.0
    %2116 = vmatpush1.msra.mxu0 %v375
    %2117 = vmatprep.subr.mxu0 0.0
    %2118 = vmatpush1.msra.mxu0 %v376
    %2119 = vmatprep.subr.mxu0 0.0
    %2120 = vmatpush1.msra.mxu0 %v377
    %2121 = vmatprep.subr.mxu0 0.0
    %2122 = vmatpush1.msra.mxu0 %v378
    %2123 = vmatprep.subr.mxu0 0.0
    %2124 = vmatpush1.msra.mxu0 %v379
    %2125 = vmatprep.subr.mxu0 0.0
    %2126 = vmatpush1.msra.mxu0 %v983
    %2127 = vmatprep.subr.mxu0 0.0
    %2128 = vmatpush1.msra.mxu0 0.0
    %2129 = vmatprep.subr.mxu0 0.0
    %2130 = vmatpush1.msra.mxu0 0.0
    %2131 = vmatprep.subr.mxu0 0.0
    %2132 = vmatpush1.msra.mxu0 0.0
    %2133 = vmatprep.subr.mxu0 0.0
    %2134 = vmatpush1.msra.mxu0 0.0
    %2135 = vmatprep.subr.mxu0 0.0
    %2136 = vmatpush1.msra.mxu0 0.0
    %2137 = vmatprep.subr.mxu0 0.0
    %2138 = vmatpush1.msra.mxu0 0.0
    %2139 = vmatprep.subr.mxu0 0.0
    %2140 = vmatpush1.msra.mxu0 0.0
    %2141 = vmatprep.subr.mxu0 0.0
    %2142 = vmatpush1.msra.mxu0 0.0
    %2143 = vmatprep.subr.mxu0 0.0
    %2144 = vmatpush1.msra.mxu0 0.0
    %2145 = vmatprep.subr.mxu0 0.0
    %2146 = vmatpush1.msra.mxu0 0.0
    %2147 = vmatprep.subr.mxu0 0.0
    %2148 = vmatpush1.msra.mxu0 0.0
    %2149 = vmatprep.subr.mxu0 0.0
    %2150 = vmatpush1.msra.mxu0 0.0
    %2151 = vmatprep.subr.mxu0 0.0
    %2152 = vmatpush1.msra.mxu0 0.0
    %2153 = vmatprep.subr.mxu0 0.0
    %2154 = vmatpush1.msra.mxu0 0.0
    %2155 = vmatprep.subr.mxu0 0.0
    %2156 = vmatpush1.msra.mxu0 0.0
    %2157 = vmatprep.subr.mxu0 0.0
    %2158 = vmatpush1.msra.mxu0 0.0
    %2159 = vmatprep.subr.mxu0 0.0
    %2160 = vmatpush1.msra.mxu0 0.0
    %2161 = vmatprep.subr.mxu0 0.0
    %2162 = vmatpush1.msra.mxu0 0.0
    %2163 = vmatprep.subr.mxu0 0.0
    %2164 = vmatpush1.msra.mxu0 0.0
    %2165 = vmatprep.subr.mxu0 0.0
    %2166 = vmatpush1.msra.mxu0 0.0
    %2167 = vmatprep.subr.mxu0 0.0
    %2168 = vmatpush1.msra.mxu0 0.0
    %2169 = vmatprep.subr.mxu0 0.0
    %2170 = vmatpush1.msra.mxu0 0.0
    %2171 = vmatprep.subr.mxu0 0.0
    %2172 = vmatpush1.msra.mxu0 0.0
    %2173 = vmatprep.subr.mxu0 0.0
    %2174 = vmatpush1.msra.mxu0 0.0
    %2175 = vmatprep.subr.mxu0 0.0
    %2176 = vmatpush1.msra.mxu0 0.0
    %2177 = vmatprep.mubr.f32.mxu0 0.0
    %2178 = vmatmul.mubr.f32.gmra.mrb[0].mxu0 %v2111
    %v2179 = vpop.f32.mrb[0].mxu0
    %v2180 = vadd.f32 %v404, %v2179
    %v2181 = vpop.f32.mrb[0].mxu0
    %2182 = vdwg.mxu0
    %v2183 = vadd.f32 %v2180, %v1629
    %v2184 = vsel %vm585, %v2183, 0.0
    %2185 = vadd.xlane.f32.xlu0 %v2184
    %v2186 = vpop.xlane.xlu0 %2185
    %v2187 = vmul.f32 %v2186, %v180
    %v2188 = vsub.f32 %v2183, %v2187
    %v2189 = vmul.f32 %v2188, %v2188
    %v2190 = vsel %vm585, %v2189, 0.0
    %2191 = vadd.xlane.f32.xlu0 %v2190
    %v2192 = vpop.xlane.xlu0 %2191
    %v2193 = vmul.f32 %v2192, %v180
    %v2194 = vadd.f32 %v2193, 1e-05
    %v2195 = vrsqrt.pop %v2194
    %v2196 = vmul.f32 %v2188, %v2195
    %v2197 = vmul.f32 %v2196, %v408
    %v2198 = vadd.f32 %v2197, %v412
    %v2199 = vadd.f32 %v2198, %v476
    %v2200 = vadd.f32 %v506, %v424
    %v2201 = vadd.f32 %v1071, %v428
    %v2202 = vadd.f32 %v1629, %v432
    %v2203 = vadd.f32 %v2199, %v436
    %v2205 = vsel %vm167, %v2199, 0
    %2207 = vmatprep.subr.mxu0 0.0
    %2208 = vmatpush1.msra.mxu0 %v350
    %2209 = vmatprep.subr.mxu0 0.0
    %2210 = vmatpush1.msra.mxu0 %v351
    %2211 = vmatprep.subr.mxu0 0.0
    %2212 = vmatpush1.msra.mxu0 %v352
    %2213 = vmatprep.subr.mxu0 0.0
    %2214 = vmatpush1.msra.mxu0 %v353
    %2215 = vmatprep.subr.mxu0 0.0
    %2216 = vmatpush1.msra.mxu0 %v354
    %2217 = vmatprep.subr.mxu0 0.0
    %2218 = vmatpush1.msra.mxu0 %v355
    %2219 = vmatprep.subr.mxu0 0.0
    %2220 = vmatpush1.msra.mxu0 %v512
    %2221 = vmatprep.subr.mxu0 0.0
    %2222 = vmatpush1.msra.mxu0 0.0
    %2223 = vmatprep.subr.mxu0 0.0
    %2224 = vmatpush1.msra.mxu0 0.0
    %2225 = vmatprep.subr.mxu0 0.0
    %2226 = vmatpush1.msra.mxu0 0.0
    %2227 = vmatprep.subr.mxu0 0.0
    %2228 = vmatpush1.msra.mxu0 0.0
    %2229 = vmatprep.subr.mxu0 0.0
    %2230 = vmatpush1.msra.mxu0 0.0
    %2231 = vmatprep.subr.mxu0 0.0
    %2232 = vmatpush1.msra.mxu0 0.0
    %2233 = vmatprep.subr.mxu0 0.0
    %2234 = vmatpush1.msra.mxu0 0.0
    %2235 = vmatprep.subr.mxu0 0.0
    %2236 = vmatpush1.msra.mxu0 0.0
    %2237 = vmatprep.subr.mxu0 0.0
    %2238 = vmatpush1.msra.mxu0 0.0
    %2239 = vmatprep.subr.mxu0 0.0
    %2240 = vmatpush1.msra.mxu0 0.0
    %2241 = vmatprep.subr.mxu0 0.0
    %2242 = vmatpush1.msra.mxu0 0.0
    %2243 = vmatprep.subr.mxu0 0.0
    %2244 = vmatpush1.msra.mxu0 0.0
    %2245 = vmatprep.subr.mxu0 0.0
    %2246 = vmatpush1.msra.mxu0 0.0
    %2247 = vmatprep.subr.mxu0 0.0
    %2248 = vmatpush1.msra.mxu0 0.0
    %2249 = vmatprep.subr.mxu0 0.0
    %2250 = vmatpush1.msra.mxu0 0.0
    %2251 = vmatprep.subr.mxu0 0.0
    %2252 = vmatpush1.msra.mxu0 0.0
    %2253 = vmatprep.subr.mxu0 0.0
    %2254 = vmatpush1.msra.mxu0 0.0
    %2255 = vmatprep.subr.mxu0 0.0
    %2256 = vmatpush1.msra.mxu0 0.0
    %2257 = vmatprep.subr.mxu0 0.0
    %2258 = vmatpush1.msra.mxu0 0.0
    %2259 = vmatprep.subr.mxu0 0.0
    %2260 = vmatpush1.msra.mxu0 0.0
    %2261 = vmatprep.subr.mxu0 0.0
    %2262 = vmatpush1.msra.mxu0 0.0
    %2263 = vmatprep.subr.mxu0 0.0
    %2264 = vmatpush1.msra.mxu0 0.0
    %2265 = vmatprep.subr.mxu0 0.0
    %2266 = vmatpush1.msra.mxu0 0.0
    %2267 = vmatprep.subr.mxu0 0.0
    %2268 = vmatpush1.msra.mxu0 0.0
    %2269 = vmatprep.subr.mxu0 0.0
    %2270 = vmatpush1.msra.mxu0 0.0
    %2271 = vmatprep.mubr.f32.mxu0 0.0
    %2272 = vmatmul.mubr.f32.gmra.mrb[0].mxu0 %v2205
    %v2273 = vpop.f32.mrb[0].mxu0
    %v2274 = vadd.f32 %v384, %v2273
    %v2275 = vpop.f32.mrb[0].mxu0
    %2276 = vdwg.mxu0
    %v2277 = vmul.f32 %v2274, %v2200
    %v2278 = vsel %vm585, %v2277, 0.0
    %2279 = vadd.xlane.f32.xlu0 %v2278
    %v2280 = vpop.xlane.xlu0 %2279
    %v2281 = vmul.f32 %v2274, %v2201
    %v2282 = vsel %vm585, %v2281, 0.0
    %2283 = vadd.xlane.f32.xlu0 %v2282
    %v2284 = vpop.xlane.xlu0 %2283
    %v2285 = vmul.f32 %v2274, %v2202
    %v2286 = vsel %vm585, %v2285, 0.0
    %2287 = vadd.xlane.f32.xlu0 %v2286
    %v2288 = vpop.xlane.xlu0 %2287
    %v2289 = vmul.f32 %v2274, %v2203
    %v2290 = vsel %vm585, %v2289, 0.0
    %2291 = vadd.xlane.f32.xlu0 %v2290
    %v2292 = vpop.xlane.xlu0 %2291
    %v2293 = vmax.f32 %v2280, %v2284
    %v2294 = vmax.f32 %v2293, %v2288
    %v2295 = vmax.f32 %v2294, %v2292
    %v2296 = vsub.f32 %v2280, %v2295
    %v2297 = vmul.f32 %v2296, 1.442695
    %v2298 = vpow.pop %v2297
    %v2299 = vsub.f32 %v2284, %v2295
    %v2300 = vmul.f32 %v2299, 1.442695
    %v2301 = vpow.pop %v2300
    %v2302 = vsub.f32 %v2288, %v2295
    %v2303 = vmul.f32 %v2302, 1.442695
    %v2304 = vpow.pop %v2303
    %v2305 = vsub.f32 %v2292, %v2295
    %v2306 = vmul.f32 %v2305, 1.442695
    %v2307 = vpow.pop %v2306
    %v2308 = vmul.f32 %v2298, %v2200
    %v2309 = vadd.f32 %v2298, %v2301
    %v2310 = vmul.f32 %v2301, %v2201
    %v2311 = vadd.f32 %v2308, %v2310
    %v2312 = vadd.f32 %v2309, %v2304
    %v2313 = vmul.f32 %v2304, %v2202
    %v2314 = vadd.f32 %v2311, %v2313
    %v2315 = vadd.f32 %v2312, %v2307
    %v2316 = vmul.f32 %v2307, %v2203
    %v2317 = vadd.f32 %v2314, %v2316
    %v2318 = vrcp.pop %v2315
    %v2319 = vmul.f32 %v2317, %v2318
    %v2321 = vsel %vm167, %v2319, 0
    %2323 = vmatprep.subr.mxu0 0.0
    %2324 = vmatpush1.msra.mxu0 %v358
    %2325 = vmatprep.subr.mxu0 0.0
    %2326 = vmatpush1.msra.mxu0 %v359
    %2327 = vmatprep.subr.mxu0 0.0
    %2328 = vmatpush1.msra.mxu0 %v360
    %2329 = vmatprep.subr.mxu0 0.0
    %2330 = vmatpush1.msra.mxu0 %v361
    %2331 = vmatprep.subr.mxu0 0.0
    %2332 = vmatpush1.msra.mxu0 %v362
    %2333 = vmatprep.subr.mxu0 0.0
    %2334 = vmatpush1.msra.mxu0 %v363
    %2335 = vmatprep.subr.mxu0 0.0
    %2336 = vmatpush1.msra.mxu0 %v599
    %2337 = vmatprep.subr.mxu0 0.0
    %2338 = vmatpush1.msra.mxu0 0.0
    %2339 = vmatprep.subr.mxu0 0.0
    %2340 = vmatpush1.msra.mxu0 0.0
    %2341 = vmatprep.subr.mxu0 0.0
    %2342 = vmatpush1.msra.mxu0 0.0
    %2343 = vmatprep.subr.mxu0 0.0
    %2344 = vmatpush1.msra.mxu0 0.0
    %2345 = vmatprep.subr.mxu0 0.0
    %2346 = vmatpush1.msra.mxu0 0.0
    %2347 = vmatprep.subr.mxu0 0.0
    %2348 = vmatpush1.msra.mxu0 0.0
    %2349 = vmatprep.subr.mxu0 0.0
    %2350 = vmatpush1.msra.mxu0 0.0
    %2351 = vmatprep.subr.mxu0 0.0
    %2352 = vmatpush1.msra.mxu0 0.0
    %2353 = vmatprep.subr.mxu0 0.0
    %2354 = vmatpush1.msra.mxu0 0.0
    %2355 = vmatprep.subr.mxu0 0.0
    %2356 = vmatpush1.msra.mxu0 0.0
    %2357 = vmatprep.subr.mxu0 0.0
    %2358 = vmatpush1.msra.mxu0 0.0
    %2359 = vmatprep.subr.mxu0 0.0
    %2360 = vmatpush1.msra.mxu0 0.0
    %2361 = vmatprep.subr.mxu0 0.0
    %2362 = vmatpush1.msra.mxu0 0.0
    %2363 = vmatprep.subr.mxu0 0.0
    %2364 = vmatpush1.msra.mxu0 0.0
    %2365 = vmatprep.subr.mxu0 0.0
    %2366 = vmatpush1.msra.mxu0 0.0
    %2367 = vmatprep.subr.mxu0 0.0
    %2368 = vmatpush1.msra.mxu0 0.0
    %2369 = vmatprep.subr.mxu0 0.0
    %2370 = vmatpush1.msra.mxu0 0.0
    %2371 = vmatprep.subr.mxu0 0.0
    %2372 = vmatpush1.msra.mxu0 0.0
    %2373 = vmatprep.subr.mxu0 0.0
    %2374 = vmatpush1.msra.mxu0 0.0
    %2375 = vmatprep.subr.mxu0 0.0
    %2376 = vmatpush1.msra.mxu0 0.0
    %2377 = vmatprep.subr.mxu0 0.0
    %2378 = vmatpush1.msra.mxu0 0.0
    %2379 = vmatprep.subr.mxu0 0.0
    %2380 = vmatpush1.msra.mxu0 0.0
    %2381 = vmatprep.subr.mxu0 0.0
    %2382 = vmatpush1.msra.mxu0 0.0
    %2383 = vmatprep.subr.mxu0 0.0
    %2384 = vmatpush1.msra.mxu0 0.0
    %2385 = vmatprep.subr.mxu0 0.0
    %2386 = vmatpush1.msra.mxu0 0.0
    %2387 = vmatprep.mubr.f32.mxu0 0.0
    %2388 = vmatmul.mubr.f32.gmra.mrb[0].mxu0 %v2321
    %v2389 = vpop.f32.mrb[0].mxu0
    %v2390 = vadd.f32 %v388, %v2389
    %v2391 = vpop.f32.mrb[0].mxu0
    %2392 = vdwg.mxu0
    %v2393 = vsel %vm585, %v2390, 0.0
    %2394 = vadd.xlane.f32.xlu0 %v2393
    %v2395 = vpop.xlane.xlu0 %2394
    %v2396 = vmul.f32 %v2395, %v180
    %v2397 = vsub.f32 %v2390, %v2396
    %v2398 = vmul.f32 %v2397, %v2397
    %v2399 = vsel %vm585, %v2398, 0.0
    %2400 = vadd.xlane.f32.xlu0 %v2399
    %v2401 = vpop.xlane.xlu0 %2400
    %v2402 = vmul.f32 %v2401, %v180
    %v2403 = vadd.f32 %v2402, 1e-05
    %v2404 = vrsqrt.pop %v2403
    %v2405 = vmul.f32 %v2397, %v2404
    %v2406 = vmul.f32 %v2405, %v392
    %v2407 = vadd.f32 %v2406, %v396
    %v2409 = vsel %vm167, %v2407, 0
    %2411 = vmatprep.subr.mxu0 0.0
    %2412 = vmatpush1.msra.mxu0 %v366
    %2413 = vmatprep.subr.mxu0 0.0
    %2414 = vmatpush1.msra.mxu0 %v367
    %2415 = vmatprep.subr.mxu0 0.0
    %2416 = vmatpush1.msra.mxu0 %v368
    %2417 = vmatprep.subr.mxu0 0.0
    %2418 = vmatpush1.msra.mxu0 %v369
    %2419 = vmatprep.subr.mxu0 0.0
    %2420 = vmatpush1.msra.mxu0 %v370
    %2421 = vmatprep.subr.mxu0 0.0
    %2422 = vmatpush1.msra.mxu0 %v371
    %2423 = vmatprep.subr.mxu0 0.0
    %2424 = vmatpush1.msra.mxu0 %v690
    %2425 = vmatprep.subr.mxu0 0.0
    %2426 = vmatpush1.msra.mxu0 0.0
    %2427 = vmatprep.subr.mxu0 0.0
    %2428 = vmatpush1.msra.mxu0 0.0
    %2429 = vmatprep.subr.mxu0 0.0
    %2430 = vmatpush1.msra.mxu0 0.0
    %2431 = vmatprep.subr.mxu0 0.0
    %2432 = vmatpush1.msra.mxu0 0.0
    %2433 = vmatprep.subr.mxu0 0.0
    %2434 = vmatpush1.msra.mxu0 0.0
    %2435 = vmatprep.subr.mxu0 0.0
    %2436 = vmatpush1.msra.mxu0 0.0
    %2437 = vmatprep.subr.mxu0 0.0
    %2438 = vmatpush1.msra.mxu0 0.0
    %2439 = vmatprep.subr.mxu0 0.0
    %2440 = vmatpush1.msra.mxu0 0.0
    %2441 = vmatprep.subr.mxu0 0.0
    %2442 = vmatpush1.msra.mxu0 0.0
    %2443 = vmatprep.subr.mxu0 0.0
    %2444 = vmatpush1.msra.mxu0 0.0
    %2445 = vmatprep.subr.mxu0 0.0
    %2446 = vmatpush1.msra.mxu0 0.0
    %2447 = vmatprep.subr.mxu0 0.0
    %2448 = vmatpush1.msra.mxu0 0.0
    %2449 = vmatprep.subr.mxu0 0.0
    %2450 = vmatpush1.msra.mxu0 0.0
    %2451 = vmatprep.subr.mxu0 0.0
    %2452 = vmatpush1.msra.mxu0 0.0
    %2453 = vmatprep.subr.mxu0 0.0
    %2454 = vmatpush1.msra.mxu0 0.0
    %2455 = vmatprep.subr.mxu0 0.0
    %2456 = vmatpush1.msra.mxu0 0.0
    %2457 = vmatprep.subr.mxu0 0.0
    %2458 = vmatpush1.msra.mxu0 0.0
    %2459 = vmatprep.subr.mxu0 0.0
    %2460 = vmatpush1.msra.mxu0 0.0
    %2461 = vmatprep.subr.mxu0 0.0
    %2462 = vmatpush1.msra.mxu0 0.0
    %2463 = vmatprep.subr.mxu0 0.0
    %2464 = vmatpush1.msra.mxu0 0.0
    %2465 = vmatprep.subr.mxu0 0.0
    %2466 = vmatpush1.msra.mxu0 0.0
    %2467 = vmatprep.subr.mxu0 0.0
    %2468 = vmatpush1.msra.mxu0 0.0
    %2469 = vmatprep.subr.mxu0 0.0
    %2470 = vmatpush1.msra.mxu0 0.0
    %2471 = vmatprep.subr.mxu0 0.0
    %2472 = vmatpush1.msra.mxu0 0.0
    %2473 = vmatprep.subr.mxu0 0.0
    %2474 = vmatpush1.msra.mxu0 0.0
    %2475 = vmatprep.mubr.f32.mxu0 0.0
    %2476 = vmatmul.mubr.f32.gmra.mrb[0].mxu0 %v2409
    %v2477 = vpop.f32.mrb[0].mxu0
    %v2478 = vadd.f32 %v400, %v2477
    %v2479 = vpop.f32.mrb[0].mxu0
    %2480 = vdwg.mxu0
    %v2483 = vunpack.c.l.s4 1966171168
    %v2484 = vunpack.c.0.s8 %v2483
    %v2485 = vlaneseq
    %v2486 = vshrl.u32 %v2485, 7
    %v2487 = vsub.s32 %v2484, %v2486
    %v2488 = vrot.slane %v2478, %v2487
    %v2489 = vcombine.high %v2488, %v2488
    %v2491 = vunpack.c.l.s4 1966171168
    %v2492 = vunpack.c.0.s8 %v2491
    %v2493 = vlaneseq
    %v2494 = vshrl.u32 %v2493, 7
    %v2495 = vsub.s32 %v2492, %v2494
    %v2496 = vrot.slane %v2488, %v2495
    %v2498 = vunpack.c.l.s4 1966171168
    %v2499 = vunpack.c.0.s8 %v2498
    %v2500 = vlaneseq
    %v2501 = vshrl.u32 %v2500, 7
    %v2502 = vsub.s32 %v2499, %v2501
    %v2503 = vrot.slane %v2489, %v2502
    %v2504 = vlaneseq
    %v2505 = vshrl.u32 %v2504, 7
    %v2506 = vsub.s32 0, %v2505
    %v2507 = vrot.slane %v2496, %v2506
    %v2508 = vlaneseq
    %v2509 = vshrl.u32 %v2508, 7
    %v2510 = vsub.s32 0, %v2509
    %v2511 = vrot.slane %v2503, %v2510
    %v2514 = vmul.f32 %v2507, %v233
    %v2515 = vmul.f32 %v2507, %v234
    %v2516 = vmul.f32 %v2511, %v235
    %v2517 = vmul.f32 %v2511, %v236
    %v2518 = vsel %vm167, %v2514, 0.0
    %2519 = vadd.xlane.f32.xlu0 %v2518
    %v2520 = vpop.xlane.xlu0 %2519
    %v2521 = vsel %vm167, %v2515, 0.0
    %2522 = vadd.xlane.f32.xlu0 %v2521
    %v2523 = vpop.xlane.xlu0 %2522
    %v2524 = vsel %vm167, %v2516, 0.0
    %2525 = vadd.xlane.f32.xlu0 %v2524
    %v2526 = vpop.xlane.xlu0 %2525
    %v2527 = vsel %vm167, %v2517, 0.0
    %2528 = vadd.xlane.f32.xlu0 %v2527
    %v2529 = vpop.xlane.xlu0 %2528
    %v2534 = vlaneseq
    %v2535 = vshrl.u32 %v2534, 7
    %v2536 = vsub.s32 %v816, %v2535
    %v2537 = vrot.slane %v2520, %v2536
    %v2538 = vlaneseq
    %v2539 = vshrl.u32 %v2538, 7
    %v2540 = vsub.s32 %v821, %v2539
    %v2541 = vrot.slane %v2523, %v2540
    %v2542 = vsel %vm826, %v2541, %v2537
    %v2543 = vlaneseq
    %v2544 = vshrl.u32 %v2543, 7
    %v2545 = vsub.s32 %v816, %v2544
    %v2546 = vrot.slane %v2526, %v2545
    %v2547 = vlaneseq
    %v2548 = vshrl.u32 %v2547, 7
    %v2549 = vsub.s32 %v821, %v2548
    %v2550 = vrot.slane %v2529, %v2549
    %v2551 = vsel %vm826, %v2550, %v2546
    %v2552 = vsel %vm837, %v2551, %v2542
    %v2554 = vsel %vm840, %v2552, -inf
    %2555 = vmax.xlane.f32.xlu0 %v2554
    %v2556 = vpop.xlane.xlu0 %2555
    %v2558 = vlaneseq
    %v2559 = vshrl.u32 %v2558, 7
    %v2560 = vsub.s32 0, %v2559
    %v2561 = vrot.slane %v2556, %v2560
    %v2562 = vlaneseq
    %v2563 = vshrl.u32 %v2562, 7
    %v2564 = vsub.s32 1, %v2563
    %v2565 = vrot.slane %v2556, %v2564
    %v2568 = vsub.f32 %v2520, %v2561
    %v2569 = vsub.f32 %v2523, %v2561
    %v2570 = vsub.f32 %v2526, %v2565
    %v2571 = vsub.f32 %v2529, %v2565
    %v2572 = vmul.f32 %v2568, 1.442695
    %v2573 = vpow.pop %v2572
    %v2574 = vmul.f32 %v2569, 1.442695
    %v2575 = vpow.pop %v2574
    %v2576 = vmul.f32 %v2570, 1.442695
    %v2577 = vpow.pop %v2576
    %v2578 = vmul.f32 %v2571, 1.442695
    %v2579 = vpow.pop %v2578
    %2584 = vset.pattern.permute.xlu0 0
    %2585 = vperm.xlu0 %2584, %v2573
    %v2586 = vpop.permute.xlu0 %2585
    %2587 = vset.pattern.permute.xlu0 0
    %2588 = vperm.xlu0 %2587, %v2575
    %v2589 = vpop.permute.xlu0 %2588
    %2590 = vset.pattern.permute.xlu0 0
    %2591 = vperm.xlu0 %2590, %v2577
    %v2592 = vpop.permute.xlu0 %2591
    %2593 = vset.pattern.permute.xlu0 0
    %2594 = vperm.xlu0 %2593, %v2579
    %v2595 = vpop.permute.xlu0 %2594
    %v2596 = vlaneseq
    %v2597 = vshrl.u32 %v2596, 7
    %v2598 = vsub.s32 %v816, %v2597
    %v2599 = vrot.slane %v2586, %v2598
    %v2600 = vlaneseq
    %v2601 = vshrl.u32 %v2600, 7
    %v2602 = vsub.s32 %v821, %v2601
    %v2603 = vrot.slane %v2589, %v2602
    %v2604 = vsel %vm826, %v2603, %v2599
    %v2605 = vlaneseq
    %v2606 = vshrl.u32 %v2605, 7
    %v2607 = vsub.s32 %v816, %v2606
    %v2608 = vrot.slane %v2592, %v2607
    %v2609 = vlaneseq
    %v2610 = vshrl.u32 %v2609, 7
    %v2611 = vsub.s32 %v821, %v2610
    %v2612 = vrot.slane %v2595, %v2611
    %v2613 = vsel %vm826, %v2612, %v2608
    %v2614 = vsel %vm837, %v2613, %v2604
    %v2616 = vsel %vm840, %v2614, 0.0
    %2617 = vadd.xlane.f32.xlu0 %v2616
    %v2618 = vpop.xlane.xlu0 %2617
    %v2620 = vlaneseq
    %v2621 = vshrl.u32 %v2620, 7
    %v2622 = vsub.s32 0, %v2621
    %v2623 = vrot.slane %v2618, %v2622
    %v2624 = vlaneseq
    %v2625 = vshrl.u32 %v2624, 7
    %v2626 = vsub.s32 1, %v2625
    %v2627 = vrot.slane %v2618, %v2626
    %v2630 = vrcp.pop %v2623
    %v2631 = vmul.f32 %v2573, %v2630
    %v2632 = vmul.f32 %v2575, %v2630
    %v2633 = vrcp.pop %v2627
    %v2634 = vmul.f32 %v2577, %v2633
    %v2635 = vmul.f32 %v2579, %v2633
    %2637 = vset.pattern.permute.xlu0 0
    %2638 = vperm.xlu0 %2637, %v2631
    %v2639 = vpop.permute.xlu0 %2638
    %2642 = vset.pattern.permute.xlu0 0
    %2643 = vperm.xlu0 %2642, %v2632
    %v2644 = vpop.permute.xlu0 %2643
    %2647 = vset.pattern.permute.xlu0 0
    %2648 = vperm.xlu0 %2647, %v2634
    %v2649 = vpop.permute.xlu0 %2648
    %2652 = vset.pattern.permute.xlu0 0
    %2653 = vperm.xlu0 %2652, %v2635
    %v2654 = vpop.permute.xlu0 %2653
    %v2656 = vmul.f32 %v2639, %v332
    %v2657 = vmul.f32 %v2644, %v337
    %v2658 = vmul.f32 %v2649, %v342
    %v2659 = vmul.f32 %v2654, %v347
    %v2660 = vsel %vm167, %v2656, 0.0
    %v2661 = vsel %vm167, %v2657, 0.0
    %v2662 = vadd.f32 %v2660, %v2661
    %v2663 = vrot.slane %v2662, 4
    %v2664 = vadd.f32 %v2662, %v2663
    %v2665 = vrot.slane %v2664, 2
    %v2666 = vadd.f32 %v2664, %v2665
    %v2667 = vrot.slane %v2666, 1
    %v2668 = vadd.f32 %v2666, %v2667
    %v2669 = vsel %vm167, %v2658, 0.0
    %v2670 = vsel %vm167, %v2659, 0.0
    %v2671 = vadd.f32 %v2669, %v2670
    %v2672 = vrot.slane %v2671, 4
    %v2673 = vadd.f32 %v2671, %v2672
    %v2674 = vrot.slane %v2673, 2
    %v2675 = vadd.f32 %v2673, %v2674
    %v2676 = vrot.slane %v2675, 1
    %v2677 = vadd.f32 %v2675, %v2676
    %vm2678 = vcmp.gt.f32.partialorder %v2668, 0.0
    %vm2679 = vcmp.gt.f32.partialorder %v2677, 0.0
    %v2680 = vmin.f32 %v2668, 0.0
    %v2681 = vmin.f32 %v2677, 0.0
    %v2682 = vmul.f32 %v2680, 1.442695
    %v2683 = vpow.pop %v2682
    %v2684 = vmul.f32 %v2681, 1.442695
    %v2685 = vpow.pop %v2684
    %v2686 = vsub.f32 %v2683, 1.0
    %v2687 = vsub.f32 %v2685, 1.0
    %v2688 = vsel %vm2678, %v2668, %v2686
    %v2689 = vsel %vm2679, %v2677, %v2687
    %v2692 = vsel %vm837, %v2689, %v2688
    %v2693 = vsel %vm167, %v2692, 0
    %2695 = vmatprep.subr.mxu0 0.0
    %2696 = vmatpush1.msra.mxu0 %v374
    %2697 = vmatprep.subr.mxu0 0.0
    %2698 = vmatpush1.msra.mxu0 %v375
    %2699 = vmatprep.subr.mxu0 0.0
    %2700 = vmatpush1.msra.mxu0 %v376
    %2701 = vmatprep.subr.mxu0 0.0
    %2702 = vmatpush1.msra.mxu0 %v377
    %2703 = vmatprep.subr.mxu0 0.0
    %2704 = vmatpush1.msra.mxu0 %v378
    %2705 = vmatprep.subr.mxu0 0.0
    %2706 = vmatpush1.msra.mxu0 %v379
    %2707 = vmatprep.subr.mxu0 0.0
    %2708 = vmatpush1.msra.mxu0 %v983
    %2709 = vmatprep.subr.mxu0 0.0
    %2710 = vmatpush1.msra.mxu0 0.0
    %2711 = vmatprep.subr.mxu0 0.0
    %2712 = vmatpush1.msra.mxu0 0.0
    %2713 = vmatprep.subr.mxu0 0.0
    %2714 = vmatpush1.msra.mxu0 0.0
    %2715 = vmatprep.subr.mxu0 0.0
    %2716 = vmatpush1.msra.mxu0 0.0
    %2717 = vmatprep.subr.mxu0 0.0
    %2718 = vmatpush1.msra.mxu0 0.0
    %2719 = vmatprep.subr.mxu0 0.0
    %2720 = vmatpush1.msra.mxu0 0.0
    %2721 = vmatprep.subr.mxu0 0.0
    %2722 = vmatpush1.msra.mxu0 0.0
    %2723 = vmatprep.subr.mxu0 0.0
    %2724 = vmatpush1.msra.mxu0 0.0
    %2725 = vmatprep.subr.mxu0 0.0
    %2726 = vmatpush1.msra.mxu0 0.0
    %2727 = vmatprep.subr.mxu0 0.0
    %2728 = vmatpush1.msra.mxu0 0.0
    %2729 = vmatprep.subr.mxu0 0.0
    %2730 = vmatpush1.msra.mxu0 0.0
    %2731 = vmatprep.subr.mxu0 0.0
    %2732 = vmatpush1.msra.mxu0 0.0
    %2733 = vmatprep.subr.mxu0 0.0
    %2734 = vmatpush1.msra.mxu0 0.0
    %2735 = vmatprep.subr.mxu0 0.0
    %2736 = vmatpush1.msra.mxu0 0.0
    %2737 = vmatprep.subr.mxu0 0.0
    %2738 = vmatpush1.msra.mxu0 0.0
    %2739 = vmatprep.subr.mxu0 0.0
    %2740 = vmatpush1.msra.mxu0 0.0
    %2741 = vmatprep.subr.mxu0 0.0
    %2742 = vmatpush1.msra.mxu0 0.0
    %2743 = vmatprep.subr.mxu0 0.0
    %2744 = vmatpush1.msra.mxu0 0.0
    %2745 = vmatprep.subr.mxu0 0.0
    %2746 = vmatpush1.msra.mxu0 0.0
    %2747 = vmatprep.subr.mxu0 0.0
    %2748 = vmatpush1.msra.mxu0 0.0
    %2749 = vmatprep.subr.mxu0 0.0
    %2750 = vmatpush1.msra.mxu0 0.0
    %2751 = vmatprep.subr.mxu0 0.0
    %2752 = vmatpush1.msra.mxu0 0.0
    %2753 = vmatprep.subr.mxu0 0.0
    %2754 = vmatpush1.msra.mxu0 0.0
    %2755 = vmatprep.subr.mxu0 0.0
    %2756 = vmatpush1.msra.mxu0 0.0
    %2757 = vmatprep.subr.mxu0 0.0
    %2758 = vmatpush1.msra.mxu0 0.0
    %2759 = vmatprep.mubr.f32.mxu0 0.0
    %2760 = vmatmul.mubr.f32.gmra.mrb[0].mxu0 %v2693
    %v2761 = vpop.f32.mrb[0].mxu0
    %v2762 = vadd.f32 %v404, %v2761
    %v2763 = vpop.f32.mrb[0].mxu0
    %2764 = vdwg.mxu0
    %v2765 = vadd.f32 %v2762, %v2199
    %v2766 = vsel %vm585, %v2765, 0.0
    %2767 = vadd.xlane.f32.xlu0 %v2766
    %v2768 = vpop.xlane.xlu0 %2767
    %v2769 = vmul.f32 %v2768, %v180
    %v2770 = vsub.f32 %v2765, %v2769
    %v2771 = vmul.f32 %v2770, %v2770
    %v2772 = vsel %vm585, %v2771, 0.0
    %2773 = vadd.xlane.f32.xlu0 %v2772
    %v2774 = vpop.xlane.xlu0 %2773
    %v2775 = vmul.f32 %v2774, %v180
    %v2776 = vadd.f32 %v2775, 1e-05
    %v2777 = vrsqrt.pop %v2776
    %v2778 = vmul.f32 %v2770, %v2777
    %v2779 = vmul.f32 %v2778, %v408
    %v2780 = vadd.f32 %v2779, %v412
    %v2781 = vadd.f32 %v2780, %v489
    %v2782 = vadd.f32 %v506, %v420
    %v2783 = vadd.f32 %v1071, %v424
    %v2784 = vadd.f32 %v1629, %v428
    %v2785 = vadd.f32 %v2199, %v432
    %v2786 = vadd.f32 %v2781, %v436
    %v2788 = vsel %vm167, %v2781, 0
    %2790 = vmatprep.subr.mxu0 0.0
    %2791 = vmatpush1.msra.mxu0 %v350
    %2792 = vmatprep.subr.mxu0 0.0
    %2793 = vmatpush1.msra.mxu0 %v351
    %2794 = vmatprep.subr.mxu0 0.0
    %2795 = vmatpush1.msra.mxu0 %v352
    %2796 = vmatprep.subr.mxu0 0.0
    %2797 = vmatpush1.msra.mxu0 %v353
    %2798 = vmatprep.subr.mxu0 0.0
    %2799 = vmatpush1.msra.mxu0 %v354
    %2800 = vmatprep.subr.mxu0 0.0
    %2801 = vmatpush1.msra.mxu0 %v355
    %2802 = vmatprep.subr.mxu0 0.0
    %2803 = vmatpush1.msra.mxu0 %v512
    %2804 = vmatprep.subr.mxu0 0.0
    %2805 = vmatpush1.msra.mxu0 0.0
    %2806 = vmatprep.subr.mxu0 0.0
    %2807 = vmatpush1.msra.mxu0 0.0
    %2808 = vmatprep.subr.mxu0 0.0
    %2809 = vmatpush1.msra.mxu0 0.0
    %2810 = vmatprep.subr.mxu0 0.0
    %2811 = vmatpush1.msra.mxu0 0.0
    %2812 = vmatprep.subr.mxu0 0.0
    %2813 = vmatpush1.msra.mxu0 0.0
    %2814 = vmatprep.subr.mxu0 0.0
    %2815 = vmatpush1.msra.mxu0 0.0
    %2816 = vmatprep.subr.mxu0 0.0
    %2817 = vmatpush1.msra.mxu0 0.0
    %2818 = vmatprep.subr.mxu0 0.0
    %2819 = vmatpush1.msra.mxu0 0.0
    %2820 = vmatprep.subr.mxu0 0.0
    %2821 = vmatpush1.msra.mxu0 0.0
    %2822 = vmatprep.subr.mxu0 0.0
    %2823 = vmatpush1.msra.mxu0 0.0
    %2824 = vmatprep.subr.mxu0 0.0
    %2825 = vmatpush1.msra.mxu0 0.0
    %2826 = vmatprep.subr.mxu0 0.0
    %2827 = vmatpush1.msra.mxu0 0.0
    %2828 = vmatprep.subr.mxu0 0.0
    %2829 = vmatpush1.msra.mxu0 0.0
    %2830 = vmatprep.subr.mxu0 0.0
    %2831 = vmatpush1.msra.mxu0 0.0
    %2832 = vmatprep.subr.mxu0 0.0
    %2833 = vmatpush1.msra.mxu0 0.0
    %2834 = vmatprep.subr.mxu0 0.0
    %2835 = vmatpush1.msra.mxu0 0.0
    %2836 = vmatprep.subr.mxu0 0.0
    %2837 = vmatpush1.msra.mxu0 0.0
    %2838 = vmatprep.subr.mxu0 0.0
    %2839 = vmatpush1.msra.mxu0 0.0
    %2840 = vmatprep.subr.mxu0 0.0
    %2841 = vmatpush1.msra.mxu0 0.0
    %2842 = vmatprep.subr.mxu0 0.0
    %2843 = vmatpush1.msra.mxu0 0.0
    %2844 = vmatprep.subr.mxu0 0.0
    %2845 = vmatpush1.msra.mxu0 0.0
    %2846 = vmatprep.subr.mxu0 0.0
    %2847 = vmatpush1.msra.mxu0 0.0
    %2848 = vmatprep.subr.mxu0 0.0
    %2849 = vmatpush1.msra.mxu0 0.0
    %2850 = vmatprep.subr.mxu0 0.0
    %2851 = vmatpush1.msra.mxu0 0.0
    %2852 = vmatprep.subr.mxu0 0.0
    %2853 = vmatpush1.msra.mxu0 0.0
    %2854 = vmatprep.mubr.f32.mxu0 0.0
    %2855 = vmatmul.mubr.f32.gmra.mrb[0].mxu0 %v2788
    %v2856 = vpop.f32.mrb[0].mxu0
    %v2857 = vadd.f32 %v384, %v2856
    %v2858 = vpop.f32.mrb[0].mxu0
    %2859 = vdwg.mxu0
    %v2860 = vmul.f32 %v2857, %v2782
    %v2861 = vsel %vm585, %v2860, 0.0
    %2862 = vadd.xlane.f32.xlu0 %v2861
    %v2863 = vpop.xlane.xlu0 %2862
    %v2864 = vmul.f32 %v2857, %v2783
    %v2865 = vsel %vm585, %v2864, 0.0
    %2866 = vadd.xlane.f32.xlu0 %v2865
    %v2867 = vpop.xlane.xlu0 %2866
    %v2868 = vmul.f32 %v2857, %v2784
    %v2869 = vsel %vm585, %v2868, 0.0
    %2870 = vadd.xlane.f32.xlu0 %v2869
    %v2871 = vpop.xlane.xlu0 %2870
    %v2872 = vmul.f32 %v2857, %v2785
    %v2873 = vsel %vm585, %v2872, 0.0
    %2874 = vadd.xlane.f32.xlu0 %v2873
    %v2875 = vpop.xlane.xlu0 %2874
    %v2876 = vmul.f32 %v2857, %v2786
    %v2877 = vsel %vm585, %v2876, 0.0
    %2878 = vadd.xlane.f32.xlu0 %v2877
    %v2879 = vpop.xlane.xlu0 %2878
    %v2880 = vmax.f32 %v2863, %v2867
    %v2881 = vmax.f32 %v2880, %v2871
    %v2882 = vmax.f32 %v2881, %v2875
    %v2883 = vmax.f32 %v2882, %v2879
    %v2884 = vsub.f32 %v2863, %v2883
    %v2885 = vmul.f32 %v2884, 1.442695
    %v2886 = vpow.pop %v2885
    %v2887 = vsub.f32 %v2867, %v2883
    %v2888 = vmul.f32 %v2887, 1.442695
    %v2889 = vpow.pop %v2888
    %v2890 = vsub.f32 %v2871, %v2883
    %v2891 = vmul.f32 %v2890, 1.442695
    %v2892 = vpow.pop %v2891
    %v2893 = vsub.f32 %v2875, %v2883
    %v2894 = vmul.f32 %v2893, 1.442695
    %v2895 = vpow.pop %v2894
    %v2896 = vsub.f32 %v2879, %v2883
    %v2897 = vmul.f32 %v2896, 1.442695
    %v2898 = vpow.pop %v2897
    %v2899 = vmul.f32 %v2886, %v2782
    %v2900 = vadd.f32 %v2886, %v2889
    %v2901 = vmul.f32 %v2889, %v2783
    %v2902 = vadd.f32 %v2899, %v2901
    %v2903 = vadd.f32 %v2900, %v2892
    %v2904 = vmul.f32 %v2892, %v2784
    %v2905 = vadd.f32 %v2902, %v2904
    %v2906 = vadd.f32 %v2903, %v2895
    %v2907 = vmul.f32 %v2895, %v2785
    %v2908 = vadd.f32 %v2905, %v2907
    %v2909 = vadd.f32 %v2906, %v2898
    %v2910 = vmul.f32 %v2898, %v2786
    %v2911 = vadd.f32 %v2908, %v2910
    %v2912 = vrcp.pop %v2909
    %v2913 = vmul.f32 %v2911, %v2912
    %v2915 = vsel %vm167, %v2913, 0
    %2917 = vmatprep.subr.mxu0 0.0
    %2918 = vmatpush1.msra.mxu0 %v358
    %2919 = vmatprep.subr.mxu0 0.0
    %2920 = vmatpush1.msra.mxu0 %v359
    %2921 = vmatprep.subr.mxu0 0.0
    %2922 = vmatpush1.msra.mxu0 %v360
    %2923 = vmatprep.subr.mxu0 0.0
    %2924 = vmatpush1.msra.mxu0 %v361
    %2925 = vmatprep.subr.mxu0 0.0
    %2926 = vmatpush1.msra.mxu0 %v362
    %2927 = vmatprep.subr.mxu0 0.0
    %2928 = vmatpush1.msra.mxu0 %v363
    %2929 = vmatprep.subr.mxu0 0.0
    %2930 = vmatpush1.msra.mxu0 %v599
    %2931 = vmatprep.subr.mxu0 0.0
    %2932 = vmatpush1.msra.mxu0 0.0
    %2933 = vmatprep.subr.mxu0 0.0
    %2934 = vmatpush1.msra.mxu0 0.0
    %2935 = vmatprep.subr.mxu0 0.0
    %2936 = vmatpush1.msra.mxu0 0.0
    %2937 = vmatprep.subr.mxu0 0.0
    %2938 = vmatpush1.msra.mxu0 0.0
    %2939 = vmatprep.subr.mxu0 0.0
    %2940 = vmatpush1.msra.mxu0 0.0
    %2941 = vmatprep.subr.mxu0 0.0
    %2942 = vmatpush1.msra.mxu0 0.0
    %2943 = vmatprep.subr.mxu0 0.0
    %2944 = vmatpush1.msra.mxu0 0.0
    %2945 = vmatprep.subr.mxu0 0.0
    %2946 = vmatpush1.msra.mxu0 0.0
    %2947 = vmatprep.subr.mxu0 0.0
    %2948 = vmatpush1.msra.mxu0 0.0
    %2949 = vmatprep.subr.mxu0 0.0
    %2950 = vmatpush1.msra.mxu0 0.0
    %2951 = vmatprep.subr.mxu0 0.0
    %2952 = vmatpush1.msra.mxu0 0.0
    %2953 = vmatprep.subr.mxu0 0.0
    %2954 = vmatpush1.msra.mxu0 0.0
    %2955 = vmatprep.subr.mxu0 0.0
    %2956 = vmatpush1.msra.mxu0 0.0
    %2957 = vmatprep.subr.mxu0 0.0
    %2958 = vmatpush1.msra.mxu0 0.0
    %2959 = vmatprep.subr.mxu0 0.0
    %2960 = vmatpush1.msra.mxu0 0.0
    %2961 = vmatprep.subr.mxu0 0.0
    %2962 = vmatpush1.msra.mxu0 0.0
    %2963 = vmatprep.subr.mxu0 0.0
    %2964 = vmatpush1.msra.mxu0 0.0
    %2965 = vmatprep.subr.mxu0 0.0
    %2966 = vmatpush1.msra.mxu0 0.0
    %2967 = vmatprep.subr.mxu0 0.0
    %2968 = vmatpush1.msra.mxu0 0.0
    %2969 = vmatprep.subr.mxu0 0.0
    %2970 = vmatpush1.msra.mxu0 0.0
    %2971 = vmatprep.subr.mxu0 0.0
    %2972 = vmatpush1.msra.mxu0 0.0
    %2973 = vmatprep.subr.mxu0 0.0
    %2974 = vmatpush1.msra.mxu0 0.0
    %2975 = vmatprep.subr.mxu0 0.0
    %2976 = vmatpush1.msra.mxu0 0.0
    %2977 = vmatprep.subr.mxu0 0.0
    %2978 = vmatpush1.msra.mxu0 0.0
    %2979 = vmatprep.subr.mxu0 0.0
    %2980 = vmatpush1.msra.mxu0 0.0
    %2981 = vmatprep.mubr.f32.mxu0 0.0
    %2982 = vmatmul.mubr.f32.gmra.mrb[0].mxu0 %v2915
    %v2983 = vpop.f32.mrb[0].mxu0
    %v2984 = vadd.f32 %v388, %v2983
    %v2985 = vpop.f32.mrb[0].mxu0
    %2986 = vdwg.mxu0
    %v2987 = vsel %vm585, %v2984, 0.0
    %2988 = vadd.xlane.f32.xlu0 %v2987
    %v2989 = vpop.xlane.xlu0 %2988
    %v2990 = vmul.f32 %v2989, %v180
    %v2991 = vsub.f32 %v2984, %v2990
    %v2992 = vmul.f32 %v2991, %v2991
    %v2993 = vsel %vm585, %v2992, 0.0
    %2994 = vadd.xlane.f32.xlu0 %v2993
    %v2995 = vpop.xlane.xlu0 %2994
    %v2996 = vmul.f32 %v2995, %v180
    %v2997 = vadd.f32 %v2996, 1e-05
    %v2998 = vrsqrt.pop %v2997
    %v2999 = vmul.f32 %v2991, %v2998
    %v3000 = vmul.f32 %v2999, %v392
    %v3001 = vadd.f32 %v3000, %v396
    %v3003 = vsel %vm167, %v3001, 0
    %3005 = vmatprep.subr.mxu0 0.0
    %3006 = vmatpush1.msra.mxu0 %v366
    %3007 = vmatprep.subr.mxu0 0.0
    %3008 = vmatpush1.msra.mxu0 %v367
    %3009 = vmatprep.subr.mxu0 0.0
    %3010 = vmatpush1.msra.mxu0 %v368
    %3011 = vmatprep.subr.mxu0 0.0
    %3012 = vmatpush1.msra.mxu0 %v369
    %3013 = vmatprep.subr.mxu0 0.0
    %3014 = vmatpush1.msra.mxu0 %v370
    %3015 = vmatprep.subr.mxu0 0.0
    %3016 = vmatpush1.msra.mxu0 %v371
    %3017 = vmatprep.subr.mxu0 0.0
    %3018 = vmatpush1.msra.mxu0 %v690
    %3019 = vmatprep.subr.mxu0 0.0
    %3020 = vmatpush1.msra.mxu0 0.0
    %3021 = vmatprep.subr.mxu0 0.0
    %3022 = vmatpush1.msra.mxu0 0.0
    %3023 = vmatprep.subr.mxu0 0.0
    %3024 = vmatpush1.msra.mxu0 0.0
    %3025 = vmatprep.subr.mxu0 0.0
    %3026 = vmatpush1.msra.mxu0 0.0
    %3027 = vmatprep.subr.mxu0 0.0
    %3028 = vmatpush1.msra.mxu0 0.0
    %3029 = vmatprep.subr.mxu0 0.0
    %3030 = vmatpush1.msra.mxu0 0.0
    %3031 = vmatprep.subr.mxu0 0.0
    %3032 = vmatpush1.msra.mxu0 0.0
    %3033 = vmatprep.subr.mxu0 0.0
    %3034 = vmatpush1.msra.mxu0 0.0
    %3035 = vmatprep.subr.mxu0 0.0
    %3036 = vmatpush1.msra.mxu0 0.0
    %3037 = vmatprep.subr.mxu0 0.0
    %3038 = vmatpush1.msra.mxu0 0.0
    %3039 = vmatprep.subr.mxu0 0.0
    %3040 = vmatpush1.msra.mxu0 0.0
    %3041 = vmatprep.subr.mxu0 0.0
    %3042 = vmatpush1.msra.mxu0 0.0
    %3043 = vmatprep.subr.mxu0 0.0
    %3044 = vmatpush1.msra.mxu0 0.0
    %3045 = vmatprep.subr.mxu0 0.0
    %3046 = vmatpush1.msra.mxu0 0.0
    %3047 = vmatprep.subr.mxu0 0.0
    %3048 = vmatpush1.msra.mxu0 0.0
    %3049 = vmatprep.subr.mxu0 0.0
    %3050 = vmatpush1.msra.mxu0 0.0
    %3051 = vmatprep.subr.mxu0 0.0
    %3052 = vmatpush1.msra.mxu0 0.0
    %3053 = vmatprep.subr.mxu0 0.0
    %3054 = vmatpush1.msra.mxu0 0.0
    %3055 = vmatprep.subr.mxu0 0.0
    %3056 = vmatpush1.msra.mxu0 0.0
    %3057 = vmatprep.subr.mxu0 0.0
    %3058 = vmatpush1.msra.mxu0 0.0
    %3059 = vmatprep.subr.mxu0 0.0
    %3060 = vmatpush1.msra.mxu0 0.0
    %3061 = vmatprep.subr.mxu0 0.0
    %3062 = vmatpush1.msra.mxu0 0.0
    %3063 = vmatprep.subr.mxu0 0.0
    %3064 = vmatpush1.msra.mxu0 0.0
    %3065 = vmatprep.subr.mxu0 0.0
    %3066 = vmatpush1.msra.mxu0 0.0
    %3067 = vmatprep.subr.mxu0 0.0
    %3068 = vmatpush1.msra.mxu0 0.0
    %3069 = vmatprep.mubr.f32.mxu0 0.0
    %3070 = vmatmul.mubr.f32.gmra.mrb[0].mxu0 %v3003
    %v3071 = vpop.f32.mrb[0].mxu0
    %v3072 = vadd.f32 %v400, %v3071
    %v3073 = vpop.f32.mrb[0].mxu0
    %3074 = vdwg.mxu0
    %v3077 = vunpack.c.l.s4 1966171168
    %v3078 = vunpack.c.0.s8 %v3077
    %v3079 = vlaneseq
    %v3080 = vshrl.u32 %v3079, 7
    %v3081 = vsub.s32 %v3078, %v3080
    %v3082 = vrot.slane %v3072, %v3081
    %v3083 = vcombine.high %v3082, %v3082
    %v3085 = vunpack.c.l.s4 1966171168
    %v3086 = vunpack.c.0.s8 %v3085
    %v3087 = vlaneseq
    %v3088 = vshrl.u32 %v3087, 7
    %v3089 = vsub.s32 %v3086, %v3088
    %v3090 = vrot.slane %v3082, %v3089
    %v3092 = vunpack.c.l.s4 1966171168
    %v3093 = vunpack.c.0.s8 %v3092
    %v3094 = vlaneseq
    %v3095 = vshrl.u32 %v3094, 7
    %v3096 = vsub.s32 %v3093, %v3095
    %v3097 = vrot.slane %v3083, %v3096
    %v3098 = vlaneseq
    %v3099 = vshrl.u32 %v3098, 7
    %v3100 = vsub.s32 0, %v3099
    %v3101 = vrot.slane %v3090, %v3100
    %v3102 = vlaneseq
    %v3103 = vshrl.u32 %v3102, 7
    %v3104 = vsub.s32 0, %v3103
    %v3105 = vrot.slane %v3097, %v3104
    %v3108 = vmul.f32 %v3101, %v233
    %v3109 = vmul.f32 %v3101, %v234
    %v3110 = vmul.f32 %v3105, %v235
    %v3111 = vmul.f32 %v3105, %v236
    %v3112 = vsel %vm167, %v3108, 0.0
    %3113 = vadd.xlane.f32.xlu0 %v3112
    %v3114 = vpop.xlane.xlu0 %3113
    %v3115 = vsel %vm167, %v3109, 0.0
    %3116 = vadd.xlane.f32.xlu0 %v3115
    %v3117 = vpop.xlane.xlu0 %3116
    %v3118 = vsel %vm167, %v3110, 0.0
    %3119 = vadd.xlane.f32.xlu0 %v3118
    %v3120 = vpop.xlane.xlu0 %3119
    %v3121 = vsel %vm167, %v3111, 0.0
    %3122 = vadd.xlane.f32.xlu0 %v3121
    %v3123 = vpop.xlane.xlu0 %3122
    %v3128 = vlaneseq
    %v3129 = vshrl.u32 %v3128, 7
    %v3130 = vsub.s32 %v816, %v3129
    %v3131 = vrot.slane %v3114, %v3130
    %v3132 = vlaneseq
    %v3133 = vshrl.u32 %v3132, 7
    %v3134 = vsub.s32 %v821, %v3133
    %v3135 = vrot.slane %v3117, %v3134
    %v3136 = vsel %vm826, %v3135, %v3131
    %v3137 = vlaneseq
    %v3138 = vshrl.u32 %v3137, 7
    %v3139 = vsub.s32 %v816, %v3138
    %v3140 = vrot.slane %v3120, %v3139
    %v3141 = vlaneseq
    %v3142 = vshrl.u32 %v3141, 7
    %v3143 = vsub.s32 %v821, %v3142
    %v3144 = vrot.slane %v3123, %v3143
    %v3145 = vsel %vm826, %v3144, %v3140
    %v3146 = vsel %vm837, %v3145, %v3136
    %v3148 = vsel %vm840, %v3146, -inf
    %3149 = vmax.xlane.f32.xlu0 %v3148
    %v3150 = vpop.xlane.xlu0 %3149
    %v3152 = vlaneseq
    %v3153 = vshrl.u32 %v3152, 7
    %v3154 = vsub.s32 0, %v3153
    %v3155 = vrot.slane %v3150, %v3154
    %v3156 = vlaneseq
    %v3157 = vshrl.u32 %v3156, 7
    %v3158 = vsub.s32 1, %v3157
    %v3159 = vrot.slane %v3150, %v3158
    %v3162 = vsub.f32 %v3114, %v3155
    %v3163 = vsub.f32 %v3117, %v3155
    %v3164 = vsub.f32 %v3120, %v3159
    %v3165 = vsub.f32 %v3123, %v3159
    %v3166 = vmul.f32 %v3162, 1.442695
    %v3167 = vpow.pop %v3166
    %v3168 = vmul.f32 %v3163, 1.442695
    %v3169 = vpow.pop %v3168
    %v3170 = vmul.f32 %v3164, 1.442695
    %v3171 = vpow.pop %v3170
    %v3172 = vmul.f32 %v3165, 1.442695
    %v3173 = vpow.pop %v3172
    %3178 = vset.pattern.permute.xlu0 0
    %3179 = vperm.xlu0 %3178, %v3167
    %v3180 = vpop.permute.xlu0 %3179
    %3181 = vset.pattern.permute.xlu0 0
    %3182 = vperm.xlu0 %3181, %v3169
    %v3183 = vpop.permute.xlu0 %3182
    %3184 = vset.pattern.permute.xlu0 0
    %3185 = vperm.xlu0 %3184, %v3171
    %v3186 = vpop.permute.xlu0 %3185
    %3187 = vset.pattern.permute.xlu0 0
    %3188 = vperm.xlu0 %3187, %v3173
    %v3189 = vpop.permute.xlu0 %3188
    %v3190 = vlaneseq
    %v3191 = vshrl.u32 %v3190, 7
    %v3192 = vsub.s32 %v816, %v3191
    %v3193 = vrot.slane %v3180, %v3192
    %v3194 = vlaneseq
    %v3195 = vshrl.u32 %v3194, 7
    %v3196 = vsub.s32 %v821, %v3195
    %v3197 = vrot.slane %v3183, %v3196
    %v3198 = vsel %vm826, %v3197, %v3193
    %v3199 = vlaneseq
    %v3200 = vshrl.u32 %v3199, 7
    %v3201 = vsub.s32 %v816, %v3200
    %v3202 = vrot.slane %v3186, %v3201
    %v3203 = vlaneseq
    %v3204 = vshrl.u32 %v3203, 7
    %v3205 = vsub.s32 %v821, %v3204
    %v3206 = vrot.slane %v3189, %v3205
    %v3207 = vsel %vm826, %v3206, %v3202
    %v3208 = vsel %vm837, %v3207, %v3198
    %v3210 = vsel %vm840, %v3208, 0.0
    %3211 = vadd.xlane.f32.xlu0 %v3210
    %v3212 = vpop.xlane.xlu0 %3211
    %v3214 = vlaneseq
    %v3215 = vshrl.u32 %v3214, 7
    %v3216 = vsub.s32 0, %v3215
    %v3217 = vrot.slane %v3212, %v3216
    %v3218 = vlaneseq
    %v3219 = vshrl.u32 %v3218, 7
    %v3220 = vsub.s32 1, %v3219
    %v3221 = vrot.slane %v3212, %v3220
    %v3224 = vrcp.pop %v3217
    %v3225 = vmul.f32 %v3167, %v3224
    %v3226 = vmul.f32 %v3169, %v3224
    %v3227 = vrcp.pop %v3221
    %v3228 = vmul.f32 %v3171, %v3227
    %v3229 = vmul.f32 %v3173, %v3227
    %3231 = vset.pattern.permute.xlu0 0
    %3232 = vperm.xlu0 %3231, %v3225
    %v3233 = vpop.permute.xlu0 %3232
    %3236 = vset.pattern.permute.xlu0 0
    %3237 = vperm.xlu0 %3236, %v3226
    %v3238 = vpop.permute.xlu0 %3237
    %3241 = vset.pattern.permute.xlu0 0
    %3242 = vperm.xlu0 %3241, %v3228
    %v3243 = vpop.permute.xlu0 %3242
    %3246 = vset.pattern.permute.xlu0 0
    %3247 = vperm.xlu0 %3246, %v3229
    %v3248 = vpop.permute.xlu0 %3247
    %v3250 = vmul.f32 %v3233, %v332
    %v3251 = vmul.f32 %v3238, %v337
    %v3252 = vmul.f32 %v3243, %v342
    %v3253 = vmul.f32 %v3248, %v347
    %v3254 = vsel %vm167, %v3250, 0.0
    %v3255 = vsel %vm167, %v3251, 0.0
    %v3256 = vadd.f32 %v3254, %v3255
    %v3257 = vrot.slane %v3256, 4
    %v3258 = vadd.f32 %v3256, %v3257
    %v3259 = vrot.slane %v3258, 2
    %v3260 = vadd.f32 %v3258, %v3259
    %v3261 = vrot.slane %v3260, 1
    %v3262 = vadd.f32 %v3260, %v3261
    %v3263 = vsel %vm167, %v3252, 0.0
    %v3264 = vsel %vm167, %v3253, 0.0
    %v3265 = vadd.f32 %v3263, %v3264
    %v3266 = vrot.slane %v3265, 4
    %v3267 = vadd.f32 %v3265, %v3266
    %v3268 = vrot.slane %v3267, 2
    %v3269 = vadd.f32 %v3267, %v3268
    %v3270 = vrot.slane %v3269, 1
    %v3271 = vadd.f32 %v3269, %v3270
    %vm3272 = vcmp.gt.f32.partialorder %v3262, 0.0
    %vm3273 = vcmp.gt.f32.partialorder %v3271, 0.0
    %v3274 = vmin.f32 %v3262, 0.0
    %v3275 = vmin.f32 %v3271, 0.0
    %v3276 = vmul.f32 %v3274, 1.442695
    %v3277 = vpow.pop %v3276
    %v3278 = vmul.f32 %v3275, 1.442695
    %v3279 = vpow.pop %v3278
    %v3280 = vsub.f32 %v3277, 1.0
    %v3281 = vsub.f32 %v3279, 1.0
    %v3282 = vsel %vm3272, %v3262, %v3280
    %v3283 = vsel %vm3273, %v3271, %v3281
    %v3286 = vsel %vm837, %v3283, %v3282
    %v3287 = vsel %vm167, %v3286, 0
    %3289 = vmatprep.subr.mxu0 0.0
    %3290 = vmatpush1.msra.mxu0 %v374
    %3291 = vmatprep.subr.mxu0 0.0
    %3292 = vmatpush1.msra.mxu0 %v375
    %3293 = vmatprep.subr.mxu0 0.0
    %3294 = vmatpush1.msra.mxu0 %v376
    %3295 = vmatprep.subr.mxu0 0.0
    %3296 = vmatpush1.msra.mxu0 %v377
    %3297 = vmatprep.subr.mxu0 0.0
    %3298 = vmatpush1.msra.mxu0 %v378
    %3299 = vmatprep.subr.mxu0 0.0
    %3300 = vmatpush1.msra.mxu0 %v379
    %3301 = vmatprep.subr.mxu0 0.0
    %3302 = vmatpush1.msra.mxu0 %v983
    %3303 = vmatprep.subr.mxu0 0.0
    %3304 = vmatpush1.msra.mxu0 0.0
    %3305 = vmatprep.subr.mxu0 0.0
    %3306 = vmatpush1.msra.mxu0 0.0
    %3307 = vmatprep.subr.mxu0 0.0
    %3308 = vmatpush1.msra.mxu0 0.0
    %3309 = vmatprep.subr.mxu0 0.0
    %3310 = vmatpush1.msra.mxu0 0.0
    %3311 = vmatprep.subr.mxu0 0.0
    %3312 = vmatpush1.msra.mxu0 0.0
    %3313 = vmatprep.subr.mxu0 0.0
    %3314 = vmatpush1.msra.mxu0 0.0
    %3315 = vmatprep.subr.mxu0 0.0
    %3316 = vmatpush1.msra.mxu0 0.0
    %3317 = vmatprep.subr.mxu0 0.0
    %3318 = vmatpush1.msra.mxu0 0.0
    %3319 = vmatprep.subr.mxu0 0.0
    %3320 = vmatpush1.msra.mxu0 0.0
    %3321 = vmatprep.subr.mxu0 0.0
    %3322 = vmatpush1.msra.mxu0 0.0
    %3323 = vmatprep.subr.mxu0 0.0
    %3324 = vmatpush1.msra.mxu0 0.0
    %3325 = vmatprep.subr.mxu0 0.0
    %3326 = vmatpush1.msra.mxu0 0.0
    %3327 = vmatprep.subr.mxu0 0.0
    %3328 = vmatpush1.msra.mxu0 0.0
    %3329 = vmatprep.subr.mxu0 0.0
    %3330 = vmatpush1.msra.mxu0 0.0
    %3331 = vmatprep.subr.mxu0 0.0
    %3332 = vmatpush1.msra.mxu0 0.0
    %3333 = vmatprep.subr.mxu0 0.0
    %3334 = vmatpush1.msra.mxu0 0.0
    %3335 = vmatprep.subr.mxu0 0.0
    %3336 = vmatpush1.msra.mxu0 0.0
    %3337 = vmatprep.subr.mxu0 0.0
    %3338 = vmatpush1.msra.mxu0 0.0
    %3339 = vmatprep.subr.mxu0 0.0
    %3340 = vmatpush1.msra.mxu0 0.0
    %3341 = vmatprep.subr.mxu0 0.0
    %3342 = vmatpush1.msra.mxu0 0.0
    %3343 = vmatprep.subr.mxu0 0.0
    %3344 = vmatpush1.msra.mxu0 0.0
    %3345 = vmatprep.subr.mxu0 0.0
    %3346 = vmatpush1.msra.mxu0 0.0
    %3347 = vmatprep.subr.mxu0 0.0
    %3348 = vmatpush1.msra.mxu0 0.0
    %3349 = vmatprep.subr.mxu0 0.0
    %3350 = vmatpush1.msra.mxu0 0.0
    %3351 = vmatprep.subr.mxu0 0.0
    %3352 = vmatpush1.msra.mxu0 0.0
    %3353 = vmatprep.mubr.f32.mxu0 0.0
    %3354 = vmatmul.mubr.f32.gmra.mrb[0].mxu0 %v3287
    %v3355 = vpop.f32.mrb[0].mxu0
    %v3356 = vadd.f32 %v404, %v3355
    %v3357 = vpop.f32.mrb[0].mxu0
    %3358 = vdwg.mxu0
    %v3359 = vadd.f32 %v3356, %v2781
    %v3360 = vsel %vm585, %v3359, 0.0
    %3361 = vadd.xlane.f32.xlu0 %v3360
    %v3362 = vpop.xlane.xlu0 %3361
    %v3363 = vmul.f32 %v3362, %v180
    %v3364 = vsub.f32 %v3359, %v3363
    %v3365 = vmul.f32 %v3364, %v3364
    %v3366 = vsel %vm585, %v3365, 0.0
    %3367 = vadd.xlane.f32.xlu0 %v3366
    %v3368 = vpop.xlane.xlu0 %3367
    %v3369 = vmul.f32 %v3368, %v180
    %v3370 = vadd.f32 %v3369, 1e-05
    %v3371 = vrsqrt.pop %v3370
    %v3372 = vmul.f32 %v3364, %v3371
    %v3373 = vmul.f32 %v3372, %v408
    %v3374 = vadd.f32 %v3373, %v412
    %v3375 = vadd.f32 %v3374, %v502
    %v3376 = vadd.f32 %v506, %v416
    %v3377 = vadd.f32 %v1071, %v420
    %v3378 = vadd.f32 %v1629, %v424
    %v3379 = vadd.f32 %v2199, %v428
    %v3380 = vadd.f32 %v2781, %v432
    %v3381 = vadd.f32 %v3375, %v436
    %v3383 = vsel %vm167, %v3375, 0
    %3385 = vmatprep.subr.mxu0 0.0
    %3386 = vmatpush1.msra.mxu0 %v350
    %3387 = vmatprep.subr.mxu0 0.0
    %3388 = vmatpush1.msra.mxu0 %v351
    %3389 = vmatprep.subr.mxu0 0.0
    %3390 = vmatpush1.msra.mxu0 %v352
    %3391 = vmatprep.subr.mxu0 0.0
    %3392 = vmatpush1.msra.mxu0 %v353
    %3393 = vmatprep.subr.mxu0 0.0
    %3394 = vmatpush1.msra.mxu0 %v354
    %3395 = vmatprep.subr.mxu0 0.0
    %3396 = vmatpush1.msra.mxu0 %v355
    %3397 = vmatprep.subr.mxu0 0.0
    %3398 = vmatpush1.msra.mxu0 %v512
    %3399 = vmatprep.subr.mxu0 0.0
    %3400 = vmatpush1.msra.mxu0 0.0
    %3401 = vmatprep.subr.mxu0 0.0
    %3402 = vmatpush1.msra.mxu0 0.0
    %3403 = vmatprep.subr.mxu0 0.0
    %3404 = vmatpush1.msra.mxu0 0.0
    %3405 = vmatprep.subr.mxu0 0.0
    %3406 = vmatpush1.msra.mxu0 0.0
    %3407 = vmatprep.subr.mxu0 0.0
    %3408 = vmatpush1.msra.mxu0 0.0
    %3409 = vmatprep.subr.mxu0 0.0
    %3410 = vmatpush1.msra.mxu0 0.0
    %3411 = vmatprep.subr.mxu0 0.0
    %3412 = vmatpush1.msra.mxu0 0.0
    %3413 = vmatprep.subr.mxu0 0.0
    %3414 = vmatpush1.msra.mxu0 0.0
    %3415 = vmatprep.subr.mxu0 0.0
    %3416 = vmatpush1.msra.mxu0 0.0
    %3417 = vmatprep.subr.mxu0 0.0
    %3418 = vmatpush1.msra.mxu0 0.0
    %3419 = vmatprep.subr.mxu0 0.0
    %3420 = vmatpush1.msra.mxu0 0.0
    %3421 = vmatprep.subr.mxu0 0.0
    %3422 = vmatpush1.msra.mxu0 0.0
    %3423 = vmatprep.subr.mxu0 0.0
    %3424 = vmatpush1.msra.mxu0 0.0
    %3425 = vmatprep.subr.mxu0 0.0
    %3426 = vmatpush1.msra.mxu0 0.0
    %3427 = vmatprep.subr.mxu0 0.0
    %3428 = vmatpush1.msra.mxu0 0.0
    %3429 = vmatprep.subr.mxu0 0.0
    %3430 = vmatpush1.msra.mxu0 0.0
    %3431 = vmatprep.subr.mxu0 0.0
    %3432 = vmatpush1.msra.mxu0 0.0
    %3433 = vmatprep.subr.mxu0 0.0
    %3434 = vmatpush1.msra.mxu0 0.0
    %3435 = vmatprep.subr.mxu0 0.0
    %3436 = vmatpush1.msra.mxu0 0.0
    %3437 = vmatprep.subr.mxu0 0.0
    %3438 = vmatpush1.msra.mxu0 0.0
    %3439 = vmatprep.subr.mxu0 0.0
    %3440 = vmatpush1.msra.mxu0 0.0
    %3441 = vmatprep.subr.mxu0 0.0
    %3442 = vmatpush1.msra.mxu0 0.0
    %3443 = vmatprep.subr.mxu0 0.0
    %3444 = vmatpush1.msra.mxu0 0.0
    %3445 = vmatprep.subr.mxu0 0.0
    %3446 = vmatpush1.msra.mxu0 0.0
    %3447 = vmatprep.subr.mxu0 0.0
    %3448 = vmatpush1.msra.mxu0 0.0
    %3449 = vmatprep.mubr.f32.mxu0 0.0
    %3450 = vmatmul.mubr.f32.gmra.mrb[0].mxu0 %v3383
    %v3451 = vpop.f32.mrb[0].mxu0
    %v3452 = vadd.f32 %v384, %v3451
    %v3453 = vpop.f32.mrb[0].mxu0
    %3454 = vdwg.mxu0
    %v3455 = vmul.f32 %v3452, %v3376
    %v3456 = vsel %vm585, %v3455, 0.0
    %3457 = vadd.xlane.f32.xlu0 %v3456
    %v3458 = vpop.xlane.xlu0 %3457
    %v3459 = vmul.f32 %v3452, %v3377
    %v3460 = vsel %vm585, %v3459, 0.0
    %3461 = vadd.xlane.f32.xlu0 %v3460
    %v3462 = vpop.xlane.xlu0 %3461
    %v3463 = vmul.f32 %v3452, %v3378
    %v3464 = vsel %vm585, %v3463, 0.0
    %3465 = vadd.xlane.f32.xlu0 %v3464
    %v3466 = vpop.xlane.xlu0 %3465
    %v3467 = vmul.f32 %v3452, %v3379
    %v3468 = vsel %vm585, %v3467, 0.0
    %3469 = vadd.xlane.f32.xlu0 %v3468
    %v3470 = vpop.xlane.xlu0 %3469
    %v3471 = vmul.f32 %v3452, %v3380
    %v3472 = vsel %vm585, %v3471, 0.0
    %3473 = vadd.xlane.f32.xlu0 %v3472
    %v3474 = vpop.xlane.xlu0 %3473
    %v3475 = vmul.f32 %v3452, %v3381
    %v3476 = vsel %vm585, %v3475, 0.0
    %3477 = vadd.xlane.f32.xlu0 %v3476
    %v3478 = vpop.xlane.xlu0 %3477
    %v3479 = vmax.f32 %v3458, %v3462
    %v3480 = vmax.f32 %v3479, %v3466
    %v3481 = vmax.f32 %v3480, %v3470
    %v3482 = vmax.f32 %v3481, %v3474
    %v3483 = vmax.f32 %v3482, %v3478
    %v3484 = vsub.f32 %v3458, %v3483
    %v3485 = vmul.f32 %v3484, 1.442695
    %v3486 = vpow.pop %v3485
    %v3487 = vsub.f32 %v3462, %v3483
    %v3488 = vmul.f32 %v3487, 1.442695
    %v3489 = vpow.pop %v3488
    %v3490 = vsub.f32 %v3466, %v3483
    %v3491 = vmul.f32 %v3490, 1.442695
    %v3492 = vpow.pop %v3491
    %v3493 = vsub.f32 %v3470, %v3483
    %v3494 = vmul.f32 %v3493, 1.442695
    %v3495 = vpow.pop %v3494
    %v3496 = vsub.f32 %v3474, %v3483
    %v3497 = vmul.f32 %v3496, 1.442695
    %v3498 = vpow.pop %v3497
    %v3499 = vsub.f32 %v3478, %v3483
    %v3500 = vmul.f32 %v3499, 1.442695
    %v3501 = vpow.pop %v3500
    %v3502 = vmul.f32 %v3486, %v3376
    %v3503 = vadd.f32 %v3486, %v3489
    %v3504 = vmul.f32 %v3489, %v3377
    %v3505 = vadd.f32 %v3502, %v3504
    %v3506 = vadd.f32 %v3503, %v3492
    %v3507 = vmul.f32 %v3492, %v3378
    %v3508 = vadd.f32 %v3505, %v3507
    %v3509 = vadd.f32 %v3506, %v3495
    %v3510 = vmul.f32 %v3495, %v3379
    %v3511 = vadd.f32 %v3508, %v3510
    %v3512 = vadd.f32 %v3509, %v3498
    %v3513 = vmul.f32 %v3498, %v3380
    %v3514 = vadd.f32 %v3511, %v3513
    %v3515 = vadd.f32 %v3512, %v3501
    %v3516 = vmul.f32 %v3501, %v3381
    %v3517 = vadd.f32 %v3514, %v3516
    %v3518 = vrcp.pop %v3515
    %v3519 = vmul.f32 %v3517, %v3518
    %v3521 = vsel %vm167, %v3519, 0
    %3523 = vmatprep.subr.mxu0 0.0
    %3524 = vmatpush1.msra.mxu0 %v358
    %3525 = vmatprep.subr.mxu0 0.0
    %3526 = vmatpush1.msra.mxu0 %v359
    %3527 = vmatprep.subr.mxu0 0.0
    %3528 = vmatpush1.msra.mxu0 %v360
    %3529 = vmatprep.subr.mxu0 0.0
    %3530 = vmatpush1.msra.mxu0 %v361
    %3531 = vmatprep.subr.mxu0 0.0
    %3532 = vmatpush1.msra.mxu0 %v362
    %3533 = vmatprep.subr.mxu0 0.0
    %3534 = vmatpush1.msra.mxu0 %v363
    %3535 = vmatprep.subr.mxu0 0.0
    %3536 = vmatpush1.msra.mxu0 %v599
    %3537 = vmatprep.subr.mxu0 0.0
    %3538 = vmatpush1.msra.mxu0 0.0
    %3539 = vmatprep.subr.mxu0 0.0
    %3540 = vmatpush1.msra.mxu0 0.0
    %3541 = vmatprep.subr.mxu0 0.0
    %3542 = vmatpush1.msra.mxu0 0.0
    %3543 = vmatprep.subr.mxu0 0.0
    %3544 = vmatpush1.msra.mxu0 0.0
    %3545 = vmatprep.subr.mxu0 0.0
    %3546 = vmatpush1.msra.mxu0 0.0
    %3547 = vmatprep.subr.mxu0 0.0
    %3548 = vmatpush1.msra.mxu0 0.0
    %3549 = vmatprep.subr.mxu0 0.0
    %3550 = vmatpush1.msra.mxu0 0.0
    %3551 = vmatprep.subr.mxu0 0.0
    %3552 = vmatpush1.msra.mxu0 0.0
    %3553 = vmatprep.subr.mxu0 0.0
    %3554 = vmatpush1.msra.mxu0 0.0
    %3555 = vmatprep.subr.mxu0 0.0
    %3556 = vmatpush1.msra.mxu0 0.0
    %3557 = vmatprep.subr.mxu0 0.0
    %3558 = vmatpush1.msra.mxu0 0.0
    %3559 = vmatprep.subr.mxu0 0.0
    %3560 = vmatpush1.msra.mxu0 0.0
    %3561 = vmatprep.subr.mxu0 0.0
    %3562 = vmatpush1.msra.mxu0 0.0
    %3563 = vmatprep.subr.mxu0 0.0
    %3564 = vmatpush1.msra.mxu0 0.0
    %3565 = vmatprep.subr.mxu0 0.0
    %3566 = vmatpush1.msra.mxu0 0.0
    %3567 = vmatprep.subr.mxu0 0.0
    %3568 = vmatpush1.msra.mxu0 0.0
    %3569 = vmatprep.subr.mxu0 0.0
    %3570 = vmatpush1.msra.mxu0 0.0
    %3571 = vmatprep.subr.mxu0 0.0
    %3572 = vmatpush1.msra.mxu0 0.0
    %3573 = vmatprep.subr.mxu0 0.0
    %3574 = vmatpush1.msra.mxu0 0.0
    %3575 = vmatprep.subr.mxu0 0.0
    %3576 = vmatpush1.msra.mxu0 0.0
    %3577 = vmatprep.subr.mxu0 0.0
    %3578 = vmatpush1.msra.mxu0 0.0
    %3579 = vmatprep.subr.mxu0 0.0
    %3580 = vmatpush1.msra.mxu0 0.0
    %3581 = vmatprep.subr.mxu0 0.0
    %3582 = vmatpush1.msra.mxu0 0.0
    %3583 = vmatprep.subr.mxu0 0.0
    %3584 = vmatpush1.msra.mxu0 0.0
    %3585 = vmatprep.subr.mxu0 0.0
    %3586 = vmatpush1.msra.mxu0 0.0
    %3587 = vmatprep.mubr.f32.mxu0 0.0
    %3588 = vmatmul.mubr.f32.gmra.mrb[0].mxu0 %v3521
    %v3589 = vpop.f32.mrb[0].mxu0
    %v3590 = vadd.f32 %v388, %v3589
    %v3591 = vpop.f32.mrb[0].mxu0
    %3592 = vdwg.mxu0
    %v3593 = vsel %vm585, %v3590, 0.0
    %3594 = vadd.xlane.f32.xlu0 %v3593
    %v3595 = vpop.xlane.xlu0 %3594
    %v3596 = vmul.f32 %v3595, %v180
    %v3597 = vsub.f32 %v3590, %v3596
    %v3598 = vmul.f32 %v3597, %v3597
    %v3599 = vsel %vm585, %v3598, 0.0
    %3600 = vadd.xlane.f32.xlu0 %v3599
    %v3601 = vpop.xlane.xlu0 %3600
    %v3602 = vmul.f32 %v3601, %v180
    %v3603 = vadd.f32 %v3602, 1e-05
    %v3604 = vrsqrt.pop %v3603
    %v3605 = vmul.f32 %v3597, %v3604
    %v3606 = vmul.f32 %v3605, %v392
    %v3607 = vadd.f32 %v3606, %v396
    %v3609 = vsel %vm167, %v3607, 0
    %3611 = vmatprep.subr.mxu0 0.0
    %3612 = vmatpush1.msra.mxu0 %v366
    %3613 = vmatprep.subr.mxu0 0.0
    %3614 = vmatpush1.msra.mxu0 %v367
    %3615 = vmatprep.subr.mxu0 0.0
    %3616 = vmatpush1.msra.mxu0 %v368
    %3617 = vmatprep.subr.mxu0 0.0
    %3618 = vmatpush1.msra.mxu0 %v369
    %3619 = vmatprep.subr.mxu0 0.0
    %3620 = vmatpush1.msra.mxu0 %v370
    %3621 = vmatprep.subr.mxu0 0.0
    %3622 = vmatpush1.msra.mxu0 %v371
    %3623 = vmatprep.subr.mxu0 0.0
    %3624 = vmatpush1.msra.mxu0 %v690
    %3625 = vmatprep.subr.mxu0 0.0
    %3626 = vmatpush1.msra.mxu0 0.0
    %3627 = vmatprep.subr.mxu0 0.0
    %3628 = vmatpush1.msra.mxu0 0.0
    %3629 = vmatprep.subr.mxu0 0.0
    %3630 = vmatpush1.msra.mxu0 0.0
    %3631 = vmatprep.subr.mxu0 0.0
    %3632 = vmatpush1.msra.mxu0 0.0
    %3633 = vmatprep.subr.mxu0 0.0
    %3634 = vmatpush1.msra.mxu0 0.0
    %3635 = vmatprep.subr.mxu0 0.0
    %3636 = vmatpush1.msra.mxu0 0.0
    %3637 = vmatprep.subr.mxu0 0.0
    %3638 = vmatpush1.msra.mxu0 0.0
    %3639 = vmatprep.subr.mxu0 0.0
    %3640 = vmatpush1.msra.mxu0 0.0
    %3641 = vmatprep.subr.mxu0 0.0
    %3642 = vmatpush1.msra.mxu0 0.0
    %3643 = vmatprep.subr.mxu0 0.0
    %3644 = vmatpush1.msra.mxu0 0.0
    %3645 = vmatprep.subr.mxu0 0.0
    %3646 = vmatpush1.msra.mxu0 0.0
    %3647 = vmatprep.subr.mxu0 0.0
    %3648 = vmatpush1.msra.mxu0 0.0
    %3649 = vmatprep.subr.mxu0 0.0
    %3650 = vmatpush1.msra.mxu0 0.0
    %3651 = vmatprep.subr.mxu0 0.0
    %3652 = vmatpush1.msra.mxu0 0.0
    %3653 = vmatprep.subr.mxu0 0.0
    %3654 = vmatpush1.msra.mxu0 0.0
    %3655 = vmatprep.subr.mxu0 0.0
    %3656 = vmatpush1.msra.mxu0 0.0
    %3657 = vmatprep.subr.mxu0 0.0
    %3658 = vmatpush1.msra.mxu0 0.0
    %3659 = vmatprep.subr.mxu0 0.0
    %3660 = vmatpush1.msra.mxu0 0.0
    %3661 = vmatprep.subr.mxu0 0.0
    %3662 = vmatpush1.msra.mxu0 0.0
    %3663 = vmatprep.subr.mxu0 0.0
    %3664 = vmatpush1.msra.mxu0 0.0
    %3665 = vmatprep.subr.mxu0 0.0
    %3666 = vmatpush1.msra.mxu0 0.0
    %3667 = vmatprep.subr.mxu0 0.0
    %3668 = vmatpush1.msra.mxu0 0.0
    %3669 = vmatprep.subr.mxu0 0.0
    %3670 = vmatpush1.msra.mxu0 0.0
    %3671 = vmatprep.subr.mxu0 0.0
    %3672 = vmatpush1.msra.mxu0 0.0
    %3673 = vmatprep.subr.mxu0 0.0
    %3674 = vmatpush1.msra.mxu0 0.0
    %3675 = vmatprep.mubr.f32.mxu0 0.0
    %3676 = vmatmul.mubr.f32.gmra.mrb[0].mxu0 %v3609
    %v3677 = vpop.f32.mrb[0].mxu0
    %v3678 = vadd.f32 %v400, %v3677
    %v3679 = vpop.f32.mrb[0].mxu0
    %3680 = vdwg.mxu0
    %v3683 = vunpack.c.l.s4 1966171168
    %v3684 = vunpack.c.0.s8 %v3683
    %v3685 = vlaneseq
    %v3686 = vshrl.u32 %v3685, 7
    %v3687 = vsub.s32 %v3684, %v3686
    %v3688 = vrot.slane %v3678, %v3687
    %v3689 = vcombine.high %v3688, %v3688
    %v3691 = vunpack.c.l.s4 1966171168
    %v3692 = vunpack.c.0.s8 %v3691
    %v3693 = vlaneseq
    %v3694 = vshrl.u32 %v3693, 7
    %v3695 = vsub.s32 %v3692, %v3694
    %v3696 = vrot.slane %v3688, %v3695
    %v3698 = vunpack.c.l.s4 1966171168
    %v3699 = vunpack.c.0.s8 %v3698
    %v3700 = vlaneseq
    %v3701 = vshrl.u32 %v3700, 7
    %v3702 = vsub.s32 %v3699, %v3701
    %v3703 = vrot.slane %v3689, %v3702
    %v3704 = vlaneseq
    %v3705 = vshrl.u32 %v3704, 7
    %v3706 = vsub.s32 0, %v3705
    %v3707 = vrot.slane %v3696, %v3706
    %v3708 = vlaneseq
    %v3709 = vshrl.u32 %v3708, 7
    %v3710 = vsub.s32 0, %v3709
    %v3711 = vrot.slane %v3703, %v3710
    %v3714 = vmul.f32 %v3707, %v233
    %v3715 = vmul.f32 %v3707, %v234
    %v3716 = vmul.f32 %v3711, %v235
    %v3717 = vmul.f32 %v3711, %v236
    %v3718 = vsel %vm167, %v3714, 0.0
    %3719 = vadd.xlane.f32.xlu0 %v3718
    %v3720 = vpop.xlane.xlu0 %3719
    %v3721 = vsel %vm167, %v3715, 0.0
    %3722 = vadd.xlane.f32.xlu0 %v3721
    %v3723 = vpop.xlane.xlu0 %3722
    %v3724 = vsel %vm167, %v3716, 0.0
    %3725 = vadd.xlane.f32.xlu0 %v3724
    %v3726 = vpop.xlane.xlu0 %3725
    %v3727 = vsel %vm167, %v3717, 0.0
    %3728 = vadd.xlane.f32.xlu0 %v3727
    %v3729 = vpop.xlane.xlu0 %3728
    %v3734 = vlaneseq
    %v3735 = vshrl.u32 %v3734, 7
    %v3736 = vsub.s32 %v816, %v3735
    %v3737 = vrot.slane %v3720, %v3736
    %v3738 = vlaneseq
    %v3739 = vshrl.u32 %v3738, 7
    %v3740 = vsub.s32 %v821, %v3739
    %v3741 = vrot.slane %v3723, %v3740
    %v3742 = vsel %vm826, %v3741, %v3737
    %v3743 = vlaneseq
    %v3744 = vshrl.u32 %v3743, 7
    %v3745 = vsub.s32 %v816, %v3744
    %v3746 = vrot.slane %v3726, %v3745
    %v3747 = vlaneseq
    %v3748 = vshrl.u32 %v3747, 7
    %v3749 = vsub.s32 %v821, %v3748
    %v3750 = vrot.slane %v3729, %v3749
    %v3751 = vsel %vm826, %v3750, %v3746
    %v3752 = vsel %vm837, %v3751, %v3742
    %v3754 = vsel %vm840, %v3752, -inf
    %3755 = vmax.xlane.f32.xlu0 %v3754
    %v3756 = vpop.xlane.xlu0 %3755
    %v3758 = vlaneseq
    %v3759 = vshrl.u32 %v3758, 7
    %v3760 = vsub.s32 0, %v3759
    %v3761 = vrot.slane %v3756, %v3760
    %v3762 = vlaneseq
    %v3763 = vshrl.u32 %v3762, 7
    %v3764 = vsub.s32 1, %v3763
    %v3765 = vrot.slane %v3756, %v3764
    %v3768 = vsub.f32 %v3720, %v3761
    %v3769 = vsub.f32 %v3723, %v3761
    %v3770 = vsub.f32 %v3726, %v3765
    %v3771 = vsub.f32 %v3729, %v3765
    %v3772 = vmul.f32 %v3768, 1.442695
    %v3773 = vpow.pop %v3772
    %v3774 = vmul.f32 %v3769, 1.442695
    %v3775 = vpow.pop %v3774
    %v3776 = vmul.f32 %v3770, 1.442695
    %v3777 = vpow.pop %v3776
    %v3778 = vmul.f32 %v3771, 1.442695
    %v3779 = vpow.pop %v3778
    %3784 = vset.pattern.permute.xlu0 0
    %3785 = vperm.xlu0 %3784, %v3773
    %v3786 = vpop.permute.xlu0 %3785
    %3787 = vset.pattern.permute.xlu0 0
    %3788 = vperm.xlu0 %3787, %v3775
    %v3789 = vpop.permute.xlu0 %3788
    %3790 = vset.pattern.permute.xlu0 0
    %3791 = vperm.xlu0 %3790, %v3777
    %v3792 = vpop.permute.xlu0 %3791
    %3793 = vset.pattern.permute.xlu0 0
    %3794 = vperm.xlu0 %3793, %v3779
    %v3795 = vpop.permute.xlu0 %3794
    %v3796 = vlaneseq
    %v3797 = vshrl.u32 %v3796, 7
    %v3798 = vsub.s32 %v816, %v3797
    %v3799 = vrot.slane %v3786, %v3798
    %v3800 = vlaneseq
    %v3801 = vshrl.u32 %v3800, 7
    %v3802 = vsub.s32 %v821, %v3801
    %v3803 = vrot.slane %v3789, %v3802
    %v3804 = vsel %vm826, %v3803, %v3799
    %v3805 = vlaneseq
    %v3806 = vshrl.u32 %v3805, 7
    %v3807 = vsub.s32 %v816, %v3806
    %v3808 = vrot.slane %v3792, %v3807
    %v3809 = vlaneseq
    %v3810 = vshrl.u32 %v3809, 7
    %v3811 = vsub.s32 %v821, %v3810
    %v3812 = vrot.slane %v3795, %v3811
    %v3813 = vsel %vm826, %v3812, %v3808
    %v3814 = vsel %vm837, %v3813, %v3804
    %v3816 = vsel %vm840, %v3814, 0.0
    %3817 = vadd.xlane.f32.xlu0 %v3816
    %v3818 = vpop.xlane.xlu0 %3817
    %v3820 = vlaneseq
    %v3821 = vshrl.u32 %v3820, 7
    %v3822 = vsub.s32 0, %v3821
    %v3823 = vrot.slane %v3818, %v3822
    %v3824 = vlaneseq
    %v3825 = vshrl.u32 %v3824, 7
    %v3826 = vsub.s32 1, %v3825
    %v3827 = vrot.slane %v3818, %v3826
    %v3830 = vrcp.pop %v3823
    %v3831 = vmul.f32 %v3773, %v3830
    %v3832 = vmul.f32 %v3775, %v3830
    %v3833 = vrcp.pop %v3827
    %v3834 = vmul.f32 %v3777, %v3833
    %v3835 = vmul.f32 %v3779, %v3833
    %3837 = vset.pattern.permute.xlu0 0
    %3838 = vperm.xlu0 %3837, %v3831
    %v3839 = vpop.permute.xlu0 %3838
    %3842 = vset.pattern.permute.xlu0 0
    %3843 = vperm.xlu0 %3842, %v3832
    %v3844 = vpop.permute.xlu0 %3843
    %3847 = vset.pattern.permute.xlu0 0
    %3848 = vperm.xlu0 %3847, %v3834
    %v3849 = vpop.permute.xlu0 %3848
    %3852 = vset.pattern.permute.xlu0 0
    %3853 = vperm.xlu0 %3852, %v3835
    %v3854 = vpop.permute.xlu0 %3853
    %v3856 = vmul.f32 %v3839, %v332
    %v3857 = vmul.f32 %v3844, %v337
    %v3858 = vmul.f32 %v3849, %v342
    %v3859 = vmul.f32 %v3854, %v347
    %v3860 = vsel %vm167, %v3856, 0.0
    %v3861 = vsel %vm167, %v3857, 0.0
    %v3862 = vadd.f32 %v3860, %v3861
    %v3863 = vrot.slane %v3862, 4
    %v3864 = vadd.f32 %v3862, %v3863
    %v3865 = vrot.slane %v3864, 2
    %v3866 = vadd.f32 %v3864, %v3865
    %v3867 = vrot.slane %v3866, 1
    %v3868 = vadd.f32 %v3866, %v3867
    %v3869 = vsel %vm167, %v3858, 0.0
    %v3870 = vsel %vm167, %v3859, 0.0
    %v3871 = vadd.f32 %v3869, %v3870
    %v3872 = vrot.slane %v3871, 4
    %v3873 = vadd.f32 %v3871, %v3872
    %v3874 = vrot.slane %v3873, 2
    %v3875 = vadd.f32 %v3873, %v3874
    %v3876 = vrot.slane %v3875, 1
    %v3877 = vadd.f32 %v3875, %v3876
    %vm3878 = vcmp.gt.f32.partialorder %v3868, 0.0
    %vm3879 = vcmp.gt.f32.partialorder %v3877, 0.0
    %v3880 = vmin.f32 %v3868, 0.0
    %v3881 = vmin.f32 %v3877, 0.0
    %v3882 = vmul.f32 %v3880, 1.442695
    %v3883 = vpow.pop %v3882
    %v3884 = vmul.f32 %v3881, 1.442695
    %v3885 = vpow.pop %v3884
    %v3886 = vsub.f32 %v3883, 1.0
    %v3887 = vsub.f32 %v3885, 1.0
    %v3888 = vsel %vm3878, %v3868, %v3886
    %v3889 = vsel %vm3879, %v3877, %v3887
    %v3892 = vsel %vm837, %v3889, %v3888
    %v3893 = vsel %vm167, %v3892, 0
    %3895 = vmatprep.subr.mxu0 0.0
    %3896 = vmatpush1.msra.mxu0 %v374
    %3897 = vmatprep.subr.mxu0 0.0
    %3898 = vmatpush1.msra.mxu0 %v375
    %3899 = vmatprep.subr.mxu0 0.0
    %3900 = vmatpush1.msra.mxu0 %v376
    %3901 = vmatprep.subr.mxu0 0.0
    %3902 = vmatpush1.msra.mxu0 %v377
    %3903 = vmatprep.subr.mxu0 0.0
    %3904 = vmatpush1.msra.mxu0 %v378
    %3905 = vmatprep.subr.mxu0 0.0
    %3906 = vmatpush1.msra.mxu0 %v379
    %3907 = vmatprep.subr.mxu0 0.0
    %3908 = vmatpush1.msra.mxu0 %v983
    %3909 = vmatprep.subr.mxu0 0.0
    %3910 = vmatpush1.msra.mxu0 0.0
    %3911 = vmatprep.subr.mxu0 0.0
    %3912 = vmatpush1.msra.mxu0 0.0
    %3913 = vmatprep.subr.mxu0 0.0
    %3914 = vmatpush1.msra.mxu0 0.0
    %3915 = vmatprep.subr.mxu0 0.0
    %3916 = vmatpush1.msra.mxu0 0.0
    %3917 = vmatprep.subr.mxu0 0.0
    %3918 = vmatpush1.msra.mxu0 0.0
    %3919 = vmatprep.subr.mxu0 0.0
    %3920 = vmatpush1.msra.mxu0 0.0
    %3921 = vmatprep.subr.mxu0 0.0
    %3922 = vmatpush1.msra.mxu0 0.0
    %3923 = vmatprep.subr.mxu0 0.0
    %3924 = vmatpush1.msra.mxu0 0.0
    %3925 = vmatprep.subr.mxu0 0.0
    %3926 = vmatpush1.msra.mxu0 0.0
    %3927 = vmatprep.subr.mxu0 0.0
    %3928 = vmatpush1.msra.mxu0 0.0
    %3929 = vmatprep.subr.mxu0 0.0
    %3930 = vmatpush1.msra.mxu0 0.0
    %3931 = vmatprep.subr.mxu0 0.0
    %3932 = vmatpush1.msra.mxu0 0.0
    %3933 = vmatprep.subr.mxu0 0.0
    %3934 = vmatpush1.msra.mxu0 0.0
    %3935 = vmatprep.subr.mxu0 0.0
    %3936 = vmatpush1.msra.mxu0 0.0
    %3937 = vmatprep.subr.mxu0 0.0
    %3938 = vmatpush1.msra.mxu0 0.0
    %3939 = vmatprep.subr.mxu0 0.0
    %3940 = vmatpush1.msra.mxu0 0.0
    %3941 = vmatprep.subr.mxu0 0.0
    %3942 = vmatpush1.msra.mxu0 0.0
    %3943 = vmatprep.subr.mxu0 0.0
    %3944 = vmatpush1.msra.mxu0 0.0
    %3945 = vmatprep.subr.mxu0 0.0
    %3946 = vmatpush1.msra.mxu0 0.0
    %3947 = vmatprep.subr.mxu0 0.0
    %3948 = vmatpush1.msra.mxu0 0.0
    %3949 = vmatprep.subr.mxu0 0.0
    %3950 = vmatpush1.msra.mxu0 0.0
    %3951 = vmatprep.subr.mxu0 0.0
    %3952 = vmatpush1.msra.mxu0 0.0
    %3953 = vmatprep.subr.mxu0 0.0
    %3954 = vmatpush1.msra.mxu0 0.0
    %3955 = vmatprep.subr.mxu0 0.0
    %3956 = vmatpush1.msra.mxu0 0.0
    %3957 = vmatprep.subr.mxu0 0.0
    %3958 = vmatpush1.msra.mxu0 0.0
    %3959 = vmatprep.mubr.f32.mxu0 0.0
    %3960 = vmatmul.mubr.f32.gmra.mrb[0].mxu0 %v3893
    %v3961 = vpop.f32.mrb[0].mxu0
    %v3962 = vadd.f32 %v404, %v3961
    %v3963 = vpop.f32.mrb[0].mxu0
    %3964 = vdwg.mxu0
    %v3965 = vadd.f32 %v3962, %v3375
    %v3966 = vsel %vm585, %v3965, 0.0
    %3967 = vadd.xlane.f32.xlu0 %v3966
    %v3968 = vpop.xlane.xlu0 %3967
    %v3969 = vmul.f32 %v3968, %v180
    %v3970 = vsub.f32 %v3965, %v3969
    %v3971 = vmul.f32 %v3970, %v3970
    %v3972 = vsel %vm585, %v3971, 0.0
    %3973 = vadd.xlane.f32.xlu0 %v3972
    %v3974 = vpop.xlane.xlu0 %3973
    %v3975 = vmul.f32 %v3974, %v180
    %v3976 = vadd.f32 %v3975, 1e-05
    %v3977 = vrsqrt.pop %v3976
    %v3978 = vmul.f32 %v3970, %v3977
    %v3979 = vmul.f32 %v3978, %v408
    %v3980 = vadd.f32 %v3979, %v412
    %v3982 = vrot.slane %v1628, 7
    %v3985 = vrot.slane %v2198, 6
    %v3988 = vrot.slane %v2780, 5
    %v3991 = vrot.slane %v3374, 4
    %v3994 = vrot.slane %v3980, 3
    %v3997 = vrot.slane %v1070, 3
    %v3999 = vrot.slane %v1628, 2
    %v4001 = vrot.slane %v2198, 1
    %v4003 = vrot.slane %v3374, 7
    %v4005 = vrot.slane %v3980, 6
    %v4007 = vsel %vm449, %v1070, %v3982
    %v4008 = vsel %vm261, %v4007, %v3985
    %vm4009 = vcmask 1042432
    %v4010 = vsel %vm4009, %v4008, %v3988
    %vm4011 = vcmask 1043456
    %v4012 = vsel %vm4011, %v4010, %v3991
    %vm4013 = vcmask 1044480
    %v4014 = vsel %vm4013, %v4012, %v3994
    %vm4015 = vcmask 1045504
    %v4016 = vsel %vm4015, %v4014, %v3997
    %vm4017 = vcmask 1046528
    %v4018 = vsel %vm4017, %v4016, %v3999
    %v4019 = vsel %vm449, %v4001, %v2780
    %v4020 = vsel %vm261, %v4019, %v4003
    %v4021 = vsel %vm4009, %v4020, %v4005
    %s4022 = scalar_lea.vmem [#allocation5], 280
    %v4023 = vld [vmem:[%s4022] sm:$0xff]
    %v4024 = vld [vmem:[%s4022 + $0x8] sm:$0xff]
    %v4025 = vld [vmem:[%s4022 + $0x10] sm:$0xff]
    %v4026 = vld [vmem:[%s4022 + $0x18] sm:$0xff]
    %v4027 = vld [vmem:[%s4022 + $0x20] sm:$0xff]
    %v4028 = vld [vmem:[%s4022 + $0x28] sm:$0xff]
    %v4029 = vld [vmem:[%s4022 + $0x30] sm:$0x3]
    %v4030 = vlaneseq
    %v4031 = vshrl.u32 %v4030, 7
    %v4032 = vsub.s32 4, %v4031
    %v4033 = vrot.slane %v51, %v4032
    %v4035 = vsel %vm167, %v4018, 0
    %v4038 = vsel %vm167, %v4021, 0
    %v4041 = vsel %vm261, %v4029, 0
    %4043 = vmatprep.subr.mxu0 0.0
    %4044 = vmatpush1.msra.mxu0 %v4023
    %4045 = vmatprep.subr.mxu0 0.0
    %4046 = vmatpush1.msra.mxu0 %v4024
    %4047 = vmatprep.subr.mxu0 0.0
    %4048 = vmatpush1.msra.mxu0 %v4025
    %4049 = vmatprep.subr.mxu0 0.0
    %4050 = vmatpush1.msra.mxu0 %v4026
    %4051 = vmatprep.subr.mxu0 0.0
    %4052 = vmatpush1.msra.mxu0 %v4027
    %4053 = vmatprep.subr.mxu0 0.0
    %4054 = vmatpush1.msra.mxu0 %v4028
    %4055 = vmatprep.subr.mxu0 0.0
    %4056 = vmatpush1.msra.mxu0 %v4041
    %4057 = vmatprep.subr.mxu0 0.0
    %4058 = vmatpush1.msra.mxu0 0.0
    %4059 = vmatprep.subr.mxu0 0.0
    %4060 = vmatpush1.msra.mxu0 0.0
    %4061 = vmatprep.subr.mxu0 0.0
    %4062 = vmatpush1.msra.mxu0 0.0
    %4063 = vmatprep.subr.mxu0 0.0
    %4064 = vmatpush1.msra.mxu0 0.0
    %4065 = vmatprep.subr.mxu0 0.0
    %4066 = vmatpush1.msra.mxu0 0.0
    %4067 = vmatprep.subr.mxu0 0.0
    %4068 = vmatpush1.msra.mxu0 0.0
    %4069 = vmatprep.subr.mxu0 0.0
    %4070 = vmatpush1.msra.mxu0 0.0
    %4071 = vmatprep.subr.mxu0 0.0
    %4072 = vmatpush1.msra.mxu0 0.0
    %4073 = vmatprep.subr.mxu0 0.0
    %4074 = vmatpush1.msra.mxu0 0.0
    %4075 = vmatprep.subr.mxu0 0.0
    %4076 = vmatpush1.msra.mxu0 0.0
    %4077 = vmatprep.subr.mxu0 0.0
    %4078 = vmatpush1.msra.mxu0 0.0
    %4079 = vmatprep.subr.mxu0 0.0
    %4080 = vmatpush1.msra.mxu0 0.0
    %4081 = vmatprep.subr.mxu0 0.0
    %4082 = vmatpush1.msra.mxu0 0.0
    %4083 = vmatprep.subr.mxu0 0.0
    %4084 = vmatpush1.msra.mxu0 0.0
    %4085 = vmatprep.subr.mxu0 0.0
    %4086 = vmatpush1.msra.mxu0 0.0
    %4087 = vmatprep.subr.mxu0 0.0
    %4088 = vmatpush1.msra.mxu0 0.0
    %4089 = vmatprep.subr.mxu0 0.0
    %4090 = vmatpush1.msra.mxu0 0.0
    %4091 = vmatprep.subr.mxu0 0.0
    %4092 = vmatpush1.msra.mxu0 0.0
    %4093 = vmatprep.subr.mxu0 0.0
    %4094 = vmatpush1.msra.mxu0 0.0
    %4095 = vmatprep.subr.mxu0 0.0
    %4096 = vmatpush1.msra.mxu0 0.0
    %4097 = vmatprep.subr.mxu0 0.0
    %4098 = vmatpush1.msra.mxu0 0.0
    %4099 = vmatprep.subr.mxu0 0.0
    %4100 = vmatpush1.msra.mxu0 0.0
    %4101 = vmatprep.subr.mxu0 0.0
    %4102 = vmatpush1.msra.mxu0 0.0
    %4103 = vmatprep.subr.mxu0 0.0
    %4104 = vmatpush1.msra.mxu0 0.0
    %4105 = vmatprep.subr.mxu0 0.0
    %4106 = vmatpush1.msra.mxu0 0.0
    %4107 = vmatprep.mubr.f32.mxu0 0.0
    %4108 = vmatmul.mubr.f32.gmra.mrb[0].mxu0 %v4035
    %v4109 = vpop.f32.mrb[0].mxu0
    %v4110 = vadd.f32 %v4033, %v4109
    %v4111 = vpop.f32.mrb[0].mxu0
    %4112 = vmatprep.mubr.f32.mxu0 0.0
    %4113 = vmatmul.mubr.f32.gmra.mrb[0].mxu0 %v4038
    %v4114 = vpop.f32.mrb[0].mxu0
    %v4115 = vadd.f32 %v4033, %v4114
    %v4116 = vpop.f32.mrb[0].mxu0
    %4117 = vdwg.mxu0
    %vm4118 = vcmp.gt.f32.partialorder %v4110, 0.0
    %vm4119 = vcmp.gt.f32.partialorder %v4115, 0.0
    %v4120 = vmin.f32 %v4110, 0.0
    %v4121 = vmin.f32 %v4115, 0.0
    %v4122 = vmul.f32 %v4120, 1.442695
    %v4123 = vpow.pop %v4122
    %v4124 = vmul.f32 %v4121, 1.442695
    %v4125 = vpow.pop %v4124
    %v4126 = vsub.f32 %v4123, 1.0
    %v4127 = vsub.f32 %v4125, 1.0
    %v4128 = vsel %vm4118, %v4110, %v4126
    %v4129 = vsel %vm4119, %v4115, %v4127
    %s4130 = scalar_lea.vmem [#allocation5], 336
    %v4131 = vld [vmem:[%s4130] sm:$0xff]
    %v4132 = vld [vmem:[%s4130 + $0x8] sm:$0xff]
    %v4133 = vld [vmem:[%s4130 + $0x10] sm:$0xff]
    %v4134 = vld [vmem:[%s4130 + $0x18] sm:$0xff]
    %v4135 = vld [vmem:[%s4130 + $0x20] sm:$0xff]
    %v4136 = vld [vmem:[%s4130 + $0x28] sm:$0xff]
    %v4137 = vld [vmem:[%s4130 + $0x30] sm:$0x3]
    %v4138 = vlaneseq
    %v4139 = vshrl.u32 %v4138, 7
    %v4140 = vsub.s32 5, %v4139
    %v4141 = vrot.slane %v51, %v4140
    %v4143 = vsel %vm167, %v4128, 0
    %v4146 = vsel %vm167, %v4129, 0
    %v4149 = vsel %vm261, %v4137, 0
    %4151 = vmatprep.subr.mxu0 0.0
    %4152 = vmatpush1.msra.mxu0 %v4131
    %4153 = vmatprep.subr.mxu0 0.0
    %4154 = vmatpush1.msra.mxu0 %v4132
    %4155 = vmatprep.subr.mxu0 0.0
    %4156 = vmatpush1.msra.mxu0 %v4133
    %4157 = vmatprep.subr.mxu0 0.0
    %4158 = vmatpush1.msra.mxu0 %v4134
    %4159 = vmatprep.subr.mxu0 0.0
    %4160 = vmatpush1.msra.mxu0 %v4135
    %4161 = vmatprep.subr.mxu0 0.0
    %4162 = vmatpush1.msra.mxu0 %v4136
    %4163 = vmatprep.subr.mxu0 0.0
    %4164 = vmatpush1.msra.mxu0 %v4149
    %4165 = vmatprep.subr.mxu0 0.0
    %4166 = vmatpush1.msra.mxu0 0.0
    %4167 = vmatprep.subr.mxu0 0.0
    %4168 = vmatpush1.msra.mxu0 0.0
    %4169 = vmatprep.subr.mxu0 0.0
    %4170 = vmatpush1.msra.mxu0 0.0
    %4171 = vmatprep.subr.mxu0 0.0
    %4172 = vmatpush1.msra.mxu0 0.0
    %4173 = vmatprep.subr.mxu0 0.0
    %4174 = vmatpush1.msra.mxu0 0.0
    %4175 = vmatprep.subr.mxu0 0.0
    %4176 = vmatpush1.msra.mxu0 0.0
    %4177 = vmatprep.subr.mxu0 0.0
    %4178 = vmatpush1.msra.mxu0 0.0
    %4179 = vmatprep.subr.mxu0 0.0
    %4180 = vmatpush1.msra.mxu0 0.0
    %4181 = vmatprep.subr.mxu0 0.0
    %4182 = vmatpush1.msra.mxu0 0.0
    %4183 = vmatprep.subr.mxu0 0.0
    %4184 = vmatpush1.msra.mxu0 0.0
    %4185 = vmatprep.subr.mxu0 0.0
    %4186 = vmatpush1.msra.mxu0 0.0
    %4187 = vmatprep.subr.mxu0 0.0
    %4188 = vmatpush1.msra.mxu0 0.0
    %4189 = vmatprep.subr.mxu0 0.0
    %4190 = vmatpush1.msra.mxu0 0.0
    %4191 = vmatprep.subr.mxu0 0.0
    %4192 = vmatpush1.msra.mxu0 0.0
    %4193 = vmatprep.subr.mxu0 0.0
    %4194 = vmatpush1.msra.mxu0 0.0
    %4195 = vmatprep.subr.mxu0 0.0
    %4196 = vmatpush1.msra.mxu0 0.0
    %4197 = vmatprep.subr.mxu0 0.0
    %4198 = vmatpush1.msra.mxu0 0.0
    %4199 = vmatprep.subr.mxu0 0.0
    %4200 = vmatpush1.msra.mxu0 0.0
    %4201 = vmatprep.subr.mxu0 0.0
    %4202 = vmatpush1.msra.mxu0 0.0
    %4203 = vmatprep.subr.mxu0 0.0
    %4204 = vmatpush1.msra.mxu0 0.0
    %4205 = vmatprep.subr.mxu0 0.0
    %4206 = vmatpush1.msra.mxu0 0.0
    %4207 = vmatprep.subr.mxu0 0.0
    %4208 = vmatpush1.msra.mxu0 0.0
    %4209 = vmatprep.subr.mxu0 0.0
    %4210 = vmatpush1.msra.mxu0 0.0
    %4211 = vmatprep.subr.mxu0 0.0
    %4212 = vmatpush1.msra.mxu0 0.0
    %4213 = vmatprep.subr.mxu0 0.0
    %4214 = vmatpush1.msra.mxu0 0.0
    %4215 = vmatprep.mubr.f32.mxu0 0.0
    %4216 = vmatmul.mubr.f32.gmra.mrb[0].mxu0 %v4143
    %v4217 = vpop.f32.mrb[0].mxu0
    %v4218 = vadd.f32 %v4141, %v4217
    %v4219 = vpop.f32.mrb[0].mxu0
    %4220 = vmatprep.mubr.f32.mxu0 0.0
    %4221 = vmatmul.mubr.f32.gmra.mrb[0].mxu0 %v4146
    %v4222 = vpop.f32.mrb[0].mxu0
    %v4223 = vadd.f32 %v4141, %v4222
    %v4224 = vpop.f32.mrb[0].mxu0
    %4225 = vdwg.mxu0
    %4226 = vst.msk [vmem:[%s6] sm:$0xff] %vm167, %v4218
    %vm4227 = vcmask 404480
    %4228 = vst.msk [vmem:[%s6 + $0x8] sm:$0xf] %vm4227, %v4223
    // Predicated region
    $region34: #{custom_decoder_forward.1} parent=1 // pred_check
      _
    $region35: #{custom_decoder_forward.1} parent=1 // pred_check_branch
      %4230 = sbr.rel (0) target = $region37
    $region36: #{custom_decoder_forward.1} parent=1 // pred_region
      _
    $region37: #{custom_decoder_forward.1} parent=1 // pred_fallthru
      _
    // Predicated region
    $region38: #{custom_decoder_forward.1} parent=1 // pred_check
      _
    $region39: #{custom_decoder_forward.1} parent=1 // pred_check_branch
      %4232 = sbr.rel (0) target = $region41
    $region40: #{custom_decoder_forward.1} parent=1 // pred_region
      _
    $region41: #{custom_decoder_forward.1} parent=1 // pred_fallthru
      _
    %4233 = vsyncpa [#allocation3], 1
    %4234 = vsyncpa [#allocation4], 1

</llo_original>
